<compile_context>
chip_gen: v5e
topology: v5e:2x2
jax: 0.10.0
libtpu: 0.0.40
codegen_flags: <defaults>
</compile_context>

<pallas_src>
import numpy as np
import jax
import jax.numpy as jnp
from jax import lax
from jax.experimental import pallas as pl
from jax.experimental.pallas import tpu as pltpu

KW = 4               # conv kernel size
PAD = 2              # int(ceil((kw - 1)/2))
EPS = 1e-5           # InstanceNorm2d eps
LRELU_SLOPE = 0.2
LANE_PAD = 256       # lane padding multiple (covers v5e 128 and v6e/v7x 256 MXU tiles)
ROW_PAD = 8          # sublane fill for the batch/row dimension (f32 min tile rows)


def _round_up(x, m):
    return ((x + m - 1) // m) * m


# ----------------------------------------------------------------------------
# Fused Pallas kernel: the entire discriminator forward in one invocation.
# Activation layout inside the kernel: (Npad, P*C padded) with channel minor.
# ----------------------------------------------------------------------------
def _make_fused_kernel(layer_cfgs):
    """Ref order: x, M0, per-layer small ops (bias / S / E), per-layer>=1 M (HBM),
       per-layer outputs, per-layer>=1 VMEM operator buffers, DMA semaphores."""
    n_layers = len(layer_cfgs)
    n_stream = n_layers - 1          # layers >= 1 get their conv operator streamed manually

    def kernel(*refs):
        it = iter(refs)
        x_ref = next(it)
        m0_ref = next(it)
        small = []
        for cfg in layer_cfgs:
            b_ref = next(it) if cfg["bias"] else None
            s_ref = next(it) if cfg["instnorm"] else None
            e_ref = next(it) if cfg["instnorm"] else None
            small.append((b_ref, s_ref, e_ref))
        m_hbm = [next(it) for _ in range(n_stream)]
        out_refs = [next(it) for _ in range(n_layers)]
        m_bufs = [next(it) for _ in range(n_stream)]
        sem = next(it)
        assert len(out_refs) == n_layers   # trace-time sanity check

        # Kick off the HBM->VMEM copies of the layer-1..3 conv operators immediately so
        # the DMA overlaps with layer-0's matmul/norm work (the kernel is DMA-latency
        # bound at this size).  Waits happen just before each operator is consumed.
        copies = []
        for idx in range(n_stream):
            cp = pltpu.make_async_copy(m_hbm[idx], m_bufs[idx], sem.at[idx])
            cp.start()
            copies.append(cp)

        y = x_ref[...]                              # (Npad, K0) bf16, cast once in wrapper
        for li, cfg in enumerate(layer_cfgs):
            if li == 0:
                m = m0_ref[...]                     # auto-DMA'd (needed first)
            else:
                copies[li - 1].wait()               # operator has been in flight since entry
                m = m_bufs[li - 1][...]
            # Conv2d(k=4, stride, pad) as ONE lane-aligned MXU matmul (bf16xbf16 -> f32):
            # stride / pad / im2col are folded into the dense operator M in the wrapper.
            y = jnp.dot(y.astype(jnp.bfloat16), m, preferred_element_type=jnp.float32)

            b_ref, s_ref, e_ref = small[li]
            if b_ref is not None:
                y = y + b_ref[...]                  # (1, Wpad) f32, zeros on padded lanes

            if cfg["instnorm"]:
                # InstanceNorm2d(affine=False) with only 2 MXU ops:
                #   [y ; y*y] @ S   -> per-(sample, channel) sums (S is a 0/1 selector,
                #                      exact in bf16; the 1/P factor is a scalar f32 mul)
                #   [scale ; off] @ E -> broadcast per-channel scale/offset back to the
                #                      (p, c)-flattened lanes (f32 for accuracy)
                nrow = y.shape[0]
                yy = jnp.concatenate([y, y * y], axis=0).astype(jnp.bfloat16)
                stats = jnp.dot(yy, s_ref[...], preferred_element_type=jnp.float32)
                stats = stats * cfg["inv_p"]
                mean, ex2 = stats[:nrow], stats[nrow:]
                var = jnp.maximum(ex2 - mean * mean, 0.0)     # biased var, clamped (f32)
                inv = lax.rsqrt(var + EPS)
                so = jnp.concatenate([inv, -mean * inv], axis=0)        # (2N, C) f32
                soe = jnp.dot(so, e_ref[...], preferred_element_type=jnp.float32)
                y = y * soe[:nrow] + soe[nrow:]

            if cfg["lrelu"]:
                y = jnp.where(y > 0, y, LRELU_SLOPE * y)      # LeakyReLU(0.2)

            out_refs[li][...] = y                   # lane-dense (Npad, Wpad) unmasked store

    return kernel


# ----------------------------------------------------------------------------
# Wrapper-side (one-time) operand construction
# ----------------------------------------------------------------------------
def _conv_as_dense_matmul(w_oihw, hi, wi, stride, pad):
    """Dense M such that  flat_nhwc(x) @ M == flat_nhwc(conv2d(x, w, stride, pad)).

    Row index:    (i*Wi + j)*Cin + c      (input spatial, channel minor)
    Column index: (oi*Wo + oj)*Cout + co  (output spatial, channel minor)
    """
    w = np.asarray(jax.device_get(w_oihw), np.float32)   # (Cout, Cin, kH, kW)
    co, ci, kh, kw = w.shape
    ho = (hi + 2 * pad - kh) // stride + 1
    wo = (wi + 2 * pad - kw) // stride + 1
    m = np.zeros((hi * wi * ci, ho * wo * co), np.float32)
    for oi in range(ho):
        for oj in range(wo):
            p = oi * wo + oj
            for ki in range(kh):
                ii = stride * oi + ki - pad
                if ii < 0 or ii >= hi:
                    continue
                for kj in range(kw):
                    jj = stride * oj + kj - pad
                    if jj < 0 or jj >= wi:
                        continue
                    q = ii * wi + jj
                    m[q * ci:(q + 1) * ci, p * co:(p + 1) * co] += w[:, :, ki, kj].T
    return m, ho, wo


def _build_fused_operands(params, height, width):
    """Builds, per layer, the lane-padded dense conv operator M (bf16), bias row (f32),
    and InstanceNorm 0/1 selector S (bf16) / expander E (f32).  Returns the kernel
    operands split into (M0, small VMEM operands, streamed HBM operators) plus meta."""
    hi, wi = height, width
    cin0 = int(params[0]["w"].shape[1])
    in_true = hi * wi * cin0
    in_pad = _round_up(in_true, LANE_PAD)

    m0 = None
    vmem_small, m_hbm, cfgs, meta = [], [], [], []
    prev_true, prev_pad = in_true, in_pad
    for li, layer in enumerate(params):
        cout = int(layer["w"].shape[0])
        m_true, ho, wo = _conv_as_dense_matmul(layer["w"], hi, wi, layer["stride"], PAD)
        out_true = ho * wo * cout
        out_pad = _round_up(out_true, LANE_PAD)

        m_pad = np.zeros((prev_pad, out_pad), np.float32)
        m_pad[:prev_true, :out_true] = m_true
        m_arr = jnp.asarray(m_pad, dtype=jnp.bfloat16)    # bf16 operator: MXU-native, half DMA
        if li == 0:
            m0 = m_arr
        else:
            m_hbm.append(m_arr)

        if layer["b"] is not None:
            b = np.zeros((1, out_pad), np.float32)
            b[0, :out_true] = np.tile(np.asarray(jax.device_get(layer["b"]), np.float32),
                                      ho * wo)
            vmem_small.append(jnp.asarray(b))
        if layer["instnorm"]:
            eye = np.eye(cout, dtype=np.float32)
            s_mat = np.zeros((out_pad, cout), np.float32)    # 0/1 selector (exact in bf16)
            e_mat = np.zeros((cout, out_pad), np.float32)
            s_mat[:out_true, :] = np.tile(eye, (ho * wo, 1))
            e_mat[:, :out_true] = np.tile(eye, (1, ho * wo))
            vmem_small.append(jnp.asarray(s_mat, dtype=jnp.bfloat16))
            vmem_small.append(jnp.asarray(e_mat, dtype=jnp.float32))

        cfgs.append(dict(bias=layer["b"] is not None, instnorm=layer["instnorm"],
                         lrelu=layer["lrelu"], inv_p=1.0 / float(ho * wo)))
        meta.append(dict(ho=ho, wo=wo, cout=cout, out_true=out_true, out_pad=out_pad))
        hi, wi = ho, wo
        prev_true, prev_pad = out_true, out_pad

    return m0, vmem_small, m_hbm, cfgs, meta, in_true, in_pad


def make_discriminator_forward(params, height, width, *, no_ganFeat_loss=False):
    """Returns a jitted forward(x_nchw) matching NLayerDiscriminator.forward."""
    (m0, vmem_small, m_hbm, cfgs, meta,
     in_true, in_pad) = _build_fused_operands(params, height, width)
    kernel = _make_fused_kernel(cfgs)

    # Dense-operator path guard (see TODO at top): operands + streamed scratch copies.
    op_bytes = int(m0.size) * 2
    op_bytes += sum(int(a.size) * a.dtype.itemsize for a in vmem_small)
    op_bytes += 2 * sum(int(m.size) * 2 for m in m_hbm)   # HBM source + VMEM scratch copy
    assert op_bytes < 24 * 1024 * 1024, "dense conv-as-matmul path too large; use tiled path"

    n_stream = len(m_hbm)
    in_specs = ([pl.BlockSpec(memory_space=pltpu.MemorySpace.VMEM)] * (2 + len(vmem_small))
                + [pl.BlockSpec(memory_space=pl.ANY)] * n_stream)
    out_specs = tuple(pl.BlockSpec(memory_space=pltpu.MemorySpace.VMEM) for _ in meta)
    scratch_shapes = ([pltpu.VMEM(m.shape, jnp.bfloat16) for m in m_hbm]
                      + [pltpu.SemaphoreType.DMA((n_stream,))])

    def forward(x_nchw):
        n = x_nchw.shape[0]
        n_pad = max(ROW_PAD, _round_up(n, ROW_PAD))
        # NCHW -> (N, H*W*C) once at the boundary; pad rows to a full sublane tile,
        # lanes to layer-0's padded K, and cast to bf16 once (MXU operand, half the DMA).
        x2 = jnp.transpose(x_nchw, (0, 2, 3, 1)).reshape(n, -1)
        x2 = jnp.pad(x2, ((0, n_pad - n), (0, in_pad - in_true))).astype(jnp.bfloat16)
        out_shape = tuple(jax.ShapeDtypeStruct((n_pad, m["out_pad"]), jnp.float32)
                          for m in meta)
        outs = pl.pallas_call(
            kernel,
            out_shape=out_shape,
            in_specs=in_specs,
            out_specs=out_specs,
            scratch_shapes=scratch_shapes,
            # Single grid-less invocation; total VMEM footprint ~4 MiB.
            compiler_params=pltpu.CompilerParams(vmem_limit_bytes=32 * 1024 * 1024),
        )(x2, m0, *vmem_small, *m_hbm)
        # Strip the row/lane padding and unpack each returned feature back to NCHW.
        feats = []
        for y, m in zip(outs, meta):
            y = y[:n, :m["out_true"]].reshape(n, m["ho"], m["wo"], m["cout"])
            feats.append(jnp.transpose(y, (0, 3, 1, 2)))
        return feats[-1] if no_ganFeat_loss else feats

    return jax.jit(forward)


# ----------------------------------------------------------------------------
# Parameter construction (deterministic, synthetic) + spectral-norm preprocessing
# (spectral norm is a weight reparametrization -> applied once in the wrapper).
# ----------------------------------------------------------------------------
def _spectral_normalize(w_oihw, key, n_power_iterations=1, eps=1e-12):
    """torch.nn.utils.spectral_norm semantics: one power iteration, W / sigma."""
    cout = w_oihw.shape[0]
    w_mat = w_oihw.reshape(cout, -1)
    u = jax.random.normal(key, (cout,), jnp.float32)
    u = u / (jnp.linalg.norm(u) + eps)
    v = None
    for _ in range(n_power_iterations):
        v = w_mat.T @ u
        v = v / (jnp.linalg.norm(v) + eps)
        u = w_mat @ v
        u = u / (jnp.linalg.norm(u) + eps)
    sigma = u @ (w_mat @ v)
    return w_oihw / sigma


def build_nlayer_discriminator_params(key, *, input_nc, ndf, n_layers_d):
    """List of per-layer dicts with keys: w, b, stride, instnorm, lrelu.
    Mirrors the spec exactly: all loop layers stride=2, final layer stride=1."""
    layers = []
    keys = jax.random.split(key, 2 * (n_layers_d + 1) + 4)
    ki = 0

    # layer 0: Conv(input_nc -> ndf, s=2) + LeakyReLU, bias, no norm
    nf = ndf
    w = 0.02 * jax.random.normal(keys[ki], (nf, input_nc, KW, KW), jnp.float32); ki += 1
    b = 0.02 * jax.random.normal(keys[ki], (nf,), jnp.float32); ki += 1
    layers.append(dict(w=w, b=b, stride=2, instnorm=False, lrelu=True))

    # layers 1..n_layers_D-1: spectral_norm(Conv, no bias) + InstanceNorm + LeakyReLU
    for _ in range(1, n_layers_d):
        nf_prev = nf
        nf = min(nf * 2, 512)
        w = 0.02 * jax.random.normal(keys[ki], (nf, nf_prev, KW, KW), jnp.float32); ki += 1
        w = _spectral_normalize(w, keys[ki]); ki += 1
        layers.append(dict(w=w, b=None, stride=2, instnorm=True, lrelu=True))

    # final layer: Conv(nf -> 1, s=1), bias, no norm / activation
    w = 0.02 * jax.random.normal(keys[ki], (1, nf, KW, KW), jnp.float32); ki += 1
    b = 0.02 * jax.random.normal(keys[ki], (1,), jnp.float32); ki += 1
    layers.append(dict(w=w, b=b, stride=1, instnorm=False, lrelu=False))
    return layers


# ----------------------------------------------------------------------------
# Pure-JAX float32 reference (for the in-script sanity check only)
# ----------------------------------------------------------------------------
def reference_forward(params, x_nchw):
    feats, x = [], x_nchw
    for layer in params:
        s = layer["stride"]
        y = lax.conv_general_dilated(
            x, layer["w"], window_strides=(s, s), padding=[(PAD, PAD), (PAD, PAD)],
            dimension_numbers=("NCHW", "OIHW", "NCHW"),
            precision=lax.Precision.HIGHEST)
        if layer["b"] is not None:
            y = y + layer["b"].reshape(1, -1, 1, 1)
        if layer["instnorm"]:
            mu = jnp.mean(y, axis=(2, 3), keepdims=True)
            var = jnp.mean((y - mu) ** 2, axis=(2, 3), keepdims=True)
            y = (y - mu) * lax.rsqrt(var + EPS)
        if layer["lrelu"]:
            y = jnp.where(y > 0, y, LRELU_SLOPE * y)
        feats.append(y)
        x = y
    return feats


if __name__ == "__main__":
    key = jax.random.PRNGKey(0)
    k_x, k_p = jax.random.split(key)

    # opt: ndf=8, n_layers_D=3, gen_semantic_nc=1 -> input_nc=4, norm_D='spectralinstance'
    N, C, H, W = 2, 4, 16, 16
    x = jax.random.normal(k_x, (N, C, H, W), jnp.float32)

    params = build_nlayer_discriminator_params(k_p, input_nc=C, ndf=8, n_layers_d=3)
    forward = make_discriminator_forward(params, H, W, no_ganFeat_loss=False)

    feats = forward(x)             # shapes: (2,8,9,9) (2,16,5,5) (2,32,3,3) (2,1,4,4)
    feats = jax.block_until_ready(feats)

    # Sanity check vs. a pure-JAX f32 reference (tolerance covers bf16 MXU operands).
    ref = reference_forward(params, x)
    for f, r in zip(feats, ref):
        assert f.shape == r.shape, (f.shape, r.shape)
        err = float(jnp.max(jnp.abs(f - r)))
        tol = 0.05 + 0.05 * float(jnp.max(jnp.abs(r)))
        if not (err <= tol):
            raise SystemExit("numerical mismatch: max_abs_err=%g tol=%g" % (err, tol))

    print("KERNEL_OK")
</pallas_src>

<mosaic_0001>
module attributes {stable_mosaic.version = 11 : i64} {
  func.func @kernel(%arg0: memref<8x1024xbf16, #tpu.memory_space<vmem>>, %arg1: memref<1024x768xbf16, #tpu.memory_space<vmem>>, %arg2: memref<1x768xf32, #tpu.memory_space<vmem>>, %arg3: memref<512x16xbf16, #tpu.memory_space<vmem>>, %arg4: memref<16x512xf32, #tpu.memory_space<vmem>>, %arg5: memref<512x32xbf16, #tpu.memory_space<vmem>>, %arg6: memref<32x512xf32, #tpu.memory_space<vmem>>, %arg7: memref<1x256xf32, #tpu.memory_space<vmem>>, %arg8: memref<768x512xbf16, #tpu.memory_space<any>>, %arg9: memref<512x512xbf16, #tpu.memory_space<any>>, %arg10: memref<512x256xbf16, #tpu.memory_space<any>>, %arg11: memref<8x768xf32, #tpu.memory_space<vmem>>, %arg12: memref<8x512xf32, #tpu.memory_space<vmem>>, %arg13: memref<8x512xf32, #tpu.memory_space<vmem>>, %arg14: memref<8x256xf32, #tpu.memory_space<vmem>>, %arg15: memref<768x512xbf16, #tpu.memory_space<vmem>>, %arg16: memref<512x512xbf16, #tpu.memory_space<vmem>>, %arg17: memref<512x256xbf16, #tpu.memory_space<vmem>>, %arg18: memref<3x!tpu.dma_semaphore, #tpu.memory_space<semaphore_mem>>) attributes {dimension_semantics = [], scalar_prefetch = 0 : i64, scratch_operands = 4 : i64, tpu.core_type = #tpu.core_type<tc>} {
    %c0_i32 = arith.constant 0 : i32
    %0 = tpu.memref_slice %arg18[%c0_i32] : memref<3x!tpu.dma_semaphore, #tpu.memory_space<semaphore_mem>> -> memref<1x!tpu.dma_semaphore, #tpu.memory_space<semaphore_mem>>
    %1 = tpu.memref_squeeze %0 : memref<1x!tpu.dma_semaphore, #tpu.memory_space<semaphore_mem>> -> memref<!tpu.dma_semaphore, #tpu.memory_space<semaphore_mem>>
    tpu.enqueue_dma source(%arg8 : memref<768x512xbf16, #tpu.memory_space<any>>) target(%arg15 : memref<768x512xbf16, #tpu.memory_space<vmem>>) target_semaphore(%1 : memref<!tpu.dma_semaphore, #tpu.memory_space<semaphore_mem>>)
    %c1_i32 = arith.constant 1 : i32
    %2 = tpu.memref_slice %arg18[%c1_i32] : memref<3x!tpu.dma_semaphore, #tpu.memory_space<semaphore_mem>> -> memref<1x!tpu.dma_semaphore, #tpu.memory_space<semaphore_mem>>
    %3 = tpu.memref_squeeze %2 : memref<1x!tpu.dma_semaphore, #tpu.memory_space<semaphore_mem>> -> memref<!tpu.dma_semaphore, #tpu.memory_space<semaphore_mem>>
    tpu.enqueue_dma source(%arg9 : memref<512x512xbf16, #tpu.memory_space<any>>) target(%arg16 : memref<512x512xbf16, #tpu.memory_space<vmem>>) target_semaphore(%3 : memref<!tpu.dma_semaphore, #tpu.memory_space<semaphore_mem>>)
    %c2_i32 = arith.constant 2 : i32
    %4 = tpu.memref_slice %arg18[%c2_i32] : memref<3x!tpu.dma_semaphore, #tpu.memory_space<semaphore_mem>> -> memref<1x!tpu.dma_semaphore, #tpu.memory_space<semaphore_mem>>
    %5 = tpu.memref_squeeze %4 : memref<1x!tpu.dma_semaphore, #tpu.memory_space<semaphore_mem>> -> memref<!tpu.dma_semaphore, #tpu.memory_space<semaphore_mem>>
    tpu.enqueue_dma source(%arg10 : memref<512x256xbf16, #tpu.memory_space<any>>) target(%arg17 : memref<512x256xbf16, #tpu.memory_space<vmem>>) target_semaphore(%5 : memref<!tpu.dma_semaphore, #tpu.memory_space<semaphore_mem>>)
    %c0 = arith.constant 0 : index
    %c0_0 = arith.constant 0 : index
    %6 = vector.load %arg0[%c0, %c0_0] : memref<8x1024xbf16, #tpu.memory_space<vmem>>, vector<8x1024xbf16>
    %c0_1 = arith.constant 0 : index
    %c0_2 = arith.constant 0 : index
    %7 = vector.load %arg1[%c0_1, %c0_2] : memref<1024x768xbf16, #tpu.memory_space<vmem>>, vector<1024x768xbf16>
    %cst = arith.constant dense<0.000000e+00> : vector<8x768xf32>
    %8 = tpu.matmul %6, %7, %cst {dimension_numbers = #tpu.dot_dimension_numbers<[1], [0], [0], [1], [0, 0, 1, 1], [], []>} : vector<8x1024xbf16>, vector<1024x768xbf16>, vector<8x768xf32> -> vector<8x768xf32>
    %c0_3 = arith.constant 0 : index
    %c0_4 = arith.constant 0 : index
    %9 = vector.load %arg2[%c0_3, %c0_4] : memref<1x768xf32, #tpu.memory_space<vmem>>, vector<1x768xf32>
    %10 = vector.broadcast %9 : vector<1x768xf32> to vector<8x768xf32>
    %11 = arith.addf %8, %10 : vector<8x768xf32>
    %cst_5 = arith.constant 0.000000e+00 : f32
    %12 = vector.broadcast %cst_5 : f32 to vector<8x768xf32>
    %13 = arith.cmpf ogt, %11, %12 : vector<8x768xf32>
    %cst_6 = arith.constant 2.000000e-01 : f32
    %14 = vector.broadcast %cst_6 : f32 to vector<8x768xf32>
    %15 = arith.mulf %14, %11 : vector<8x768xf32>
    %16 = arith.select %13, %11, %15 : vector<8x768xi1>, vector<8x768xf32>
    %c0_7 = arith.constant 0 : index
    %c0_8 = arith.constant 0 : index
    %17 = vector.load %arg11[%c0_7, %c0_8] : memref<8x768xf32, #tpu.memory_space<vmem>>, vector<8x768xf32>
    tpu.vector_store %arg11[%c0_7, %c0_8], %16 {strides = array<i32>} : memref<8x768xf32, #tpu.memory_space<vmem>>, vector<8x768xf32>,
    %c0_i32_9 = arith.constant 0 : i32
    %18 = tpu.memref_slice %arg18[%c0_i32_9] : memref<3x!tpu.dma_semaphore, #tpu.memory_space<semaphore_mem>> -> memref<1x!tpu.dma_semaphore, #tpu.memory_space<semaphore_mem>>
    %19 = tpu.memref_squeeze %18 : memref<1x!tpu.dma_semaphore, #tpu.memory_space<semaphore_mem>> -> memref<!tpu.dma_semaphore, #tpu.memory_space<semaphore_mem>>
    tpu.wait_dma2 semaphore(%19 : memref<!tpu.dma_semaphore, #tpu.memory_space<semaphore_mem>>) src(%arg8 : memref<768x512xbf16, #tpu.memory_space<any>>) dst(%arg15 : memref<768x512xbf16, #tpu.memory_space<vmem>>)
    %c0_10 = arith.constant 0 : index
    %c0_11 = arith.constant 0 : index
    %20 = vector.load %arg15[%c0_10, %c0_11] : memref<768x512xbf16, #tpu.memory_space<vmem>>, vector<768x512xbf16>
    %21 = arith.truncf %16 : vector<8x768xf32> to vector<8x768xbf16>
    %cst_12 = arith.constant dense<0.000000e+00> : vector<8x512xf32>
    %22 = tpu.matmul %21, %20, %cst_12 {dimension_numbers = #tpu.dot_dimension_numbers<[1], [0], [0], [1], [0, 0, 1, 1], [], []>} : vector<8x768xbf16>, vector<768x512xbf16>, vector<8x512xf32> -> vector<8x512xf32>
    %23 = arith.mulf %22, %22 : vector<8x512xf32>
    %24 = tpu.concatenate %22, %23 in 0 : vector<8x512xf32>, vector<8x512xf32> -> vector<16x512xf32>
    %25 = arith.truncf %24 : vector<16x512xf32> to vector<16x512xbf16>
    %c0_13 = arith.constant 0 : index
    %c0_14 = arith.constant 0 : index
    %26 = vector.load %arg3[%c0_13, %c0_14] : memref<512x16xbf16, #tpu.memory_space<vmem>>, vector<512x16xbf16>
    %cst_15 = arith.constant dense<0.000000e+00> : vector<16x16xf32>
    %27 = tpu.matmul %25, %26, %cst_15 {dimension_numbers = #tpu.dot_dimension_numbers<[1], [0], [0], [1], [0, 0, 1, 1], [], []>} : vector<16x512xbf16>, vector<512x16xbf16>, vector<16x16xf32> -> vector<16x16xf32>
    %cst_16 = arith.constant 4.000000e-02 : f32
    %28 = vector.broadcast %cst_16 : f32 to vector<16x16xf32>
    %29 = arith.mulf %27, %28 : vector<16x16xf32>
    %30 = vector.extract_strided_slice %29 {offsets = [0, 0], sizes = [8, 16], strides = [1, 1]} : vector<16x16xf32> to vector<8x16xf32>
    %31 = vector.extract_strided_slice %29 {offsets = [8, 0], sizes = [8, 16], strides = [1, 1]} : vector<16x16xf32> to vector<8x16xf32>
    %32 = arith.mulf %30, %30 : vector<8x16xf32>
    %33 = arith.subf %31, %32 : vector<8x16xf32>
    %cst_17 = arith.constant 0.000000e+00 : f32
    %34 = vector.broadcast %cst_17 : f32 to vector<8x16xf32>
    %35 = arith.maximumf %33, %34 : vector<8x16xf32>
    %cst_18 = arith.constant 9.99999974E-6 : f32
    %36 = vector.broadcast %cst_18 : f32 to vector<8x16xf32>
    %37 = arith.addf %35, %36 : vector<8x16xf32>
    %38 = math.rsqrt %37 : vector<8x16xf32>
    %cst_19 = arith.constant 0.000000e+00 : f32
    %39 = vector.broadcast %cst_19 : f32 to vector<8x16xf32>
    %40 = arith.subf %39, %30 : vector<8x16xf32>
    %41 = arith.mulf %40, %38 : vector<8x16xf32>
    %42 = tpu.concatenate %38, %41 in 0 : vector<8x16xf32>, vector<8x16xf32> -> vector<16x16xf32>
    %c0_20 = arith.constant 0 : index
    %c0_21 = arith.constant 0 : index
    %43 = vector.load %arg4[%c0_20, %c0_21] : memref<16x512xf32, #tpu.memory_space<vmem>>, vector<16x512xf32>
    %cst_22 = arith.constant dense<0.000000e+00> : vector<16x512xf32>
    %44 = tpu.matmul %42, %43, %cst_22 {dimension_numbers = #tpu.dot_dimension_numbers<[1], [0], [0], [1], [0, 0, 1, 1], [], []>} : vector<16x16xf32>, vector<16x512xf32>, vector<16x512xf32> -> vector<16x512xf32>
    %45 = vector.extract_strided_slice %44 {offsets = [0, 0], sizes = [8, 512], strides = [1, 1]} : vector<16x512xf32> to vector<8x512xf32>
    %46 = arith.mulf %22, %45 : vector<8x512xf32>
    %47 = vector.extract_strided_slice %44 {offsets = [8, 0], sizes = [8, 512], strides = [1, 1]} : vector<16x512xf32> to vector<8x512xf32>
    %48 = arith.addf %46, %47 : vector<8x512xf32>
    %cst_23 = arith.constant 0.000000e+00 : f32
    %49 = vector.broadcast %cst_23 : f32 to vector<8x512xf32>
    %50 = arith.cmpf ogt, %48, %49 : vector<8x512xf32>
    %cst_24 = arith.constant 2.000000e-01 : f32
    %51 = vector.broadcast %cst_24 : f32 to vector<8x512xf32>
    %52 = arith.mulf %51, %48 : vector<8x512xf32>
    %53 = arith.select %50, %48, %52 : vector<8x512xi1>, vector<8x512xf32>
    %c0_25 = arith.constant 0 : index
    %c0_26 = arith.constant 0 : index
    %54 = vector.load %arg12[%c0_25, %c0_26] : memref<8x512xf32, #tpu.memory_space<vmem>>, vector<8x512xf32>
    tpu.vector_store %arg12[%c0_25, %c0_26], %53 {strides = array<i32>} : memref<8x512xf32, #tpu.memory_space<vmem>>, vector<8x512xf32>,
    %c1_i32_27 = arith.constant 1 : i32
    %55 = tpu.memref_slice %arg18[%c1_i32_27] : memref<3x!tpu.dma_semaphore, #tpu.memory_space<semaphore_mem>> -> memref<1x!tpu.dma_semaphore, #tpu.memory_space<semaphore_mem>>
    %56 = tpu.memref_squeeze %55 : memref<1x!tpu.dma_semaphore, #tpu.memory_space<semaphore_mem>> -> memref<!tpu.dma_semaphore, #tpu.memory_space<semaphore_mem>>
    tpu.wait_dma2 semaphore(%56 : memref<!tpu.dma_semaphore, #tpu.memory_space<semaphore_mem>>) src(%arg9 : memref<512x512xbf16, #tpu.memory_space<any>>) dst(%arg16 : memref<512x512xbf16, #tpu.memory_space<vmem>>)
    %c0_28 = arith.constant 0 : index
    %c0_29 = arith.constant 0 : index
    %57 = vector.load %arg16[%c0_28, %c0_29] : memref<512x512xbf16, #tpu.memory_space<vmem>>, vector<512x512xbf16>
    %58 = arith.truncf %53 : vector<8x512xf32> to vector<8x512xbf16>
    %cst_30 = arith.constant dense<0.000000e+00> : vector<8x512xf32>
    %59 = tpu.matmul %58, %57, %cst_30 {dimension_numbers = #tpu.dot_dimension_numbers<[1], [0], [0], [1], [0, 0, 1, 1], [], []>} : vector<8x512xbf16>, vector<512x512xbf16>, vector<8x512xf32> -> vector<8x512xf32>
    %60 = arith.mulf %59, %59 : vector<8x512xf32>
    %61 = tpu.concatenate %59, %60 in 0 : vector<8x512xf32>, vector<8x512xf32> -> vector<16x512xf32>
    %62 = arith.truncf %61 : vector<16x512xf32> to vector<16x512xbf16>
    %c0_31 = arith.constant 0 : index
    %c0_32 = arith.constant 0 : index
    %63 = vector.load %arg5[%c0_31, %c0_32] : memref<512x32xbf16, #tpu.memory_space<vmem>>, vector<512x32xbf16>
    %cst_33 = arith.constant dense<0.000000e+00> : vector<16x32xf32>
    %64 = tpu.matmul %62, %63, %cst_33 {dimension_numbers = #tpu.dot_dimension_numbers<[1], [0], [0], [1], [0, 0, 1, 1], [], []>} : vector<16x512xbf16>, vector<512x32xbf16>, vector<16x32xf32> -> vector<16x32xf32>
    %cst_34 = arith.constant 0.111111112 : f32
    %65 = vector.broadcast %cst_34 : f32 to vector<16x32xf32>
    %66 = arith.mulf %64, %65 : vector<16x32xf32>
    %67 = vector.extract_strided_slice %66 {offsets = [0, 0], sizes = [8, 32], strides = [1, 1]} : vector<16x32xf32> to vector<8x32xf32>
    %68 = vector.extract_strided_slice %66 {offsets = [8, 0], sizes = [8, 32], strides = [1, 1]} : vector<16x32xf32> to vector<8x32xf32>
    %69 = arith.mulf %67, %67 : vector<8x32xf32>
    %70 = arith.subf %68, %69 : vector<8x32xf32>
    %cst_35 = arith.constant 0.000000e+00 : f32
    %71 = vector.broadcast %cst_35 : f32 to vector<8x32xf32>
    %72 = arith.maximumf %70, %71 : vector<8x32xf32>
    %cst_36 = arith.constant 9.99999974E-6 : f32
    %73 = vector.broadcast %cst_36 : f32 to vector<8x32xf32>
    %74 = arith.addf %72, %73 : vector<8x32xf32>
    %75 = math.rsqrt %74 : vector<8x32xf32>
    %cst_37 = arith.constant 0.000000e+00 : f32
    %76 = vector.broadcast %cst_37 : f32 to vector<8x32xf32>
    %77 = arith.subf %76, %67 : vector<8x32xf32>
    %78 = arith.mulf %77, %75 : vector<8x32xf32>
    %79 = tpu.concatenate %75, %78 in 0 : vector<8x32xf32>, vector<8x32xf32> -> vector<16x32xf32>
    %c0_38 = arith.constant 0 : index
    %c0_39 = arith.constant 0 : index
    %80 = vector.load %arg6[%c0_38, %c0_39] : memref<32x512xf32, #tpu.memory_space<vmem>>, vector<32x512xf32>
    %cst_40 = arith.constant dense<0.000000e+00> : vector<16x512xf32>
    %81 = tpu.matmul %79, %80, %cst_40 {dimension_numbers = #tpu.dot_dimension_numbers<[1], [0], [0], [1], [0, 0, 1, 1], [], []>} : vector<16x32xf32>, vector<32x512xf32>, vector<16x512xf32> -> vector<16x512xf32>
    %82 = vector.extract_strided_slice %81 {offsets = [0, 0], sizes = [8, 512], strides = [1, 1]} : vector<16x512xf32> to vector<8x512xf32>
    %83 = arith.mulf %59, %82 : vector<8x512xf32>
    %84 = vector.extract_strided_slice %81 {offsets = [8, 0], sizes = [8, 512], strides = [1, 1]} : vector<16x512xf32> to vector<8x512xf32>
    %85 = arith.addf %83, %84 : vector<8x512xf32>
    %cst_41 = arith.constant 0.000000e+00 : f32
    %86 = vector.broadcast %cst_41 : f32 to vector<8x512xf32>
    %87 = arith.cmpf ogt, %85, %86 : vector<8x512xf32>
    %cst_42 = arith.constant 2.000000e-01 : f32
    %88 = vector.broadcast %cst_42 : f32 to vector<8x512xf32>
    %89 = arith.mulf %88, %85 : vector<8x512xf32>
    %90 = arith.select %87, %85, %89 : vector<8x512xi1>, vector<8x512xf32>
    %c0_43 = arith.constant 0 : index
    %c0_44 = arith.constant 0 : index
    %91 = vector.load %arg13[%c0_43, %c0_44] : memref<8x512xf32, #tpu.memory_space<vmem>>, vector<8x512xf32>
    tpu.vector_store %arg13[%c0_43, %c0_44], %90 {strides = array<i32>} : memref<8x512xf32, #tpu.memory_space<vmem>>, vector<8x512xf32>,
    %c2_i32_45 = arith.constant 2 : i32
    %92 = tpu.memref_slice %arg18[%c2_i32_45] : memref<3x!tpu.dma_semaphore, #tpu.memory_space<semaphore_mem>> -> memref<1x!tpu.dma_semaphore, #tpu.memory_space<semaphore_mem>>
    %93 = tpu.memref_squeeze %92 : memref<1x!tpu.dma_semaphore, #tpu.memory_space<semaphore_mem>> -> memref<!tpu.dma_semaphore, #tpu.memory_space<semaphore_mem>>
    tpu.wait_dma2 semaphore(%93 : memref<!tpu.dma_semaphore, #tpu.memory_space<semaphore_mem>>) src(%arg10 : memref<512x256xbf16, #tpu.memory_space<any>>) dst(%arg17 : memref<512x256xbf16, #tpu.memory_space<vmem>>)
    %c0_46 = arith.constant 0 : index
    %c0_47 = arith.constant 0 : index
    %94 = vector.load %arg17[%c0_46, %c0_47] : memref<512x256xbf16, #tpu.memory_space<vmem>>, vector<512x256xbf16>
    %95 = arith.truncf %90 : vector<8x512xf32> to vector<8x512xbf16>
    %cst_48 = arith.constant dense<0.000000e+00> : vector<8x256xf32>
    %96 = tpu.matmul %95, %94, %cst_48 {dimension_numbers = #tpu.dot_dimension_numbers<[1], [0], [0], [1], [0, 0, 1, 1], [], []>} : vector<8x512xbf16>, vector<512x256xbf16>, vector<8x256xf32> -> vector<8x256xf32>
    %c0_49 = arith.constant 0 : index
    %c0_50 = arith.constant 0 : index
    %97 = vector.load %arg7[%c0_49, %c0_50] : memref<1x256xf32, #tpu.memory_space<vmem>>, vector<1x256xf32>
    %98 = vector.broadcast %97 : vector<1x256xf32> to vector<8x256xf32>
    %99 = arith.addf %96, %98 : vector<8x256xf32>
    %c0_51 = arith.constant 0 : index
    %c0_52 = arith.constant 0 : index
    %100 = vector.load %arg14[%c0_51, %c0_52] : memref<8x256xf32, #tpu.memory_space<vmem>>, vector<8x256xf32>
    tpu.vector_store %arg14[%c0_51, %c0_52], %99 {strides = array<i32>} : memref<8x256xf32, #tpu.memory_space<vmem>>, vector<8x256xf32>,
    return
  }
}

</mosaic_0001>

<llo_original>
// kernel: forward.1
$region0: #{forward.1}
  #allocation0 [shape = 'u32[]', space=smem, size = 0x4, offset = 0x4, fixed_abs, tag = 'smem constant byte address 0x4 - core index']
  #allocation1 [shape = 'u32[72,128]{1,0:T(1,128)}', space=vmem, size = 0x9000, scoped, tag = 'internal scratch']
  #allocation2 [shape = 'bf16[768,512]{1,0:T(8,128)(2,1)}', space=vmem, size = 0xc0000, scoped, tag = 'scratch operand']
  #allocation3 [shape = 'bf16[512,512]{1,0:T(8,128)(2,1)}', space=vmem, size = 0x80000, scoped, tag = 'scratch operand']
  #allocation4 [shape = 'bf16[512,256]{1,0:T(8,128)(2,1)}', space=vmem, size = 0x40000, scoped, tag = 'scratch operand']
  #allocation5 [shape = 's32[3]{0}', space=sflag, size = 0xc, scoped, tag = 'scratch operand']
  #allocation17 [shape = 's32[]', space=sflag, size = 0x4, offset = 0, fixed_abs, tag = 'sflag constant byte address 0x0 - dummy sync flag']
  #allocation18 [shape = 's32[]', space=sflag, size = 0x4, offset = 0, fixed_abs, tag = 'sflag constant byte address 0x0 - dummy sync flag']
  #allocation19 [shape = 'u32[]', space=smem, size = 0x4, offset = 0x44, fixed_abs, tag = 'smem constant byte address 0x44 - assertion arg 0']
  #allocation20 [shape = 'u32[]', space=smem, size = 0x4, offset = 0x48, fixed_abs, tag = 'smem constant byte address 0x48 - assertion arg 1']
  #allocation21 [shape = 's32[]', space=sflag, size = 0x4, offset = 0, fixed_abs, tag = 'sflag constant byte address 0x0 - dummy sync flag']
  #allocation22 [shape = 's32[]', space=sflag, size = 0x4, offset = 0, fixed_abs, tag = 'sflag constant byte address 0x0 - dummy sync flag']
  #allocation23 [shape = 's32[]', space=sflag, size = 0x4, offset = 0, fixed_abs, tag = 'sflag constant byte address 0x0 - dummy sync flag']
  #allocation24 [shape = 's32[]', space=sflag, size = 0x4, offset = 0, fixed_abs, tag = 'sflag constant byte address 0x0 - dummy sync flag']
  %s0 = inlined_call_operand.vmem [shape: bf16[8,1024], index: 0, kind: input, shape index: {}]
  %s1 = inlined_call_operand.hbm [shape: bf16[1024,768], index: 1, kind: input, shape index: {}]
  %s2 = inlined_call_operand.hbm [shape: f32[1,768], index: 2, kind: input, shape index: {}]
  %s3 = inlined_call_operand.hbm [shape: bf16[512,16], index: 3, kind: input, shape index: {}]
  %s4 = inlined_call_operand.hbm [shape: f32[16,512], index: 4, kind: input, shape index: {}]
  %s5 = inlined_call_operand.hbm [shape: bf16[512,32], index: 5, kind: input, shape index: {}]
  %s6 = inlined_call_operand.hbm [shape: f32[32,512], index: 6, kind: input, shape index: {}]
  %s7 = inlined_call_operand.hbm [shape: f32[1,256], index: 7, kind: input, shape index: {}]
  %s8 = inlined_call_operand.hbm [shape: bf16[768,512], index: 8, kind: input, shape index: {}]
  %s9 = inlined_call_operand.hbm [shape: bf16[512,512], index: 9, kind: input, shape index: {}]
  %s10 = inlined_call_operand.hbm [shape: bf16[512,256], index: 10, kind: input, shape index: {}]
  %s11 = inlined_call_operand.vmem [shape: f32[8,768], index: 11, kind: output, shape index: {0}]
  %s12 = inlined_call_operand.vmem [shape: f32[8,512], index: 12, kind: output, shape index: {1}]
  %s13 = inlined_call_operand.vmem [shape: f32[8,512], index: 13, kind: output, shape index: {2}]
  %s14 = inlined_call_operand.vmem [shape: f32[8,256], index: 14, kind: output, shape index: {3}]
  %15 = xla_tuple %s11, %s12, %s13, %s14
  %s16 = sld [smem:[#allocation0]]
  $region106: #{forward.1} parent=0
    _
  %s18 = ssub.s32 1, %s16
  %s19 = scalar_select 0, %s18, %s16
  $region1: #{forward.1} parent=0
    #allocation6 [shape = 'u8[1572864]{0}', space=vmem, size = 0x180000, scoped, tag = 'input window, operand 1, single buffered']
    #allocation7 [shape = 's32[1]{0}', space=sflag, size = 0x4, scoped, tag = 'scoped memory for forward.1']
    #allocation8 [shape = 'u8[3072]{0}', space=vmem, size = 0xc00, scoped, tag = 'input window, operand 2, single buffered']
    #allocation9 [shape = 's32[1]{0}', space=sflag, size = 0x4, scoped, tag = 'scoped memory for forward.1']
    #allocation10 [shape = 'u8[131072]{0}', space=vmem, size = 0x20000, scoped, tag = 'input window, operand 3, single buffered']
    #allocation11 [shape = 'u8[32768]{0}', space=vmem, size = 0x8000, scoped, tag = 'input window, operand 4, single buffered']
    #allocation12 [shape = 's32[1]{0}', space=sflag, size = 0x4, scoped, tag = 'scoped memory for forward.1']
    #allocation13 [shape = 'u8[131072]{0}', space=vmem, size = 0x20000, scoped, tag = 'input window, operand 5, single buffered']
    #allocation14 [shape = 'u8[65536]{0}', space=vmem, size = 0x10000, scoped, tag = 'input window, operand 6, single buffered']
    #allocation15 [shape = 's32[1]{0}', space=sflag, size = 0x4, scoped, tag = 'scoped memory for forward.1']
    #allocation16 [shape = 'u8[1024]{0}', space=vmem, size = 0x400, scoped, tag = 'input window, operand 7, single buffered']
    %20 = vsyncpa [#allocation7], 0
    %21 = vsyncpa [#allocation9], 0
    %22 = vsyncpa [#allocation12], 0
    %23 = vsyncpa [#allocation15], 0
    // Predicated region
    $region2: #{forward.1} parent=1 // pred_check
      _
    $region3: #{forward.1} parent=1 // pred_check_branch
      %25 = sbr.rel (0) target = $region5
    $region4: #{forward.1} parent=1 // pred_region
      _
    $region5: #{forward.1} parent=1 // pred_fallthru
      _
    // Predicated region
    $region6: #{forward.1} parent=1 // pred_check
      _
    $region7: #{forward.1} parent=1 // pred_check_branch
      %27 = sbr.rel (0) target = $region9
    $region8: #{forward.1} parent=1 // pred_region
      %29 = vsyncadd [#allocation7], 0
      %s30 = sshll.u32 %s1, 4
      %s31 = int_to_ptr.hbm [resolvable:$true] %s30
      %s32 = sshll.u32 [#allocation6], 4
      %s33 = int_to_ptr.vmem [resolvable:$true] %s32
      %38 = dma.hbm_to_vmem [thread:$0]  %s31, 49152, %s33, [#allocation7], 384, 384, 24
    $region9: #{forward.1} parent=1 // pred_fallthru
      _
    // Predicated region
    $region10: #{forward.1} parent=1 // pred_check
      _
    $region11: #{forward.1} parent=1 // pred_check_branch
      %40 = sbr.rel (0) target = $region13
    $region12: #{forward.1} parent=1 // pred_region
      %42 = vsyncadd [#allocation9], 0
      %s44 = sshll.u32 %s2, 4
      %s45 = int_to_ptr.hbm [resolvable:$true] %s44
      %s46 = sshll.u32 [#allocation8], 4
      %s47 = int_to_ptr.vmem [resolvable:$true] %s46
      %49 = dma.hbm_to_vmem [thread:$0]  %s45, 96, %s47, [#allocation9]
    $region13: #{forward.1} parent=1 // pred_fallthru
      _
    // Predicated region
    $region14: #{forward.1} parent=1 // pred_check
      _
    $region15: #{forward.1} parent=1 // pred_check_branch
      %51 = sbr.rel (0) target = $region17
    $region16: #{forward.1} parent=1 // pred_region
      %53 = vsyncadd [#allocation9], 0
      %s54 = sshll.u32 %s3, 4
      %s55 = int_to_ptr.hbm [resolvable:$true] %s54
      %s56 = sshll.u32 [#allocation10], 4
      %s57 = int_to_ptr.vmem [resolvable:$true] %s56
      %62 = dma.hbm_to_vmem [thread:$0]  %s55, 4096, %s57, [#allocation9], 64, 64, 4
    $region17: #{forward.1} parent=1 // pred_fallthru
      _
    // Predicated region
    $region18: #{forward.1} parent=1 // pred_check
      _
    $region19: #{forward.1} parent=1 // pred_check_branch
      %64 = sbr.rel (0) target = $region21
    $region20: #{forward.1} parent=1 // pred_region
      %66 = vsyncadd [#allocation12], 0
      %s67 = sshll.u32 %s4, 4
      %s68 = int_to_ptr.hbm [resolvable:$true] %s67
      %s69 = sshll.u32 [#allocation11], 4
      %s70 = int_to_ptr.vmem [resolvable:$true] %s69
      %75 = dma.hbm_to_vmem [thread:$0]  %s68, 1024, %s70, [#allocation12], 512, 512, 32
    $region21: #{forward.1} parent=1 // pred_fallthru
      _
    // Predicated region
    $region22: #{forward.1} parent=1 // pred_check
      _
    $region23: #{forward.1} parent=1 // pred_check_branch
      %77 = sbr.rel (0) target = $region25
    $region24: #{forward.1} parent=1 // pred_region
      %79 = vsyncadd [#allocation12], 0
      %s80 = sshll.u32 %s5, 4
      %s81 = int_to_ptr.hbm [resolvable:$true] %s80
      %s82 = sshll.u32 [#allocation13], 4
      %s83 = int_to_ptr.vmem [resolvable:$true] %s82
      %88 = dma.hbm_to_vmem [thread:$0]  %s81, 4096, %s83, [#allocation12], 64, 64, 4
    $region25: #{forward.1} parent=1 // pred_fallthru
      _
    // Predicated region
    $region26: #{forward.1} parent=1 // pred_check
      _
    $region27: #{forward.1} parent=1 // pred_check_branch
      %90 = sbr.rel (0) target = $region29
    $region28: #{forward.1} parent=1 // pred_region
      %92 = vsyncadd [#allocation15], 0
      %s93 = sshll.u32 %s6, 4
      %s94 = int_to_ptr.hbm [resolvable:$true] %s93
      %s95 = sshll.u32 [#allocation14], 4
      %s96 = int_to_ptr.vmem [resolvable:$true] %s95
      %101 = dma.hbm_to_vmem [thread:$0]  %s94, 2048, %s96, [#allocation15], 512, 512, 32
    $region29: #{forward.1} parent=1 // pred_fallthru
      _
    // Predicated region
    $region30: #{forward.1} parent=1 // pred_check
      _
    $region31: #{forward.1} parent=1 // pred_check_branch
      %103 = sbr.rel (0) target = $region33
    $region32: #{forward.1} parent=1 // pred_region
      %105 = vsyncadd [#allocation15], 0
      %s107 = sshll.u32 %s7, 4
      %s108 = int_to_ptr.hbm [resolvable:$true] %s107
      %s109 = sshll.u32 [#allocation16], 4
      %s110 = int_to_ptr.vmem [resolvable:$true] %s109
      %112 = dma.hbm_to_vmem [thread:$0]  %s108, 32, %s110, [#allocation15]
    $region33: #{forward.1} parent=1 // pred_fallthru
      _
    // Predicated region
    $region34: #{forward.1} parent=1 // pred_check
      _
    $region35: #{forward.1} parent=1 // pred_check_branch
      %114 = sbr.rel (0) target = $region37
    $region36: #{forward.1} parent=1 // pred_region
      %116 = dma.done [#allocation7], 49152
    $region37: #{forward.1} parent=1 // pred_fallthru
      _
    // Predicated region
    $region38: #{forward.1} parent=1 // pred_check
      _
    $region39: #{forward.1} parent=1 // pred_check_branch
      %118 = sbr.rel (0) target = $region41
    $region40: #{forward.1} parent=1 // pred_region
      %120 = dma.done [#allocation9], 96
    $region41: #{forward.1} parent=1 // pred_fallthru
      _
    // Predicated region
    $region42: #{forward.1} parent=1 // pred_check
      _
    $region43: #{forward.1} parent=1 // pred_check_branch
      %122 = sbr.rel (0) target = $region45
    $region44: #{forward.1} parent=1 // pred_region
      %124 = dma.done [#allocation9], 4096
    $region45: #{forward.1} parent=1 // pred_fallthru
      _
    // Predicated region
    $region46: #{forward.1} parent=1 // pred_check
      _
    $region47: #{forward.1} parent=1 // pred_check_branch
      %126 = sbr.rel (0) target = $region49
    $region48: #{forward.1} parent=1 // pred_region
      %128 = dma.done [#allocation12], 1024
    $region49: #{forward.1} parent=1 // pred_fallthru
      _
    // Predicated region
    $region50: #{forward.1} parent=1 // pred_check
      _
    $region51: #{forward.1} parent=1 // pred_check_branch
      %130 = sbr.rel (0) target = $region53
    $region52: #{forward.1} parent=1 // pred_region
      %132 = dma.done [#allocation12], 4096
    $region53: #{forward.1} parent=1 // pred_fallthru
      _
    // Predicated region
    $region54: #{forward.1} parent=1 // pred_check
      _
    $region55: #{forward.1} parent=1 // pred_check_branch
      %134 = sbr.rel (0) target = $region57
    $region56: #{forward.1} parent=1 // pred_region
      %136 = dma.done [#allocation15], 2048
    $region57: #{forward.1} parent=1 // pred_fallthru
      _
    // Predicated region
    $region58: #{forward.1} parent=1 // pred_check
      _
    $region59: #{forward.1} parent=1 // pred_check_branch
      %138 = sbr.rel (0) target = $region61
    $region60: #{forward.1} parent=1 // pred_region
      %140 = dma.done [#allocation15], 32
    $region61: #{forward.1} parent=1 // pred_fallthru
      _
    // Predicated region
    $region62: #{forward.1} parent=1 // pred_check
      _
    $region63: #{forward.1} parent=1 // pred_check_branch
      %142 = sbr.rel target = $region65
    $region64: #{forward.1} parent=1 // pred_region
      %143 = sst [smem:[#allocation19]] [#allocation18]
      %144 = sst [smem:[#allocation20]] [#allocation17]
    $region65: #{forward.1} parent=1 // pred_fallthru
      _
    %146 = shalt.err (0)
    %s148 = sshll.u32 %s8, 4
    %s149 = int_to_ptr.hbm [resolvable:$true] %s148
    %s150 = sshll.u32 [#allocation2], 4
    %s151 = int_to_ptr.vmem [resolvable:$true] %s150
    %153 = dma.hbm_to_vmem [thread:$0]  %s149, 24576, %s151, [#allocation5]
    %s154 = scalar_lea.sflag [#allocation5], 1
    // Predicated region
    $region66: #{forward.1} parent=1 // pred_check
      _
    $region67: #{forward.1} parent=1 // pred_check_branch
      %156 = sbr.rel target = $region69
    $region68: #{forward.1} parent=1 // pred_region
      %157 = sst [smem:[#allocation19]] [#allocation22]
      %158 = sst [smem:[#allocation20]] [#allocation21]
    $region69: #{forward.1} parent=1 // pred_fallthru
      _
    %160 = shalt.err (0)
    %s162 = sshll.u32 %s9, 4
    %s163 = int_to_ptr.hbm [resolvable:$true] %s162
    %s164 = sshll.u32 [#allocation3], 4
    %s165 = int_to_ptr.vmem [resolvable:$true] %s164
    %167 = dma.hbm_to_vmem [thread:$0]  %s163, 16384, %s165, %s154
    %s168 = scalar_lea.sflag [#allocation5], 2
    // Predicated region
    $region70: #{forward.1} parent=1 // pred_check
      _
    $region71: #{forward.1} parent=1 // pred_check_branch
      %170 = sbr.rel target = $region73
    $region72: #{forward.1} parent=1 // pred_region
      %171 = sst [smem:[#allocation19]] [#allocation24]
      %172 = sst [smem:[#allocation20]] [#allocation23]
    $region73: #{forward.1} parent=1 // pred_fallthru
      _
    %174 = shalt.err (0)
    %s176 = sshll.u32 %s10, 4
    %s177 = int_to_ptr.hbm [resolvable:$true] %s176
    %s178 = sshll.u32 [#allocation4], 4
    %s179 = int_to_ptr.vmem [resolvable:$true] %s178
    %181 = dma.hbm_to_vmem [thread:$0]  %s177, 8192, %s179, %s168
    %v182 = vld [vmem:[%s0] sm:$0xff]
    %v183 = vld [vmem:[%s0 + $0x8] sm:$0xff]
    %v184 = vld [vmem:[%s0 + $0x10] sm:$0xff]
    %v185 = vld [vmem:[%s0 + $0x18] sm:$0xff]
    %v186 = vld [vmem:[#allocation6] sm:$0xff]
    %v187 = vld [vmem:[#allocation6 + $0x8] sm:$0xff]
    %v188 = vld [vmem:[#allocation6 + $0x10] sm:$0xff]
    %v189 = vld [vmem:[#allocation6 + $0x18] sm:$0xff]
    %v190 = vld [vmem:[#allocation6 + $0x20] sm:$0xff]
    %v191 = vld [vmem:[#allocation6 + $0x28] sm:$0xff]
    %v192 = vld [vmem:[#allocation6 + $0x30] sm:$0xff]
    %v193 = vld [vmem:[#allocation6 + $0x38] sm:$0xff]
    %v194 = vld [vmem:[#allocation6 + $0x40] sm:$0xff]
    %v195 = vld [vmem:[#allocation6 + $0x48] sm:$0xff]
    %v196 = vld [vmem:[#allocation6 + $0x50] sm:$0xff]
    %v197 = vld [vmem:[#allocation6 + $0x58] sm:$0xff]
    %v198 = vld [vmem:[#allocation6 + $0x60] sm:$0xff]
    %v199 = vld [vmem:[#allocation6 + $0x68] sm:$0xff]
    %v200 = vld [vmem:[#allocation6 + $0x70] sm:$0xff]
    %v201 = vld [vmem:[#allocation6 + $0x78] sm:$0xff]
    %v202 = vld [vmem:[#allocation6 + $0x80] sm:$0xff]
    %v203 = vld [vmem:[#allocation6 + $0x88] sm:$0xff]
    %v204 = vld [vmem:[#allocation6 + $0x90] sm:$0xff]
    %v205 = vld [vmem:[#allocation6 + $0x98] sm:$0xff]
    %v206 = vld [vmem:[#allocation6 + $0xa0] sm:$0xff]
    %v207 = vld [vmem:[#allocation6 + $0xa8] sm:$0xff]
    %v208 = vld [vmem:[#allocation6 + $0xb0] sm:$0xff]
    %v209 = vld [vmem:[#allocation6 + $0xb8] sm:$0xff]
    %v210 = vld [vmem:[#allocation6 + $0xc0] sm:$0xff]
    %v211 = vld [vmem:[#allocation6 + $0xc8] sm:$0xff]
    %v212 = vld [vmem:[#allocation6 + $0xd0] sm:$0xff]
    %v213 = vld [vmem:[#allocation6 + $0xd8] sm:$0xff]
    %v214 = vld [vmem:[#allocation6 + $0xe0] sm:$0xff]
    %v215 = vld [vmem:[#allocation6 + $0xe8] sm:$0xff]
    %v216 = vld [vmem:[#allocation6 + $0xf0] sm:$0xff]
    %v217 = vld [vmem:[#allocation6 + $0xf8] sm:$0xff]
    %v218 = vld [vmem:[#allocation6 + $0x100] sm:$0xff]
    %v219 = vld [vmem:[#allocation6 + $0x108] sm:$0xff]
    %v220 = vld [vmem:[#allocation6 + $0x110] sm:$0xff]
    %v221 = vld [vmem:[#allocation6 + $0x118] sm:$0xff]
    %v222 = vld [vmem:[#allocation6 + $0x120] sm:$0xff]
    %v223 = vld [vmem:[#allocation6 + $0x128] sm:$0xff]
    %v224 = vld [vmem:[#allocation6 + $0x130] sm:$0xff]
    %v225 = vld [vmem:[#allocation6 + $0x138] sm:$0xff]
    %v226 = vld [vmem:[#allocation6 + $0x140] sm:$0xff]
    %v227 = vld [vmem:[#allocation6 + $0x148] sm:$0xff]
    %v228 = vld [vmem:[#allocation6 + $0x150] sm:$0xff]
    %v229 = vld [vmem:[#allocation6 + $0x158] sm:$0xff]
    %v230 = vld [vmem:[#allocation6 + $0x160] sm:$0xff]
    %v231 = vld [vmem:[#allocation6 + $0x168] sm:$0xff]
    %v232 = vld [vmem:[#allocation6 + $0x170] sm:$0xff]
    %v233 = vld [vmem:[#allocation6 + $0x178] sm:$0xff]
    %v234 = vld [vmem:[#allocation6 + $0x180] sm:$0xff]
    %v235 = vld [vmem:[#allocation6 + $0x188] sm:$0xff]
    %v236 = vld [vmem:[#allocation6 + $0x190] sm:$0xff]
    %v237 = vld [vmem:[#allocation6 + $0x198] sm:$0xff]
    %v238 = vld [vmem:[#allocation6 + $0x1a0] sm:$0xff]
    %v239 = vld [vmem:[#allocation6 + $0x1a8] sm:$0xff]
    %v240 = vld [vmem:[#allocation6 + $0x1b0] sm:$0xff]
    %v241 = vld [vmem:[#allocation6 + $0x1b8] sm:$0xff]
    %v242 = vld [vmem:[#allocation6 + $0x1c0] sm:$0xff]
    %v243 = vld [vmem:[#allocation6 + $0x1c8] sm:$0xff]
    %v244 = vld [vmem:[#allocation6 + $0x1d0] sm:$0xff]
    %v245 = vld [vmem:[#allocation6 + $0x1d8] sm:$0xff]
    %v246 = vld [vmem:[#allocation6 + $0x1e0] sm:$0xff]
    %v247 = vld [vmem:[#allocation6 + $0x1e8] sm:$0xff]
    %v248 = vld [vmem:[#allocation6 + $0x1f0] sm:$0xff]
    %v249 = vld [vmem:[#allocation6 + $0x1f8] sm:$0xff]
    %v250 = vld [vmem:[#allocation6 + $0x200] sm:$0xff]
    %v251 = vld [vmem:[#allocation6 + $0x208] sm:$0xff]
    %v252 = vld [vmem:[#allocation6 + $0x210] sm:$0xff]
    %v253 = vld [vmem:[#allocation6 + $0x218] sm:$0xff]
    %v254 = vld [vmem:[#allocation6 + $0x220] sm:$0xff]
    %v255 = vld [vmem:[#allocation6 + $0x228] sm:$0xff]
    %v256 = vld [vmem:[#allocation6 + $0x230] sm:$0xff]
    %v257 = vld [vmem:[#allocation6 + $0x238] sm:$0xff]
    %v258 = vld [vmem:[#allocation6 + $0x240] sm:$0xff]
    %v259 = vld [vmem:[#allocation6 + $0x248] sm:$0xff]
    %v260 = vld [vmem:[#allocation6 + $0x250] sm:$0xff]
    %v261 = vld [vmem:[#allocation6 + $0x258] sm:$0xff]
    %v262 = vld [vmem:[#allocation6 + $0x260] sm:$0xff]
    %v263 = vld [vmem:[#allocation6 + $0x268] sm:$0xff]
    %v264 = vld [vmem:[#allocation6 + $0x270] sm:$0xff]
    %v265 = vld [vmem:[#allocation6 + $0x278] sm:$0xff]
    %v266 = vld [vmem:[#allocation6 + $0x280] sm:$0xff]
    %v267 = vld [vmem:[#allocation6 + $0x288] sm:$0xff]
    %v268 = vld [vmem:[#allocation6 + $0x290] sm:$0xff]
    %v269 = vld [vmem:[#allocation6 + $0x298] sm:$0xff]
    %v270 = vld [vmem:[#allocation6 + $0x2a0] sm:$0xff]
    %v271 = vld [vmem:[#allocation6 + $0x2a8] sm:$0xff]
    %v272 = vld [vmem:[#allocation6 + $0x2b0] sm:$0xff]
    %v273 = vld [vmem:[#allocation6 + $0x2b8] sm:$0xff]
    %v274 = vld [vmem:[#allocation6 + $0x2c0] sm:$0xff]
    %v275 = vld [vmem:[#allocation6 + $0x2c8] sm:$0xff]
    %v276 = vld [vmem:[#allocation6 + $0x2d0] sm:$0xff]
    %v277 = vld [vmem:[#allocation6 + $0x2d8] sm:$0xff]
    %v278 = vld [vmem:[#allocation6 + $0x2e0] sm:$0xff]
    %v279 = vld [vmem:[#allocation6 + $0x2e8] sm:$0xff]
    %v280 = vld [vmem:[#allocation6 + $0x2f0] sm:$0xff]
    %v281 = vld [vmem:[#allocation6 + $0x2f8] sm:$0xff]
    %v282 = vld [vmem:[#allocation6 + $0x300] sm:$0xff]
    %v283 = vld [vmem:[#allocation6 + $0x308] sm:$0xff]
    %v284 = vld [vmem:[#allocation6 + $0x310] sm:$0xff]
    %v285 = vld [vmem:[#allocation6 + $0x318] sm:$0xff]
    %v286 = vld [vmem:[#allocation6 + $0x320] sm:$0xff]
    %v287 = vld [vmem:[#allocation6 + $0x328] sm:$0xff]
    %v288 = vld [vmem:[#allocation6 + $0x330] sm:$0xff]
    %v289 = vld [vmem:[#allocation6 + $0x338] sm:$0xff]
    %v290 = vld [vmem:[#allocation6 + $0x340] sm:$0xff]
    %v291 = vld [vmem:[#allocation6 + $0x348] sm:$0xff]
    %v292 = vld [vmem:[#allocation6 + $0x350] sm:$0xff]
    %v293 = vld [vmem:[#allocation6 + $0x358] sm:$0xff]
    %v294 = vld [vmem:[#allocation6 + $0x360] sm:$0xff]
    %v295 = vld [vmem:[#allocation6 + $0x368] sm:$0xff]
    %v296 = vld [vmem:[#allocation6 + $0x370] sm:$0xff]
    %v297 = vld [vmem:[#allocation6 + $0x378] sm:$0xff]
    %v298 = vld [vmem:[#allocation6 + $0x380] sm:$0xff]
    %v299 = vld [vmem:[#allocation6 + $0x388] sm:$0xff]
    %v300 = vld [vmem:[#allocation6 + $0x390] sm:$0xff]
    %v301 = vld [vmem:[#allocation6 + $0x398] sm:$0xff]
    %v302 = vld [vmem:[#allocation6 + $0x3a0] sm:$0xff]
    %v303 = vld [vmem:[#allocation6 + $0x3a8] sm:$0xff]
    %v304 = vld [vmem:[#allocation6 + $0x3b0] sm:$0xff]
    %v305 = vld [vmem:[#allocation6 + $0x3b8] sm:$0xff]
    %v306 = vld [vmem:[#allocation6 + $0x3c0] sm:$0xff]
    %v307 = vld [vmem:[#allocation6 + $0x3c8] sm:$0xff]
    %v308 = vld [vmem:[#allocation6 + $0x3d0] sm:$0xff]
    %v309 = vld [vmem:[#allocation6 + $0x3d8] sm:$0xff]
    %v310 = vld [vmem:[#allocation6 + $0x3e0] sm:$0xff]
    %v311 = vld [vmem:[#allocation6 + $0x3e8] sm:$0xff]
    %v312 = vld [vmem:[#allocation6 + $0x3f0] sm:$0xff]
    %v313 = vld [vmem:[#allocation6 + $0x3f8] sm:$0xff]
    %v314 = vld [vmem:[#allocation6 + $0x400] sm:$0xff]
    %v315 = vld [vmem:[#allocation6 + $0x408] sm:$0xff]
    %v316 = vld [vmem:[#allocation6 + $0x410] sm:$0xff]
    %v317 = vld [vmem:[#allocation6 + $0x418] sm:$0xff]
    %v318 = vld [vmem:[#allocation6 + $0x420] sm:$0xff]
    %v319 = vld [vmem:[#allocation6 + $0x428] sm:$0xff]
    %v320 = vld [vmem:[#allocation6 + $0x430] sm:$0xff]
    %v321 = vld [vmem:[#allocation6 + $0x438] sm:$0xff]
    %v322 = vld [vmem:[#allocation6 + $0x440] sm:$0xff]
    %v323 = vld [vmem:[#allocation6 + $0x448] sm:$0xff]
    %v324 = vld [vmem:[#allocation6 + $0x450] sm:$0xff]
    %v325 = vld [vmem:[#allocation6 + $0x458] sm:$0xff]
    %v326 = vld [vmem:[#allocation6 + $0x460] sm:$0xff]
    %v327 = vld [vmem:[#allocation6 + $0x468] sm:$0xff]
    %v328 = vld [vmem:[#allocation6 + $0x470] sm:$0xff]
    %v329 = vld [vmem:[#allocation6 + $0x478] sm:$0xff]
    %v330 = vld [vmem:[#allocation6 + $0x480] sm:$0xff]
    %v331 = vld [vmem:[#allocation6 + $0x488] sm:$0xff]
    %v332 = vld [vmem:[#allocation6 + $0x490] sm:$0xff]
    %v333 = vld [vmem:[#allocation6 + $0x498] sm:$0xff]
    %v334 = vld [vmem:[#allocation6 + $0x4a0] sm:$0xff]
    %v335 = vld [vmem:[#allocation6 + $0x4a8] sm:$0xff]
    %v336 = vld [vmem:[#allocation6 + $0x4b0] sm:$0xff]
    %v337 = vld [vmem:[#allocation6 + $0x4b8] sm:$0xff]
    %v338 = vld [vmem:[#allocation6 + $0x4c0] sm:$0xff]
    %v339 = vld [vmem:[#allocation6 + $0x4c8] sm:$0xff]
    %v340 = vld [vmem:[#allocation6 + $0x4d0] sm:$0xff]
    %v341 = vld [vmem:[#allocation6 + $0x4d8] sm:$0xff]
    %v342 = vld [vmem:[#allocation6 + $0x4e0] sm:$0xff]
    %v343 = vld [vmem:[#allocation6 + $0x4e8] sm:$0xff]
    %v344 = vld [vmem:[#allocation6 + $0x4f0] sm:$0xff]
    %v345 = vld [vmem:[#allocation6 + $0x4f8] sm:$0xff]
    %v346 = vld [vmem:[#allocation6 + $0x500] sm:$0xff]
    %v347 = vld [vmem:[#allocation6 + $0x508] sm:$0xff]
    %v348 = vld [vmem:[#allocation6 + $0x510] sm:$0xff]
    %v349 = vld [vmem:[#allocation6 + $0x518] sm:$0xff]
    %v350 = vld [vmem:[#allocation6 + $0x520] sm:$0xff]
    %v351 = vld [vmem:[#allocation6 + $0x528] sm:$0xff]
    %v352 = vld [vmem:[#allocation6 + $0x530] sm:$0xff]
    %v353 = vld [vmem:[#allocation6 + $0x538] sm:$0xff]
    %v354 = vld [vmem:[#allocation6 + $0x540] sm:$0xff]
    %v355 = vld [vmem:[#allocation6 + $0x548] sm:$0xff]
    %v356 = vld [vmem:[#allocation6 + $0x550] sm:$0xff]
    %v357 = vld [vmem:[#allocation6 + $0x558] sm:$0xff]
    %v358 = vld [vmem:[#allocation6 + $0x560] sm:$0xff]
    %v359 = vld [vmem:[#allocation6 + $0x568] sm:$0xff]
    %v360 = vld [vmem:[#allocation6 + $0x570] sm:$0xff]
    %v361 = vld [vmem:[#allocation6 + $0x578] sm:$0xff]
    %v362 = vld [vmem:[#allocation6 + $0x580] sm:$0xff]
    %v363 = vld [vmem:[#allocation6 + $0x588] sm:$0xff]
    %v364 = vld [vmem:[#allocation6 + $0x590] sm:$0xff]
    %v365 = vld [vmem:[#allocation6 + $0x598] sm:$0xff]
    %v366 = vld [vmem:[#allocation6 + $0x5a0] sm:$0xff]
    %v367 = vld [vmem:[#allocation6 + $0x5a8] sm:$0xff]
    %v368 = vld [vmem:[#allocation6 + $0x5b0] sm:$0xff]
    %v369 = vld [vmem:[#allocation6 + $0x5b8] sm:$0xff]
    %v370 = vld [vmem:[#allocation6 + $0x5c0] sm:$0xff]
    %v371 = vld [vmem:[#allocation6 + $0x5c8] sm:$0xff]
    %v372 = vld [vmem:[#allocation6 + $0x5d0] sm:$0xff]
    %v373 = vld [vmem:[#allocation6 + $0x5d8] sm:$0xff]
    %v374 = vld [vmem:[#allocation6 + $0x5e0] sm:$0xff]
    %v375 = vld [vmem:[#allocation6 + $0x5e8] sm:$0xff]
    %v376 = vld [vmem:[#allocation6 + $0x5f0] sm:$0xff]
    %v377 = vld [vmem:[#allocation6 + $0x5f8] sm:$0xff]
    %v378 = vld [vmem:[#allocation6 + $0x600] sm:$0xff]
    %v379 = vld [vmem:[#allocation6 + $0x608] sm:$0xff]
    %v380 = vld [vmem:[#allocation6 + $0x610] sm:$0xff]
    %v381 = vld [vmem:[#allocation6 + $0x618] sm:$0xff]
    %v382 = vld [vmem:[#allocation6 + $0x620] sm:$0xff]
    %v383 = vld [vmem:[#allocation6 + $0x628] sm:$0xff]
    %v384 = vld [vmem:[#allocation6 + $0x630] sm:$0xff]
    %v385 = vld [vmem:[#allocation6 + $0x638] sm:$0xff]
    %v386 = vld [vmem:[#allocation6 + $0x640] sm:$0xff]
    %v387 = vld [vmem:[#allocation6 + $0x648] sm:$0xff]
    %v388 = vld [vmem:[#allocation6 + $0x650] sm:$0xff]
    %v389 = vld [vmem:[#allocation6 + $0x658] sm:$0xff]
    %v390 = vld [vmem:[#allocation6 + $0x660] sm:$0xff]
    %v391 = vld [vmem:[#allocation6 + $0x668] sm:$0xff]
    %v392 = vld [vmem:[#allocation6 + $0x670] sm:$0xff]
    %v393 = vld [vmem:[#allocation6 + $0x678] sm:$0xff]
    %v394 = vld [vmem:[#allocation6 + $0x680] sm:$0xff]
    %v395 = vld [vmem:[#allocation6 + $0x688] sm:$0xff]
    %v396 = vld [vmem:[#allocation6 + $0x690] sm:$0xff]
    %v397 = vld [vmem:[#allocation6 + $0x698] sm:$0xff]
    %v398 = vld [vmem:[#allocation6 + $0x6a0] sm:$0xff]
    %v399 = vld [vmem:[#allocation6 + $0x6a8] sm:$0xff]
    %v400 = vld [vmem:[#allocation6 + $0x6b0] sm:$0xff]
    %v401 = vld [vmem:[#allocation6 + $0x6b8] sm:$0xff]
    %v402 = vld [vmem:[#allocation6 + $0x6c0] sm:$0xff]
    %v403 = vld [vmem:[#allocation6 + $0x6c8] sm:$0xff]
    %v404 = vld [vmem:[#allocation6 + $0x6d0] sm:$0xff]
    %v405 = vld [vmem:[#allocation6 + $0x6d8] sm:$0xff]
    %v406 = vld [vmem:[#allocation6 + $0x6e0] sm:$0xff]
    %v407 = vld [vmem:[#allocation6 + $0x6e8] sm:$0xff]
    %v408 = vld [vmem:[#allocation6 + $0x6f0] sm:$0xff]
    %v409 = vld [vmem:[#allocation6 + $0x6f8] sm:$0xff]
    %v410 = vld [vmem:[#allocation6 + $0x700] sm:$0xff]
    %v411 = vld [vmem:[#allocation6 + $0x708] sm:$0xff]
    %v412 = vld [vmem:[#allocation6 + $0x710] sm:$0xff]
    %v413 = vld [vmem:[#allocation6 + $0x718] sm:$0xff]
    %v414 = vld [vmem:[#allocation6 + $0x720] sm:$0xff]
    %v415 = vld [vmem:[#allocation6 + $0x728] sm:$0xff]
    %v416 = vld [vmem:[#allocation6 + $0x730] sm:$0xff]
    %v417 = vld [vmem:[#allocation6 + $0x738] sm:$0xff]
    %v418 = vld [vmem:[#allocation6 + $0x740] sm:$0xff]
    %v419 = vld [vmem:[#allocation6 + $0x748] sm:$0xff]
    %v420 = vld [vmem:[#allocation6 + $0x750] sm:$0xff]
    %v421 = vld [vmem:[#allocation6 + $0x758] sm:$0xff]
    %v422 = vld [vmem:[#allocation6 + $0x760] sm:$0xff]
    %v423 = vld [vmem:[#allocation6 + $0x768] sm:$0xff]
    %v424 = vld [vmem:[#allocation6 + $0x770] sm:$0xff]
    %v425 = vld [vmem:[#allocation6 + $0x778] sm:$0xff]
    %v426 = vld [vmem:[#allocation6 + $0x780] sm:$0xff]
    %v427 = vld [vmem:[#allocation6 + $0x788] sm:$0xff]
    %v428 = vld [vmem:[#allocation6 + $0x790] sm:$0xff]
    %v429 = vld [vmem:[#allocation6 + $0x798] sm:$0xff]
    %v430 = vld [vmem:[#allocation6 + $0x7a0] sm:$0xff]
    %v431 = vld [vmem:[#allocation6 + $0x7a8] sm:$0xff]
    %v432 = vld [vmem:[#allocation6 + $0x7b0] sm:$0xff]
    %v433 = vld [vmem:[#allocation6 + $0x7b8] sm:$0xff]
    %v434 = vld [vmem:[#allocation6 + $0x7c0] sm:$0xff]
    %v435 = vld [vmem:[#allocation6 + $0x7c8] sm:$0xff]
    %v436 = vld [vmem:[#allocation6 + $0x7d0] sm:$0xff]
    %v437 = vld [vmem:[#allocation6 + $0x7d8] sm:$0xff]
    %v438 = vld [vmem:[#allocation6 + $0x7e0] sm:$0xff]
    %v439 = vld [vmem:[#allocation6 + $0x7e8] sm:$0xff]
    %v440 = vld [vmem:[#allocation6 + $0x7f0] sm:$0xff]
    %v441 = vld [vmem:[#allocation6 + $0x7f8] sm:$0xff]
    %v442 = vld [vmem:[#allocation6 + $0x800] sm:$0xff]
    %v443 = vld [vmem:[#allocation6 + $0x808] sm:$0xff]
    %v444 = vld [vmem:[#allocation6 + $0x810] sm:$0xff]
    %v445 = vld [vmem:[#allocation6 + $0x818] sm:$0xff]
    %v446 = vld [vmem:[#allocation6 + $0x820] sm:$0xff]
    %v447 = vld [vmem:[#allocation6 + $0x828] sm:$0xff]
    %v448 = vld [vmem:[#allocation6 + $0x830] sm:$0xff]
    %v449 = vld [vmem:[#allocation6 + $0x838] sm:$0xff]
    %v450 = vld [vmem:[#allocation6 + $0x840] sm:$0xff]
    %v451 = vld [vmem:[#allocation6 + $0x848] sm:$0xff]
    %v452 = vld [vmem:[#allocation6 + $0x850] sm:$0xff]
    %v453 = vld [vmem:[#allocation6 + $0x858] sm:$0xff]
    %v454 = vld [vmem:[#allocation6 + $0x860] sm:$0xff]
    %v455 = vld [vmem:[#allocation6 + $0x868] sm:$0xff]
    %v456 = vld [vmem:[#allocation6 + $0x870] sm:$0xff]
    %v457 = vld [vmem:[#allocation6 + $0x878] sm:$0xff]
    %v458 = vld [vmem:[#allocation6 + $0x880] sm:$0xff]
    %v459 = vld [vmem:[#allocation6 + $0x888] sm:$0xff]
    %v460 = vld [vmem:[#allocation6 + $0x890] sm:$0xff]
    %v461 = vld [vmem:[#allocation6 + $0x898] sm:$0xff]
    %v462 = vld [vmem:[#allocation6 + $0x8a0] sm:$0xff]
    %v463 = vld [vmem:[#allocation6 + $0x8a8] sm:$0xff]
    %v464 = vld [vmem:[#allocation6 + $0x8b0] sm:$0xff]
    %v465 = vld [vmem:[#allocation6 + $0x8b8] sm:$0xff]
    %v466 = vld [vmem:[#allocation6 + $0x8c0] sm:$0xff]
    %v467 = vld [vmem:[#allocation6 + $0x8c8] sm:$0xff]
    %v468 = vld [vmem:[#allocation6 + $0x8d0] sm:$0xff]
    %v469 = vld [vmem:[#allocation6 + $0x8d8] sm:$0xff]
    %v470 = vld [vmem:[#allocation6 + $0x8e0] sm:$0xff]
    %v471 = vld [vmem:[#allocation6 + $0x8e8] sm:$0xff]
    %v472 = vld [vmem:[#allocation6 + $0x8f0] sm:$0xff]
    %v473 = vld [vmem:[#allocation6 + $0x8f8] sm:$0xff]
    %v474 = vld [vmem:[#allocation6 + $0x900] sm:$0xff]
    %v475 = vld [vmem:[#allocation6 + $0x908] sm:$0xff]
    %v476 = vld [vmem:[#allocation6 + $0x910] sm:$0xff]
    %v477 = vld [vmem:[#allocation6 + $0x918] sm:$0xff]
    %v478 = vld [vmem:[#allocation6 + $0x920] sm:$0xff]
    %v479 = vld [vmem:[#allocation6 + $0x928] sm:$0xff]
    %v480 = vld [vmem:[#allocation6 + $0x930] sm:$0xff]
    %v481 = vld [vmem:[#allocation6 + $0x938] sm:$0xff]
    %v482 = vld [vmem:[#allocation6 + $0x940] sm:$0xff]
    %v483 = vld [vmem:[#allocation6 + $0x948] sm:$0xff]
    %v484 = vld [vmem:[#allocation6 + $0x950] sm:$0xff]
    %v485 = vld [vmem:[#allocation6 + $0x958] sm:$0xff]
    %v486 = vld [vmem:[#allocation6 + $0x960] sm:$0xff]
    %v487 = vld [vmem:[#allocation6 + $0x968] sm:$0xff]
    %v488 = vld [vmem:[#allocation6 + $0x970] sm:$0xff]
    %v489 = vld [vmem:[#allocation6 + $0x978] sm:$0xff]
    %v490 = vld [vmem:[#allocation6 + $0x980] sm:$0xff]
    %v491 = vld [vmem:[#allocation6 + $0x988] sm:$0xff]
    %v492 = vld [vmem:[#allocation6 + $0x990] sm:$0xff]
    %v493 = vld [vmem:[#allocation6 + $0x998] sm:$0xff]
    %v494 = vld [vmem:[#allocation6 + $0x9a0] sm:$0xff]
    %v495 = vld [vmem:[#allocation6 + $0x9a8] sm:$0xff]
    %v496 = vld [vmem:[#allocation6 + $0x9b0] sm:$0xff]
    %v497 = vld [vmem:[#allocation6 + $0x9b8] sm:$0xff]
    %v498 = vld [vmem:[#allocation6 + $0x9c0] sm:$0xff]
    %v499 = vld [vmem:[#allocation6 + $0x9c8] sm:$0xff]
    %v500 = vld [vmem:[#allocation6 + $0x9d0] sm:$0xff]
    %v501 = vld [vmem:[#allocation6 + $0x9d8] sm:$0xff]
    %v502 = vld [vmem:[#allocation6 + $0x9e0] sm:$0xff]
    %v503 = vld [vmem:[#allocation6 + $0x9e8] sm:$0xff]
    %v504 = vld [vmem:[#allocation6 + $0x9f0] sm:$0xff]
    %v505 = vld [vmem:[#allocation6 + $0x9f8] sm:$0xff]
    %v506 = vld [vmem:[#allocation6 + $0xa00] sm:$0xff]
    %v507 = vld [vmem:[#allocation6 + $0xa08] sm:$0xff]
    %v508 = vld [vmem:[#allocation6 + $0xa10] sm:$0xff]
    %v509 = vld [vmem:[#allocation6 + $0xa18] sm:$0xff]
    %v510 = vld [vmem:[#allocation6 + $0xa20] sm:$0xff]
    %v511 = vld [vmem:[#allocation6 + $0xa28] sm:$0xff]
    %v512 = vld [vmem:[#allocation6 + $0xa30] sm:$0xff]
    %v513 = vld [vmem:[#allocation6 + $0xa38] sm:$0xff]
    %v514 = vld [vmem:[#allocation6 + $0xa40] sm:$0xff]
    %v515 = vld [vmem:[#allocation6 + $0xa48] sm:$0xff]
    %v516 = vld [vmem:[#allocation6 + $0xa50] sm:$0xff]
    %v517 = vld [vmem:[#allocation6 + $0xa58] sm:$0xff]
    %v518 = vld [vmem:[#allocation6 + $0xa60] sm:$0xff]
    %v519 = vld [vmem:[#allocation6 + $0xa68] sm:$0xff]
    %v520 = vld [vmem:[#allocation6 + $0xa70] sm:$0xff]
    %v521 = vld [vmem:[#allocation6 + $0xa78] sm:$0xff]
    %v522 = vld [vmem:[#allocation6 + $0xa80] sm:$0xff]
    %v523 = vld [vmem:[#allocation6 + $0xa88] sm:$0xff]
    %v524 = vld [vmem:[#allocation6 + $0xa90] sm:$0xff]
    %v525 = vld [vmem:[#allocation6 + $0xa98] sm:$0xff]
    %v526 = vld [vmem:[#allocation6 + $0xaa0] sm:$0xff]
    %v527 = vld [vmem:[#allocation6 + $0xaa8] sm:$0xff]
    %v528 = vld [vmem:[#allocation6 + $0xab0] sm:$0xff]
    %v529 = vld [vmem:[#allocation6 + $0xab8] sm:$0xff]
    %v530 = vld [vmem:[#allocation6 + $0xac0] sm:$0xff]
    %v531 = vld [vmem:[#allocation6 + $0xac8] sm:$0xff]
    %v532 = vld [vmem:[#allocation6 + $0xad0] sm:$0xff]
    %v533 = vld [vmem:[#allocation6 + $0xad8] sm:$0xff]
    %v534 = vld [vmem:[#allocation6 + $0xae0] sm:$0xff]
    %v535 = vld [vmem:[#allocation6 + $0xae8] sm:$0xff]
    %v536 = vld [vmem:[#allocation6 + $0xaf0] sm:$0xff]
    %v537 = vld [vmem:[#allocation6 + $0xaf8] sm:$0xff]
    %v538 = vld [vmem:[#allocation6 + $0xb00] sm:$0xff]
    %v539 = vld [vmem:[#allocation6 + $0xb08] sm:$0xff]
    %v540 = vld [vmem:[#allocation6 + $0xb10] sm:$0xff]
    %v541 = vld [vmem:[#allocation6 + $0xb18] sm:$0xff]
    %v542 = vld [vmem:[#allocation6 + $0xb20] sm:$0xff]
    %v543 = vld [vmem:[#allocation6 + $0xb28] sm:$0xff]
    %v544 = vld [vmem:[#allocation6 + $0xb30] sm:$0xff]
    %v545 = vld [vmem:[#allocation6 + $0xb38] sm:$0xff]
    %v546 = vld [vmem:[#allocation6 + $0xb40] sm:$0xff]
    %v547 = vld [vmem:[#allocation6 + $0xb48] sm:$0xff]
    %v548 = vld [vmem:[#allocation6 + $0xb50] sm:$0xff]
    %v549 = vld [vmem:[#allocation6 + $0xb58] sm:$0xff]
    %v550 = vld [vmem:[#allocation6 + $0xb60] sm:$0xff]
    %v551 = vld [vmem:[#allocation6 + $0xb68] sm:$0xff]
    %v552 = vld [vmem:[#allocation6 + $0xb70] sm:$0xff]
    %v553 = vld [vmem:[#allocation6 + $0xb78] sm:$0xff]
    %v554 = vld [vmem:[#allocation6 + $0xb80] sm:$0xff]
    %v555 = vld [vmem:[#allocation6 + $0xb88] sm:$0xff]
    %v556 = vld [vmem:[#allocation6 + $0xb90] sm:$0xff]
    %v557 = vld [vmem:[#allocation6 + $0xb98] sm:$0xff]
    %v558 = vld [vmem:[#allocation6 + $0xba0] sm:$0xff]
    %v559 = vld [vmem:[#allocation6 + $0xba8] sm:$0xff]
    %v560 = vld [vmem:[#allocation6 + $0xbb0] sm:$0xff]
    %v561 = vld [vmem:[#allocation6 + $0xbb8] sm:$0xff]
    %v562 = vld [vmem:[#allocation6 + $0xbc0] sm:$0xff]
    %v563 = vld [vmem:[#allocation6 + $0xbc8] sm:$0xff]
    %v564 = vld [vmem:[#allocation6 + $0xbd0] sm:$0xff]
    %v565 = vld [vmem:[#allocation6 + $0xbd8] sm:$0xff]
    %v566 = vld [vmem:[#allocation6 + $0xbe0] sm:$0xff]
    %v567 = vld [vmem:[#allocation6 + $0xbe8] sm:$0xff]
    %v568 = vld [vmem:[#allocation6 + $0xbf0] sm:$0xff]
    %v569 = vld [vmem:[#allocation6 + $0xbf8] sm:$0xff]
    %v570 = vld [vmem:[#allocation8] sm:$0x3f]
    %v572 = vperm.slane %v570, 0
    %v573 = vperm.slane %v570, 1
    %v574 = vperm.slane %v570, 2
    %v575 = vperm.slane %v570, 3
    %v576 = vperm.slane %v570, 4
    %v577 = vperm.slane %v570, 5
    %v588 = vunpack.c.l.b16 %v182
    %v589 = vunpack.c.h.b16 %v182
    %v590 = vunpack.c.l.b16 %v183
    %v591 = vunpack.c.h.b16 %v183
    %v592 = vunpack.c.l.b16 %v184
    %v593 = vunpack.c.h.b16 %v184
    %v594 = vunpack.c.l.b16 %v185
    %v595 = vunpack.c.h.b16 %v185
    %v596 = vpack.c.b16 %v588, %v588
    %v597 = vpack.c.b16 %v589, %v589
    %v598 = vpack.c.b16 %v590, %v590
    %v599 = vpack.c.b16 %v591, %v591
    %v600 = vpack.c.b16 %v592, %v592
    %v601 = vpack.c.b16 %v593, %v593
    %v602 = vpack.c.b16 %v594, %v594
    %v603 = vpack.c.b16 %v595, %v595
    %v996 = vunpack.c.l.b16 %v186
    %v997 = vunpack.c.h.b16 %v186
    %v998 = vunpack.c.l.b16 %v187
    %v999 = vunpack.c.h.b16 %v187
    %v1000 = vunpack.c.l.b16 %v188
    %v1001 = vunpack.c.h.b16 %v188
    %v1002 = vunpack.c.l.b16 %v189
    %v1003 = vunpack.c.h.b16 %v189
    %v1004 = vunpack.c.l.b16 %v190
    %v1005 = vunpack.c.h.b16 %v190
    %v1006 = vunpack.c.l.b16 %v191
    %v1007 = vunpack.c.h.b16 %v191
    %v1008 = vunpack.c.l.b16 %v192
    %v1009 = vunpack.c.h.b16 %v192
    %v1010 = vunpack.c.l.b16 %v193
    %v1011 = vunpack.c.h.b16 %v193
    %v1012 = vunpack.c.l.b16 %v194
    %v1013 = vunpack.c.h.b16 %v194
    %v1014 = vunpack.c.l.b16 %v195
    %v1015 = vunpack.c.h.b16 %v195
    %v1016 = vunpack.c.l.b16 %v196
    %v1017 = vunpack.c.h.b16 %v196
    %v1018 = vunpack.c.l.b16 %v197
    %v1019 = vunpack.c.h.b16 %v197
    %v1020 = vunpack.c.l.b16 %v198
    %v1021 = vunpack.c.h.b16 %v198
    %v1022 = vunpack.c.l.b16 %v199
    %v1023 = vunpack.c.h.b16 %v199
    %v1024 = vunpack.c.l.b16 %v200
    %v1025 = vunpack.c.h.b16 %v200
    %v1026 = vunpack.c.l.b16 %v201
    %v1027 = vunpack.c.h.b16 %v201
    %v1028 = vunpack.c.l.b16 %v202
    %v1029 = vunpack.c.h.b16 %v202
    %v1030 = vunpack.c.l.b16 %v203
    %v1031 = vunpack.c.h.b16 %v203
    %v1032 = vunpack.c.l.b16 %v204
    %v1033 = vunpack.c.h.b16 %v204
    %v1034 = vunpack.c.l.b16 %v205
    %v1035 = vunpack.c.h.b16 %v205
    %v1036 = vunpack.c.l.b16 %v206
    %v1037 = vunpack.c.h.b16 %v206
    %v1038 = vunpack.c.l.b16 %v207
    %v1039 = vunpack.c.h.b16 %v207
    %v1040 = vunpack.c.l.b16 %v208
    %v1041 = vunpack.c.h.b16 %v208
    %v1042 = vunpack.c.l.b16 %v209
    %v1043 = vunpack.c.h.b16 %v209
    %v1044 = vunpack.c.l.b16 %v210
    %v1045 = vunpack.c.h.b16 %v210
    %v1046 = vunpack.c.l.b16 %v211
    %v1047 = vunpack.c.h.b16 %v211
    %v1048 = vunpack.c.l.b16 %v212
    %v1049 = vunpack.c.h.b16 %v212
    %v1050 = vunpack.c.l.b16 %v213
    %v1051 = vunpack.c.h.b16 %v213
    %v1052 = vunpack.c.l.b16 %v214
    %v1053 = vunpack.c.h.b16 %v214
    %v1054 = vunpack.c.l.b16 %v215
    %v1055 = vunpack.c.h.b16 %v215
    %v1056 = vunpack.c.l.b16 %v216
    %v1057 = vunpack.c.h.b16 %v216
    %v1058 = vunpack.c.l.b16 %v217
    %v1059 = vunpack.c.h.b16 %v217
    %v1060 = vunpack.c.l.b16 %v218
    %v1061 = vunpack.c.h.b16 %v218
    %v1062 = vunpack.c.l.b16 %v219
    %v1063 = vunpack.c.h.b16 %v219
    %v1064 = vunpack.c.l.b16 %v220
    %v1065 = vunpack.c.h.b16 %v220
    %v1066 = vunpack.c.l.b16 %v221
    %v1067 = vunpack.c.h.b16 %v221
    %v1068 = vunpack.c.l.b16 %v222
    %v1069 = vunpack.c.h.b16 %v222
    %v1070 = vunpack.c.l.b16 %v223
    %v1071 = vunpack.c.h.b16 %v223
    %v1072 = vunpack.c.l.b16 %v224
    %v1073 = vunpack.c.h.b16 %v224
    %v1074 = vunpack.c.l.b16 %v225
    %v1075 = vunpack.c.h.b16 %v225
    %v1076 = vunpack.c.l.b16 %v226
    %v1077 = vunpack.c.h.b16 %v226
    %v1078 = vunpack.c.l.b16 %v227
    %v1079 = vunpack.c.h.b16 %v227
    %v1080 = vunpack.c.l.b16 %v228
    %v1081 = vunpack.c.h.b16 %v228
    %v1082 = vunpack.c.l.b16 %v229
    %v1083 = vunpack.c.h.b16 %v229
    %v1084 = vunpack.c.l.b16 %v230
    %v1085 = vunpack.c.h.b16 %v230
    %v1086 = vunpack.c.l.b16 %v231
    %v1087 = vunpack.c.h.b16 %v231
    %v1088 = vunpack.c.l.b16 %v232
    %v1089 = vunpack.c.h.b16 %v232
    %v1090 = vunpack.c.l.b16 %v233
    %v1091 = vunpack.c.h.b16 %v233
    %v1092 = vunpack.c.l.b16 %v234
    %v1093 = vunpack.c.h.b16 %v234
    %v1094 = vunpack.c.l.b16 %v235
    %v1095 = vunpack.c.h.b16 %v235
    %v1096 = vunpack.c.l.b16 %v236
    %v1097 = vunpack.c.h.b16 %v236
    %v1098 = vunpack.c.l.b16 %v237
    %v1099 = vunpack.c.h.b16 %v237
    %v1100 = vunpack.c.l.b16 %v238
    %v1101 = vunpack.c.h.b16 %v238
    %v1102 = vunpack.c.l.b16 %v239
    %v1103 = vunpack.c.h.b16 %v239
    %v1104 = vunpack.c.l.b16 %v240
    %v1105 = vunpack.c.h.b16 %v240
    %v1106 = vunpack.c.l.b16 %v241
    %v1107 = vunpack.c.h.b16 %v241
    %v1108 = vunpack.c.l.b16 %v242
    %v1109 = vunpack.c.h.b16 %v242
    %v1110 = vunpack.c.l.b16 %v243
    %v1111 = vunpack.c.h.b16 %v243
    %v1112 = vunpack.c.l.b16 %v244
    %v1113 = vunpack.c.h.b16 %v244
    %v1114 = vunpack.c.l.b16 %v245
    %v1115 = vunpack.c.h.b16 %v245
    %v1116 = vunpack.c.l.b16 %v246
    %v1117 = vunpack.c.h.b16 %v246
    %v1118 = vunpack.c.l.b16 %v247
    %v1119 = vunpack.c.h.b16 %v247
    %v1120 = vunpack.c.l.b16 %v248
    %v1121 = vunpack.c.h.b16 %v248
    %v1122 = vunpack.c.l.b16 %v249
    %v1123 = vunpack.c.h.b16 %v249
    %v1124 = vunpack.c.l.b16 %v250
    %v1125 = vunpack.c.h.b16 %v250
    %v1126 = vunpack.c.l.b16 %v251
    %v1127 = vunpack.c.h.b16 %v251
    %v1128 = vunpack.c.l.b16 %v252
    %v1129 = vunpack.c.h.b16 %v252
    %v1130 = vunpack.c.l.b16 %v253
    %v1131 = vunpack.c.h.b16 %v253
    %v1132 = vunpack.c.l.b16 %v254
    %v1133 = vunpack.c.h.b16 %v254
    %v1134 = vunpack.c.l.b16 %v255
    %v1135 = vunpack.c.h.b16 %v255
    %v1136 = vunpack.c.l.b16 %v256
    %v1137 = vunpack.c.h.b16 %v256
    %v1138 = vunpack.c.l.b16 %v257
    %v1139 = vunpack.c.h.b16 %v257
    %v1140 = vunpack.c.l.b16 %v258
    %v1141 = vunpack.c.h.b16 %v258
    %v1142 = vunpack.c.l.b16 %v259
    %v1143 = vunpack.c.h.b16 %v259
    %v1144 = vunpack.c.l.b16 %v260
    %v1145 = vunpack.c.h.b16 %v260
    %v1146 = vunpack.c.l.b16 %v261
    %v1147 = vunpack.c.h.b16 %v261
    %v1148 = vunpack.c.l.b16 %v262
    %v1149 = vunpack.c.h.b16 %v262
    %v1150 = vunpack.c.l.b16 %v263
    %v1151 = vunpack.c.h.b16 %v263
    %v1152 = vunpack.c.l.b16 %v264
    %v1153 = vunpack.c.h.b16 %v264
    %v1154 = vunpack.c.l.b16 %v265
    %v1155 = vunpack.c.h.b16 %v265
    %v1156 = vunpack.c.l.b16 %v266
    %v1157 = vunpack.c.h.b16 %v266
    %v1158 = vunpack.c.l.b16 %v267
    %v1159 = vunpack.c.h.b16 %v267
    %v1160 = vunpack.c.l.b16 %v268
    %v1161 = vunpack.c.h.b16 %v268
    %v1162 = vunpack.c.l.b16 %v269
    %v1163 = vunpack.c.h.b16 %v269
    %v1164 = vunpack.c.l.b16 %v270
    %v1165 = vunpack.c.h.b16 %v270
    %v1166 = vunpack.c.l.b16 %v271
    %v1167 = vunpack.c.h.b16 %v271
    %v1168 = vunpack.c.l.b16 %v272
    %v1169 = vunpack.c.h.b16 %v272
    %v1170 = vunpack.c.l.b16 %v273
    %v1171 = vunpack.c.h.b16 %v273
    %v1172 = vunpack.c.l.b16 %v274
    %v1173 = vunpack.c.h.b16 %v274
    %v1174 = vunpack.c.l.b16 %v275
    %v1175 = vunpack.c.h.b16 %v275
    %v1176 = vunpack.c.l.b16 %v276
    %v1177 = vunpack.c.h.b16 %v276
    %v1178 = vunpack.c.l.b16 %v277
    %v1179 = vunpack.c.h.b16 %v277
    %v1180 = vunpack.c.l.b16 %v278
    %v1181 = vunpack.c.h.b16 %v278
    %v1182 = vunpack.c.l.b16 %v279
    %v1183 = vunpack.c.h.b16 %v279
    %v1184 = vunpack.c.l.b16 %v280
    %v1185 = vunpack.c.h.b16 %v280
    %v1186 = vunpack.c.l.b16 %v281
    %v1187 = vunpack.c.h.b16 %v281
    %v1188 = vunpack.c.l.b16 %v282
    %v1189 = vunpack.c.h.b16 %v282
    %v1190 = vunpack.c.l.b16 %v283
    %v1191 = vunpack.c.h.b16 %v283
    %v1192 = vunpack.c.l.b16 %v284
    %v1193 = vunpack.c.h.b16 %v284
    %v1194 = vunpack.c.l.b16 %v285
    %v1195 = vunpack.c.h.b16 %v285
    %v1196 = vunpack.c.l.b16 %v286
    %v1197 = vunpack.c.h.b16 %v286
    %v1198 = vunpack.c.l.b16 %v287
    %v1199 = vunpack.c.h.b16 %v287
    %v1200 = vunpack.c.l.b16 %v288
    %v1201 = vunpack.c.h.b16 %v288
    %v1202 = vunpack.c.l.b16 %v289
    %v1203 = vunpack.c.h.b16 %v289
    %v1204 = vunpack.c.l.b16 %v290
    %v1205 = vunpack.c.h.b16 %v290
    %v1206 = vunpack.c.l.b16 %v291
    %v1207 = vunpack.c.h.b16 %v291
    %v1208 = vunpack.c.l.b16 %v292
    %v1209 = vunpack.c.h.b16 %v292
    %v1210 = vunpack.c.l.b16 %v293
    %v1211 = vunpack.c.h.b16 %v293
    %v1212 = vunpack.c.l.b16 %v294
    %v1213 = vunpack.c.h.b16 %v294
    %v1214 = vunpack.c.l.b16 %v295
    %v1215 = vunpack.c.h.b16 %v295
    %v1216 = vunpack.c.l.b16 %v296
    %v1217 = vunpack.c.h.b16 %v296
    %v1218 = vunpack.c.l.b16 %v297
    %v1219 = vunpack.c.h.b16 %v297
    %v1220 = vunpack.c.l.b16 %v298
    %v1221 = vunpack.c.h.b16 %v298
    %v1222 = vunpack.c.l.b16 %v299
    %v1223 = vunpack.c.h.b16 %v299
    %v1224 = vunpack.c.l.b16 %v300
    %v1225 = vunpack.c.h.b16 %v300
    %v1226 = vunpack.c.l.b16 %v301
    %v1227 = vunpack.c.h.b16 %v301
    %v1228 = vunpack.c.l.b16 %v302
    %v1229 = vunpack.c.h.b16 %v302
    %v1230 = vunpack.c.l.b16 %v303
    %v1231 = vunpack.c.h.b16 %v303
    %v1232 = vunpack.c.l.b16 %v304
    %v1233 = vunpack.c.h.b16 %v304
    %v1234 = vunpack.c.l.b16 %v305
    %v1235 = vunpack.c.h.b16 %v305
    %v1236 = vunpack.c.l.b16 %v306
    %v1237 = vunpack.c.h.b16 %v306
    %v1238 = vunpack.c.l.b16 %v307
    %v1239 = vunpack.c.h.b16 %v307
    %v1240 = vunpack.c.l.b16 %v308
    %v1241 = vunpack.c.h.b16 %v308
    %v1242 = vunpack.c.l.b16 %v309
    %v1243 = vunpack.c.h.b16 %v309
    %v1244 = vunpack.c.l.b16 %v310
    %v1245 = vunpack.c.h.b16 %v310
    %v1246 = vunpack.c.l.b16 %v311
    %v1247 = vunpack.c.h.b16 %v311
    %v1248 = vunpack.c.l.b16 %v312
    %v1249 = vunpack.c.h.b16 %v312
    %v1250 = vunpack.c.l.b16 %v313
    %v1251 = vunpack.c.h.b16 %v313
    %v1252 = vunpack.c.l.b16 %v314
    %v1253 = vunpack.c.h.b16 %v314
    %v1254 = vunpack.c.l.b16 %v315
    %v1255 = vunpack.c.h.b16 %v315
    %v1256 = vunpack.c.l.b16 %v316
    %v1257 = vunpack.c.h.b16 %v316
    %v1258 = vunpack.c.l.b16 %v317
    %v1259 = vunpack.c.h.b16 %v317
    %v1260 = vunpack.c.l.b16 %v318
    %v1261 = vunpack.c.h.b16 %v318
    %v1262 = vunpack.c.l.b16 %v319
    %v1263 = vunpack.c.h.b16 %v319
    %v1264 = vunpack.c.l.b16 %v320
    %v1265 = vunpack.c.h.b16 %v320
    %v1266 = vunpack.c.l.b16 %v321
    %v1267 = vunpack.c.h.b16 %v321
    %v1268 = vunpack.c.l.b16 %v322
    %v1269 = vunpack.c.h.b16 %v322
    %v1270 = vunpack.c.l.b16 %v323
    %v1271 = vunpack.c.h.b16 %v323
    %v1272 = vunpack.c.l.b16 %v324
    %v1273 = vunpack.c.h.b16 %v324
    %v1274 = vunpack.c.l.b16 %v325
    %v1275 = vunpack.c.h.b16 %v325
    %v1276 = vunpack.c.l.b16 %v326
    %v1277 = vunpack.c.h.b16 %v326
    %v1278 = vunpack.c.l.b16 %v327
    %v1279 = vunpack.c.h.b16 %v327
    %v1280 = vunpack.c.l.b16 %v328
    %v1281 = vunpack.c.h.b16 %v328
    %v1282 = vunpack.c.l.b16 %v329
    %v1283 = vunpack.c.h.b16 %v329
    %v1284 = vunpack.c.l.b16 %v330
    %v1285 = vunpack.c.h.b16 %v330
    %v1286 = vunpack.c.l.b16 %v331
    %v1287 = vunpack.c.h.b16 %v331
    %v1288 = vunpack.c.l.b16 %v332
    %v1289 = vunpack.c.h.b16 %v332
    %v1290 = vunpack.c.l.b16 %v333
    %v1291 = vunpack.c.h.b16 %v333
    %v1292 = vunpack.c.l.b16 %v334
    %v1293 = vunpack.c.h.b16 %v334
    %v1294 = vunpack.c.l.b16 %v335
    %v1295 = vunpack.c.h.b16 %v335
    %v1296 = vunpack.c.l.b16 %v336
    %v1297 = vunpack.c.h.b16 %v336
    %v1298 = vunpack.c.l.b16 %v337
    %v1299 = vunpack.c.h.b16 %v337
    %v1300 = vunpack.c.l.b16 %v338
    %v1301 = vunpack.c.h.b16 %v338
    %v1302 = vunpack.c.l.b16 %v339
    %v1303 = vunpack.c.h.b16 %v339
    %v1304 = vunpack.c.l.b16 %v340
    %v1305 = vunpack.c.h.b16 %v340
    %v1306 = vunpack.c.l.b16 %v341
    %v1307 = vunpack.c.h.b16 %v341
    %v1308 = vunpack.c.l.b16 %v342
    %v1309 = vunpack.c.h.b16 %v342
    %v1310 = vunpack.c.l.b16 %v343
    %v1311 = vunpack.c.h.b16 %v343
    %v1312 = vunpack.c.l.b16 %v344
    %v1313 = vunpack.c.h.b16 %v344
    %v1314 = vunpack.c.l.b16 %v345
    %v1315 = vunpack.c.h.b16 %v345
    %v1316 = vunpack.c.l.b16 %v346
    %v1317 = vunpack.c.h.b16 %v346
    %v1318 = vunpack.c.l.b16 %v347
    %v1319 = vunpack.c.h.b16 %v347
    %v1320 = vunpack.c.l.b16 %v348
    %v1321 = vunpack.c.h.b16 %v348
    %v1322 = vunpack.c.l.b16 %v349
    %v1323 = vunpack.c.h.b16 %v349
    %v1324 = vunpack.c.l.b16 %v350
    %v1325 = vunpack.c.h.b16 %v350
    %v1326 = vunpack.c.l.b16 %v351
    %v1327 = vunpack.c.h.b16 %v351
    %v1328 = vunpack.c.l.b16 %v352
    %v1329 = vunpack.c.h.b16 %v352
    %v1330 = vunpack.c.l.b16 %v353
    %v1331 = vunpack.c.h.b16 %v353
    %v1332 = vunpack.c.l.b16 %v354
    %v1333 = vunpack.c.h.b16 %v354
    %v1334 = vunpack.c.l.b16 %v355
    %v1335 = vunpack.c.h.b16 %v355
    %v1336 = vunpack.c.l.b16 %v356
    %v1337 = vunpack.c.h.b16 %v356
    %v1338 = vunpack.c.l.b16 %v357
    %v1339 = vunpack.c.h.b16 %v357
    %v1340 = vunpack.c.l.b16 %v358
    %v1341 = vunpack.c.h.b16 %v358
    %v1342 = vunpack.c.l.b16 %v359
    %v1343 = vunpack.c.h.b16 %v359
    %v1344 = vunpack.c.l.b16 %v360
    %v1345 = vunpack.c.h.b16 %v360
    %v1346 = vunpack.c.l.b16 %v361
    %v1347 = vunpack.c.h.b16 %v361
    %v1348 = vunpack.c.l.b16 %v362
    %v1349 = vunpack.c.h.b16 %v362
    %v1350 = vunpack.c.l.b16 %v363
    %v1351 = vunpack.c.h.b16 %v363
    %v1352 = vunpack.c.l.b16 %v364
    %v1353 = vunpack.c.h.b16 %v364
    %v1354 = vunpack.c.l.b16 %v365
    %v1355 = vunpack.c.h.b16 %v365
    %v1356 = vunpack.c.l.b16 %v366
    %v1357 = vunpack.c.h.b16 %v366
    %v1358 = vunpack.c.l.b16 %v367
    %v1359 = vunpack.c.h.b16 %v367
    %v1360 = vunpack.c.l.b16 %v368
    %v1361 = vunpack.c.h.b16 %v368
    %v1362 = vunpack.c.l.b16 %v369
    %v1363 = vunpack.c.h.b16 %v369
    %v1364 = vunpack.c.l.b16 %v370
    %v1365 = vunpack.c.h.b16 %v370
    %v1366 = vunpack.c.l.b16 %v371
    %v1367 = vunpack.c.h.b16 %v371
    %v1368 = vunpack.c.l.b16 %v372
    %v1369 = vunpack.c.h.b16 %v372
    %v1370 = vunpack.c.l.b16 %v373
    %v1371 = vunpack.c.h.b16 %v373
    %v1372 = vunpack.c.l.b16 %v374
    %v1373 = vunpack.c.h.b16 %v374
    %v1374 = vunpack.c.l.b16 %v375
    %v1375 = vunpack.c.h.b16 %v375
    %v1376 = vunpack.c.l.b16 %v376
    %v1377 = vunpack.c.h.b16 %v376
    %v1378 = vunpack.c.l.b16 %v377
    %v1379 = vunpack.c.h.b16 %v377
    %v1380 = vunpack.c.l.b16 %v378
    %v1381 = vunpack.c.h.b16 %v378
    %v1382 = vunpack.c.l.b16 %v379
    %v1383 = vunpack.c.h.b16 %v379
    %v1384 = vunpack.c.l.b16 %v380
    %v1385 = vunpack.c.h.b16 %v380
    %v1386 = vunpack.c.l.b16 %v381
    %v1387 = vunpack.c.h.b16 %v381
    %v1388 = vunpack.c.l.b16 %v382
    %v1389 = vunpack.c.h.b16 %v382
    %v1390 = vunpack.c.l.b16 %v383
    %v1391 = vunpack.c.h.b16 %v383
    %v1392 = vunpack.c.l.b16 %v384
    %v1393 = vunpack.c.h.b16 %v384
    %v1394 = vunpack.c.l.b16 %v385
    %v1395 = vunpack.c.h.b16 %v385
    %v1396 = vunpack.c.l.b16 %v386
    %v1397 = vunpack.c.h.b16 %v386
    %v1398 = vunpack.c.l.b16 %v387
    %v1399 = vunpack.c.h.b16 %v387
    %v1400 = vunpack.c.l.b16 %v388
    %v1401 = vunpack.c.h.b16 %v388
    %v1402 = vunpack.c.l.b16 %v389
    %v1403 = vunpack.c.h.b16 %v389
    %v1404 = vunpack.c.l.b16 %v390
    %v1405 = vunpack.c.h.b16 %v390
    %v1406 = vunpack.c.l.b16 %v391
    %v1407 = vunpack.c.h.b16 %v391
    %v1408 = vunpack.c.l.b16 %v392
    %v1409 = vunpack.c.h.b16 %v392
    %v1410 = vunpack.c.l.b16 %v393
    %v1411 = vunpack.c.h.b16 %v393
    %v1412 = vunpack.c.l.b16 %v394
    %v1413 = vunpack.c.h.b16 %v394
    %v1414 = vunpack.c.l.b16 %v395
    %v1415 = vunpack.c.h.b16 %v395
    %v1416 = vunpack.c.l.b16 %v396
    %v1417 = vunpack.c.h.b16 %v396
    %v1418 = vunpack.c.l.b16 %v397
    %v1419 = vunpack.c.h.b16 %v397
    %v1420 = vunpack.c.l.b16 %v398
    %v1421 = vunpack.c.h.b16 %v398
    %v1422 = vunpack.c.l.b16 %v399
    %v1423 = vunpack.c.h.b16 %v399
    %v1424 = vunpack.c.l.b16 %v400
    %v1425 = vunpack.c.h.b16 %v400
    %v1426 = vunpack.c.l.b16 %v401
    %v1427 = vunpack.c.h.b16 %v401
    %v1428 = vunpack.c.l.b16 %v402
    %v1429 = vunpack.c.h.b16 %v402
    %v1430 = vunpack.c.l.b16 %v403
    %v1431 = vunpack.c.h.b16 %v403
    %v1432 = vunpack.c.l.b16 %v404
    %v1433 = vunpack.c.h.b16 %v404
    %v1434 = vunpack.c.l.b16 %v405
    %v1435 = vunpack.c.h.b16 %v405
    %v1436 = vunpack.c.l.b16 %v406
    %v1437 = vunpack.c.h.b16 %v406
    %v1438 = vunpack.c.l.b16 %v407
    %v1439 = vunpack.c.h.b16 %v407
    %v1440 = vunpack.c.l.b16 %v408
    %v1441 = vunpack.c.h.b16 %v408
    %v1442 = vunpack.c.l.b16 %v409
    %v1443 = vunpack.c.h.b16 %v409
    %v1444 = vunpack.c.l.b16 %v410
    %v1445 = vunpack.c.h.b16 %v410
    %v1446 = vunpack.c.l.b16 %v411
    %v1447 = vunpack.c.h.b16 %v411
    %v1448 = vunpack.c.l.b16 %v412
    %v1449 = vunpack.c.h.b16 %v412
    %v1450 = vunpack.c.l.b16 %v413
    %v1451 = vunpack.c.h.b16 %v413
    %v1452 = vunpack.c.l.b16 %v414
    %v1453 = vunpack.c.h.b16 %v414
    %v1454 = vunpack.c.l.b16 %v415
    %v1455 = vunpack.c.h.b16 %v415
    %v1456 = vunpack.c.l.b16 %v416
    %v1457 = vunpack.c.h.b16 %v416
    %v1458 = vunpack.c.l.b16 %v417
    %v1459 = vunpack.c.h.b16 %v417
    %v1460 = vunpack.c.l.b16 %v418
    %v1461 = vunpack.c.h.b16 %v418
    %v1462 = vunpack.c.l.b16 %v419
    %v1463 = vunpack.c.h.b16 %v419
    %v1464 = vunpack.c.l.b16 %v420
    %v1465 = vunpack.c.h.b16 %v420
    %v1466 = vunpack.c.l.b16 %v421
    %v1467 = vunpack.c.h.b16 %v421
    %v1468 = vunpack.c.l.b16 %v422
    %v1469 = vunpack.c.h.b16 %v422
    %v1470 = vunpack.c.l.b16 %v423
    %v1471 = vunpack.c.h.b16 %v423
    %v1472 = vunpack.c.l.b16 %v424
    %v1473 = vunpack.c.h.b16 %v424
    %v1474 = vunpack.c.l.b16 %v425
    %v1475 = vunpack.c.h.b16 %v425
    %v1476 = vunpack.c.l.b16 %v426
    %v1477 = vunpack.c.h.b16 %v426
    %v1478 = vunpack.c.l.b16 %v427
    %v1479 = vunpack.c.h.b16 %v427
    %v1480 = vunpack.c.l.b16 %v428
    %v1481 = vunpack.c.h.b16 %v428
    %v1482 = vunpack.c.l.b16 %v429
    %v1483 = vunpack.c.h.b16 %v429
    %v1484 = vunpack.c.l.b16 %v430
    %v1485 = vunpack.c.h.b16 %v430
    %v1486 = vunpack.c.l.b16 %v431
    %v1487 = vunpack.c.h.b16 %v431
    %v1488 = vunpack.c.l.b16 %v432
    %v1489 = vunpack.c.h.b16 %v432
    %v1490 = vunpack.c.l.b16 %v433
    %v1491 = vunpack.c.h.b16 %v433
    %v1492 = vunpack.c.l.b16 %v434
    %v1493 = vunpack.c.h.b16 %v434
    %v1494 = vunpack.c.l.b16 %v435
    %v1495 = vunpack.c.h.b16 %v435
    %v1496 = vunpack.c.l.b16 %v436
    %v1497 = vunpack.c.h.b16 %v436
    %v1498 = vunpack.c.l.b16 %v437
    %v1499 = vunpack.c.h.b16 %v437
    %v1500 = vunpack.c.l.b16 %v438
    %v1501 = vunpack.c.h.b16 %v438
    %v1502 = vunpack.c.l.b16 %v439
    %v1503 = vunpack.c.h.b16 %v439
    %v1504 = vunpack.c.l.b16 %v440
    %v1505 = vunpack.c.h.b16 %v440
    %v1506 = vunpack.c.l.b16 %v441
    %v1507 = vunpack.c.h.b16 %v441
    %v1508 = vunpack.c.l.b16 %v442
    %v1509 = vunpack.c.h.b16 %v442
    %v1510 = vunpack.c.l.b16 %v443
    %v1511 = vunpack.c.h.b16 %v443
    %v1512 = vunpack.c.l.b16 %v444
    %v1513 = vunpack.c.h.b16 %v444
    %v1514 = vunpack.c.l.b16 %v445
    %v1515 = vunpack.c.h.b16 %v445
    %v1516 = vunpack.c.l.b16 %v446
    %v1517 = vunpack.c.h.b16 %v446
    %v1518 = vunpack.c.l.b16 %v447
    %v1519 = vunpack.c.h.b16 %v447
    %v1520 = vunpack.c.l.b16 %v448
    %v1521 = vunpack.c.h.b16 %v448
    %v1522 = vunpack.c.l.b16 %v449
    %v1523 = vunpack.c.h.b16 %v449
    %v1524 = vunpack.c.l.b16 %v450
    %v1525 = vunpack.c.h.b16 %v450
    %v1526 = vunpack.c.l.b16 %v451
    %v1527 = vunpack.c.h.b16 %v451
    %v1528 = vunpack.c.l.b16 %v452
    %v1529 = vunpack.c.h.b16 %v452
    %v1530 = vunpack.c.l.b16 %v453
    %v1531 = vunpack.c.h.b16 %v453
    %v1532 = vunpack.c.l.b16 %v454
    %v1533 = vunpack.c.h.b16 %v454
    %v1534 = vunpack.c.l.b16 %v455
    %v1535 = vunpack.c.h.b16 %v455
    %v1536 = vunpack.c.l.b16 %v456
    %v1537 = vunpack.c.h.b16 %v456
    %v1538 = vunpack.c.l.b16 %v457
    %v1539 = vunpack.c.h.b16 %v457
    %v1540 = vunpack.c.l.b16 %v458
    %v1541 = vunpack.c.h.b16 %v458
    %v1542 = vunpack.c.l.b16 %v459
    %v1543 = vunpack.c.h.b16 %v459
    %v1544 = vunpack.c.l.b16 %v460
    %v1545 = vunpack.c.h.b16 %v460
    %v1546 = vunpack.c.l.b16 %v461
    %v1547 = vunpack.c.h.b16 %v461
    %v1548 = vunpack.c.l.b16 %v462
    %v1549 = vunpack.c.h.b16 %v462
    %v1550 = vunpack.c.l.b16 %v463
    %v1551 = vunpack.c.h.b16 %v463
    %v1552 = vunpack.c.l.b16 %v464
    %v1553 = vunpack.c.h.b16 %v464
    %v1554 = vunpack.c.l.b16 %v465
    %v1555 = vunpack.c.h.b16 %v465
    %v1556 = vunpack.c.l.b16 %v466
    %v1557 = vunpack.c.h.b16 %v466
    %v1558 = vunpack.c.l.b16 %v467
    %v1559 = vunpack.c.h.b16 %v467
    %v1560 = vunpack.c.l.b16 %v468
    %v1561 = vunpack.c.h.b16 %v468
    %v1562 = vunpack.c.l.b16 %v469
    %v1563 = vunpack.c.h.b16 %v469
    %v1564 = vunpack.c.l.b16 %v470
    %v1565 = vunpack.c.h.b16 %v470
    %v1566 = vunpack.c.l.b16 %v471
    %v1567 = vunpack.c.h.b16 %v471
    %v1568 = vunpack.c.l.b16 %v472
    %v1569 = vunpack.c.h.b16 %v472
    %v1570 = vunpack.c.l.b16 %v473
    %v1571 = vunpack.c.h.b16 %v473
    %v1572 = vunpack.c.l.b16 %v474
    %v1573 = vunpack.c.h.b16 %v474
    %v1574 = vunpack.c.l.b16 %v475
    %v1575 = vunpack.c.h.b16 %v475
    %v1576 = vunpack.c.l.b16 %v476
    %v1577 = vunpack.c.h.b16 %v476
    %v1578 = vunpack.c.l.b16 %v477
    %v1579 = vunpack.c.h.b16 %v477
    %v1580 = vunpack.c.l.b16 %v478
    %v1581 = vunpack.c.h.b16 %v478
    %v1582 = vunpack.c.l.b16 %v479
    %v1583 = vunpack.c.h.b16 %v479
    %v1584 = vunpack.c.l.b16 %v480
    %v1585 = vunpack.c.h.b16 %v480
    %v1586 = vunpack.c.l.b16 %v481
    %v1587 = vunpack.c.h.b16 %v481
    %v1588 = vunpack.c.l.b16 %v482
    %v1589 = vunpack.c.h.b16 %v482
    %v1590 = vunpack.c.l.b16 %v483
    %v1591 = vunpack.c.h.b16 %v483
    %v1592 = vunpack.c.l.b16 %v484
    %v1593 = vunpack.c.h.b16 %v484
    %v1594 = vunpack.c.l.b16 %v485
    %v1595 = vunpack.c.h.b16 %v485
    %v1596 = vunpack.c.l.b16 %v486
    %v1597 = vunpack.c.h.b16 %v486
    %v1598 = vunpack.c.l.b16 %v487
    %v1599 = vunpack.c.h.b16 %v487
    %v1600 = vunpack.c.l.b16 %v488
    %v1601 = vunpack.c.h.b16 %v488
    %v1602 = vunpack.c.l.b16 %v489
    %v1603 = vunpack.c.h.b16 %v489
    %v1604 = vunpack.c.l.b16 %v490
    %v1605 = vunpack.c.h.b16 %v490
    %v1606 = vunpack.c.l.b16 %v491
    %v1607 = vunpack.c.h.b16 %v491
    %v1608 = vunpack.c.l.b16 %v492
    %v1609 = vunpack.c.h.b16 %v492
    %v1610 = vunpack.c.l.b16 %v493
    %v1611 = vunpack.c.h.b16 %v493
    %v1612 = vunpack.c.l.b16 %v494
    %v1613 = vunpack.c.h.b16 %v494
    %v1614 = vunpack.c.l.b16 %v495
    %v1615 = vunpack.c.h.b16 %v495
    %v1616 = vunpack.c.l.b16 %v496
    %v1617 = vunpack.c.h.b16 %v496
    %v1618 = vunpack.c.l.b16 %v497
    %v1619 = vunpack.c.h.b16 %v497
    %v1620 = vunpack.c.l.b16 %v498
    %v1621 = vunpack.c.h.b16 %v498
    %v1622 = vunpack.c.l.b16 %v499
    %v1623 = vunpack.c.h.b16 %v499
    %v1624 = vunpack.c.l.b16 %v500
    %v1625 = vunpack.c.h.b16 %v500
    %v1626 = vunpack.c.l.b16 %v501
    %v1627 = vunpack.c.h.b16 %v501
    %v1628 = vunpack.c.l.b16 %v502
    %v1629 = vunpack.c.h.b16 %v502
    %v1630 = vunpack.c.l.b16 %v503
    %v1631 = vunpack.c.h.b16 %v503
    %v1632 = vunpack.c.l.b16 %v504
    %v1633 = vunpack.c.h.b16 %v504
    %v1634 = vunpack.c.l.b16 %v505
    %v1635 = vunpack.c.h.b16 %v505
    %v1636 = vunpack.c.l.b16 %v506
    %v1637 = vunpack.c.h.b16 %v506
    %v1638 = vunpack.c.l.b16 %v507
    %v1639 = vunpack.c.h.b16 %v507
    %v1640 = vunpack.c.l.b16 %v508
    %v1641 = vunpack.c.h.b16 %v508
    %v1642 = vunpack.c.l.b16 %v509
    %v1643 = vunpack.c.h.b16 %v509
    %v1644 = vunpack.c.l.b16 %v510
    %v1645 = vunpack.c.h.b16 %v510
    %v1646 = vunpack.c.l.b16 %v511
    %v1647 = vunpack.c.h.b16 %v511
    %v1648 = vunpack.c.l.b16 %v512
    %v1649 = vunpack.c.h.b16 %v512
    %v1650 = vunpack.c.l.b16 %v513
    %v1651 = vunpack.c.h.b16 %v513
    %v1652 = vunpack.c.l.b16 %v514
    %v1653 = vunpack.c.h.b16 %v514
    %v1654 = vunpack.c.l.b16 %v515
    %v1655 = vunpack.c.h.b16 %v515
    %v1656 = vunpack.c.l.b16 %v516
    %v1657 = vunpack.c.h.b16 %v516
    %v1658 = vunpack.c.l.b16 %v517
    %v1659 = vunpack.c.h.b16 %v517
    %v1660 = vunpack.c.l.b16 %v518
    %v1661 = vunpack.c.h.b16 %v518
    %v1662 = vunpack.c.l.b16 %v519
    %v1663 = vunpack.c.h.b16 %v519
    %v1664 = vunpack.c.l.b16 %v520
    %v1665 = vunpack.c.h.b16 %v520
    %v1666 = vunpack.c.l.b16 %v521
    %v1667 = vunpack.c.h.b16 %v521
    %v1668 = vunpack.c.l.b16 %v522
    %v1669 = vunpack.c.h.b16 %v522
    %v1670 = vunpack.c.l.b16 %v523
    %v1671 = vunpack.c.h.b16 %v523
    %v1672 = vunpack.c.l.b16 %v524
    %v1673 = vunpack.c.h.b16 %v524
    %v1674 = vunpack.c.l.b16 %v525
    %v1675 = vunpack.c.h.b16 %v525
    %v1676 = vunpack.c.l.b16 %v526
    %v1677 = vunpack.c.h.b16 %v526
    %v1678 = vunpack.c.l.b16 %v527
    %v1679 = vunpack.c.h.b16 %v527
    %v1680 = vunpack.c.l.b16 %v528
    %v1681 = vunpack.c.h.b16 %v528
    %v1682 = vunpack.c.l.b16 %v529
    %v1683 = vunpack.c.h.b16 %v529
    %v1684 = vunpack.c.l.b16 %v530
    %v1685 = vunpack.c.h.b16 %v530
    %v1686 = vunpack.c.l.b16 %v531
    %v1687 = vunpack.c.h.b16 %v531
    %v1688 = vunpack.c.l.b16 %v532
    %v1689 = vunpack.c.h.b16 %v532
    %v1690 = vunpack.c.l.b16 %v533
    %v1691 = vunpack.c.h.b16 %v533
    %v1692 = vunpack.c.l.b16 %v534
    %v1693 = vunpack.c.h.b16 %v534
    %v1694 = vunpack.c.l.b16 %v535
    %v1695 = vunpack.c.h.b16 %v535
    %v1696 = vunpack.c.l.b16 %v536
    %v1697 = vunpack.c.h.b16 %v536
    %v1698 = vunpack.c.l.b16 %v537
    %v1699 = vunpack.c.h.b16 %v537
    %v1700 = vunpack.c.l.b16 %v538
    %v1701 = vunpack.c.h.b16 %v538
    %v1702 = vunpack.c.l.b16 %v539
    %v1703 = vunpack.c.h.b16 %v539
    %v1704 = vunpack.c.l.b16 %v540
    %v1705 = vunpack.c.h.b16 %v540
    %v1706 = vunpack.c.l.b16 %v541
    %v1707 = vunpack.c.h.b16 %v541
    %v1708 = vunpack.c.l.b16 %v542
    %v1709 = vunpack.c.h.b16 %v542
    %v1710 = vunpack.c.l.b16 %v543
    %v1711 = vunpack.c.h.b16 %v543
    %v1712 = vunpack.c.l.b16 %v544
    %v1713 = vunpack.c.h.b16 %v544
    %v1714 = vunpack.c.l.b16 %v545
    %v1715 = vunpack.c.h.b16 %v545
    %v1716 = vunpack.c.l.b16 %v546
    %v1717 = vunpack.c.h.b16 %v546
    %v1718 = vunpack.c.l.b16 %v547
    %v1719 = vunpack.c.h.b16 %v547
    %v1720 = vunpack.c.l.b16 %v548
    %v1721 = vunpack.c.h.b16 %v548
    %v1722 = vunpack.c.l.b16 %v549
    %v1723 = vunpack.c.h.b16 %v549
    %v1724 = vunpack.c.l.b16 %v550
    %v1725 = vunpack.c.h.b16 %v550
    %v1726 = vunpack.c.l.b16 %v551
    %v1727 = vunpack.c.h.b16 %v551
    %v1728 = vunpack.c.l.b16 %v552
    %v1729 = vunpack.c.h.b16 %v552
    %v1730 = vunpack.c.l.b16 %v553
    %v1731 = vunpack.c.h.b16 %v553
    %v1732 = vunpack.c.l.b16 %v554
    %v1733 = vunpack.c.h.b16 %v554
    %v1734 = vunpack.c.l.b16 %v555
    %v1735 = vunpack.c.h.b16 %v555
    %v1736 = vunpack.c.l.b16 %v556
    %v1737 = vunpack.c.h.b16 %v556
    %v1738 = vunpack.c.l.b16 %v557
    %v1739 = vunpack.c.h.b16 %v557
    %v1740 = vunpack.c.l.b16 %v558
    %v1741 = vunpack.c.h.b16 %v558
    %v1742 = vunpack.c.l.b16 %v559
    %v1743 = vunpack.c.h.b16 %v559
    %v1744 = vunpack.c.l.b16 %v560
    %v1745 = vunpack.c.h.b16 %v560
    %v1746 = vunpack.c.l.b16 %v561
    %v1747 = vunpack.c.h.b16 %v561
    %v1748 = vunpack.c.l.b16 %v562
    %v1749 = vunpack.c.h.b16 %v562
    %v1750 = vunpack.c.l.b16 %v563
    %v1751 = vunpack.c.h.b16 %v563
    %v1752 = vunpack.c.l.b16 %v564
    %v1753 = vunpack.c.h.b16 %v564
    %v1754 = vunpack.c.l.b16 %v565
    %v1755 = vunpack.c.h.b16 %v565
    %v1756 = vunpack.c.l.b16 %v566
    %v1757 = vunpack.c.h.b16 %v566
    %v1758 = vunpack.c.l.b16 %v567
    %v1759 = vunpack.c.h.b16 %v567
    %v1760 = vunpack.c.l.b16 %v568
    %v1761 = vunpack.c.h.b16 %v568
    %v1762 = vunpack.c.l.b16 %v569
    %v1763 = vunpack.c.h.b16 %v569
    %v1764 = vpack.c.b16 %v1002, %v996
    %v1765 = vpack.c.b16 %v1003, %v997
    %v1766 = vpack.c.b16 %v1004, %v998
    %v1767 = vpack.c.b16 %v1005, %v999
    %v1768 = vpack.c.b16 %v1006, %v1000
    %v1769 = vpack.c.b16 %v1007, %v1001
    %v1770 = vpack.c.b16 %v1014, %v1008
    %v1771 = vpack.c.b16 %v1015, %v1009
    %v1772 = vpack.c.b16 %v1016, %v1010
    %v1773 = vpack.c.b16 %v1017, %v1011
    %v1774 = vpack.c.b16 %v1018, %v1012
    %v1775 = vpack.c.b16 %v1019, %v1013
    %v1776 = vpack.c.b16 %v1026, %v1020
    %v1777 = vpack.c.b16 %v1027, %v1021
    %v1778 = vpack.c.b16 %v1028, %v1022
    %v1779 = vpack.c.b16 %v1029, %v1023
    %v1780 = vpack.c.b16 %v1030, %v1024
    %v1781 = vpack.c.b16 %v1031, %v1025
    %v1782 = vpack.c.b16 %v1038, %v1032
    %v1783 = vpack.c.b16 %v1039, %v1033
    %v1784 = vpack.c.b16 %v1040, %v1034
    %v1785 = vpack.c.b16 %v1041, %v1035
    %v1786 = vpack.c.b16 %v1042, %v1036
    %v1787 = vpack.c.b16 %v1043, %v1037
    %v1788 = vpack.c.b16 %v1050, %v1044
    %v1789 = vpack.c.b16 %v1051, %v1045
    %v1790 = vpack.c.b16 %v1052, %v1046
    %v1791 = vpack.c.b16 %v1053, %v1047
    %v1792 = vpack.c.b16 %v1054, %v1048
    %v1793 = vpack.c.b16 %v1055, %v1049
    %v1794 = vpack.c.b16 %v1062, %v1056
    %v1795 = vpack.c.b16 %v1063, %v1057
    %v1796 = vpack.c.b16 %v1064, %v1058
    %v1797 = vpack.c.b16 %v1065, %v1059
    %v1798 = vpack.c.b16 %v1066, %v1060
    %v1799 = vpack.c.b16 %v1067, %v1061
    %v1800 = vpack.c.b16 %v1074, %v1068
    %v1801 = vpack.c.b16 %v1075, %v1069
    %v1802 = vpack.c.b16 %v1076, %v1070
    %v1803 = vpack.c.b16 %v1077, %v1071
    %v1804 = vpack.c.b16 %v1078, %v1072
    %v1805 = vpack.c.b16 %v1079, %v1073
    %v1806 = vpack.c.b16 %v1086, %v1080
    %v1807 = vpack.c.b16 %v1087, %v1081
    %v1808 = vpack.c.b16 %v1088, %v1082
    %v1809 = vpack.c.b16 %v1089, %v1083
    %v1810 = vpack.c.b16 %v1090, %v1084
    %v1811 = vpack.c.b16 %v1091, %v1085
    %v1812 = vpack.c.b16 %v1098, %v1092
    %v1813 = vpack.c.b16 %v1099, %v1093
    %v1814 = vpack.c.b16 %v1100, %v1094
    %v1815 = vpack.c.b16 %v1101, %v1095
    %v1816 = vpack.c.b16 %v1102, %v1096
    %v1817 = vpack.c.b16 %v1103, %v1097
    %v1818 = vpack.c.b16 %v1110, %v1104
    %v1819 = vpack.c.b16 %v1111, %v1105
    %v1820 = vpack.c.b16 %v1112, %v1106
    %v1821 = vpack.c.b16 %v1113, %v1107
    %v1822 = vpack.c.b16 %v1114, %v1108
    %v1823 = vpack.c.b16 %v1115, %v1109
    %v1824 = vpack.c.b16 %v1122, %v1116
    %v1825 = vpack.c.b16 %v1123, %v1117
    %v1826 = vpack.c.b16 %v1124, %v1118
    %v1827 = vpack.c.b16 %v1125, %v1119
    %v1828 = vpack.c.b16 %v1126, %v1120
    %v1829 = vpack.c.b16 %v1127, %v1121
    %v1830 = vpack.c.b16 %v1134, %v1128
    %v1831 = vpack.c.b16 %v1135, %v1129
    %v1832 = vpack.c.b16 %v1136, %v1130
    %v1833 = vpack.c.b16 %v1137, %v1131
    %v1834 = vpack.c.b16 %v1138, %v1132
    %v1835 = vpack.c.b16 %v1139, %v1133
    %v1836 = vpack.c.b16 %v1146, %v1140
    %v1837 = vpack.c.b16 %v1147, %v1141
    %v1838 = vpack.c.b16 %v1148, %v1142
    %v1839 = vpack.c.b16 %v1149, %v1143
    %v1840 = vpack.c.b16 %v1150, %v1144
    %v1841 = vpack.c.b16 %v1151, %v1145
    %v1842 = vpack.c.b16 %v1158, %v1152
    %v1843 = vpack.c.b16 %v1159, %v1153
    %v1844 = vpack.c.b16 %v1160, %v1154
    %v1845 = vpack.c.b16 %v1161, %v1155
    %v1846 = vpack.c.b16 %v1162, %v1156
    %v1847 = vpack.c.b16 %v1163, %v1157
    %v1848 = vpack.c.b16 %v1170, %v1164
    %v1849 = vpack.c.b16 %v1171, %v1165
    %v1850 = vpack.c.b16 %v1172, %v1166
    %v1851 = vpack.c.b16 %v1173, %v1167
    %v1852 = vpack.c.b16 %v1174, %v1168
    %v1853 = vpack.c.b16 %v1175, %v1169
    %v1854 = vpack.c.b16 %v1182, %v1176
    %v1855 = vpack.c.b16 %v1183, %v1177
    %v1856 = vpack.c.b16 %v1184, %v1178
    %v1857 = vpack.c.b16 %v1185, %v1179
    %v1858 = vpack.c.b16 %v1186, %v1180
    %v1859 = vpack.c.b16 %v1187, %v1181
    %v1860 = vpack.c.b16 %v1194, %v1188
    %v1861 = vpack.c.b16 %v1195, %v1189
    %v1862 = vpack.c.b16 %v1196, %v1190
    %v1863 = vpack.c.b16 %v1197, %v1191
    %v1864 = vpack.c.b16 %v1198, %v1192
    %v1865 = vpack.c.b16 %v1199, %v1193
    %v1866 = vpack.c.b16 %v1206, %v1200
    %v1867 = vpack.c.b16 %v1207, %v1201
    %v1868 = vpack.c.b16 %v1208, %v1202
    %v1869 = vpack.c.b16 %v1209, %v1203
    %v1870 = vpack.c.b16 %v1210, %v1204
    %v1871 = vpack.c.b16 %v1211, %v1205
    %v1872 = vpack.c.b16 %v1218, %v1212
    %v1873 = vpack.c.b16 %v1219, %v1213
    %v1874 = vpack.c.b16 %v1220, %v1214
    %v1875 = vpack.c.b16 %v1221, %v1215
    %v1876 = vpack.c.b16 %v1222, %v1216
    %v1877 = vpack.c.b16 %v1223, %v1217
    %v1878 = vpack.c.b16 %v1230, %v1224
    %v1879 = vpack.c.b16 %v1231, %v1225
    %v1880 = vpack.c.b16 %v1232, %v1226
    %v1881 = vpack.c.b16 %v1233, %v1227
    %v1882 = vpack.c.b16 %v1234, %v1228
    %v1883 = vpack.c.b16 %v1235, %v1229
    %v1884 = vpack.c.b16 %v1242, %v1236
    %v1885 = vpack.c.b16 %v1243, %v1237
    %v1886 = vpack.c.b16 %v1244, %v1238
    %v1887 = vpack.c.b16 %v1245, %v1239
    %v1888 = vpack.c.b16 %v1246, %v1240
    %v1889 = vpack.c.b16 %v1247, %v1241
    %v1890 = vpack.c.b16 %v1254, %v1248
    %v1891 = vpack.c.b16 %v1255, %v1249
    %v1892 = vpack.c.b16 %v1256, %v1250
    %v1893 = vpack.c.b16 %v1257, %v1251
    %v1894 = vpack.c.b16 %v1258, %v1252
    %v1895 = vpack.c.b16 %v1259, %v1253
    %v1896 = vpack.c.b16 %v1266, %v1260
    %v1897 = vpack.c.b16 %v1267, %v1261
    %v1898 = vpack.c.b16 %v1268, %v1262
    %v1899 = vpack.c.b16 %v1269, %v1263
    %v1900 = vpack.c.b16 %v1270, %v1264
    %v1901 = vpack.c.b16 %v1271, %v1265
    %v1902 = vpack.c.b16 %v1278, %v1272
    %v1903 = vpack.c.b16 %v1279, %v1273
    %v1904 = vpack.c.b16 %v1280, %v1274
    %v1905 = vpack.c.b16 %v1281, %v1275
    %v1906 = vpack.c.b16 %v1282, %v1276
    %v1907 = vpack.c.b16 %v1283, %v1277
    %v1908 = vpack.c.b16 %v1290, %v1284
    %v1909 = vpack.c.b16 %v1291, %v1285
    %v1910 = vpack.c.b16 %v1292, %v1286
    %v1911 = vpack.c.b16 %v1293, %v1287
    %v1912 = vpack.c.b16 %v1294, %v1288
    %v1913 = vpack.c.b16 %v1295, %v1289
    %v1914 = vpack.c.b16 %v1302, %v1296
    %v1915 = vpack.c.b16 %v1303, %v1297
    %v1916 = vpack.c.b16 %v1304, %v1298
    %v1917 = vpack.c.b16 %v1305, %v1299
    %v1918 = vpack.c.b16 %v1306, %v1300
    %v1919 = vpack.c.b16 %v1307, %v1301
    %v1920 = vpack.c.b16 %v1314, %v1308
    %v1921 = vpack.c.b16 %v1315, %v1309
    %v1922 = vpack.c.b16 %v1316, %v1310
    %v1923 = vpack.c.b16 %v1317, %v1311
    %v1924 = vpack.c.b16 %v1318, %v1312
    %v1925 = vpack.c.b16 %v1319, %v1313
    %v1926 = vpack.c.b16 %v1326, %v1320
    %v1927 = vpack.c.b16 %v1327, %v1321
    %v1928 = vpack.c.b16 %v1328, %v1322
    %v1929 = vpack.c.b16 %v1329, %v1323
    %v1930 = vpack.c.b16 %v1330, %v1324
    %v1931 = vpack.c.b16 %v1331, %v1325
    %v1932 = vpack.c.b16 %v1338, %v1332
    %v1933 = vpack.c.b16 %v1339, %v1333
    %v1934 = vpack.c.b16 %v1340, %v1334
    %v1935 = vpack.c.b16 %v1341, %v1335
    %v1936 = vpack.c.b16 %v1342, %v1336
    %v1937 = vpack.c.b16 %v1343, %v1337
    %v1938 = vpack.c.b16 %v1350, %v1344
    %v1939 = vpack.c.b16 %v1351, %v1345
    %v1940 = vpack.c.b16 %v1352, %v1346
    %v1941 = vpack.c.b16 %v1353, %v1347
    %v1942 = vpack.c.b16 %v1354, %v1348
    %v1943 = vpack.c.b16 %v1355, %v1349
    %v1944 = vpack.c.b16 %v1362, %v1356
    %v1945 = vpack.c.b16 %v1363, %v1357
    %v1946 = vpack.c.b16 %v1364, %v1358
    %v1947 = vpack.c.b16 %v1365, %v1359
    %v1948 = vpack.c.b16 %v1366, %v1360
    %v1949 = vpack.c.b16 %v1367, %v1361
    %v1950 = vpack.c.b16 %v1374, %v1368
    %v1951 = vpack.c.b16 %v1375, %v1369
    %v1952 = vpack.c.b16 %v1376, %v1370
    %v1953 = vpack.c.b16 %v1377, %v1371
    %v1954 = vpack.c.b16 %v1378, %v1372
    %v1955 = vpack.c.b16 %v1379, %v1373
    %v1956 = vpack.c.b16 %v1386, %v1380
    %v1957 = vpack.c.b16 %v1387, %v1381
    %v1958 = vpack.c.b16 %v1388, %v1382
    %v1959 = vpack.c.b16 %v1389, %v1383
    %v1960 = vpack.c.b16 %v1390, %v1384
    %v1961 = vpack.c.b16 %v1391, %v1385
    %v1962 = vpack.c.b16 %v1398, %v1392
    %v1963 = vpack.c.b16 %v1399, %v1393
    %v1964 = vpack.c.b16 %v1400, %v1394
    %v1965 = vpack.c.b16 %v1401, %v1395
    %v1966 = vpack.c.b16 %v1402, %v1396
    %v1967 = vpack.c.b16 %v1403, %v1397
    %v1968 = vpack.c.b16 %v1410, %v1404
    %v1969 = vpack.c.b16 %v1411, %v1405
    %v1970 = vpack.c.b16 %v1412, %v1406
    %v1971 = vpack.c.b16 %v1413, %v1407
    %v1972 = vpack.c.b16 %v1414, %v1408
    %v1973 = vpack.c.b16 %v1415, %v1409
    %v1974 = vpack.c.b16 %v1422, %v1416
    %v1975 = vpack.c.b16 %v1423, %v1417
    %v1976 = vpack.c.b16 %v1424, %v1418
    %v1977 = vpack.c.b16 %v1425, %v1419
    %v1978 = vpack.c.b16 %v1426, %v1420
    %v1979 = vpack.c.b16 %v1427, %v1421
    %v1980 = vpack.c.b16 %v1434, %v1428
    %v1981 = vpack.c.b16 %v1435, %v1429
    %v1982 = vpack.c.b16 %v1436, %v1430
    %v1983 = vpack.c.b16 %v1437, %v1431
    %v1984 = vpack.c.b16 %v1438, %v1432
    %v1985 = vpack.c.b16 %v1439, %v1433
    %v1986 = vpack.c.b16 %v1446, %v1440
    %v1987 = vpack.c.b16 %v1447, %v1441
    %v1988 = vpack.c.b16 %v1448, %v1442
    %v1989 = vpack.c.b16 %v1449, %v1443
    %v1990 = vpack.c.b16 %v1450, %v1444
    %v1991 = vpack.c.b16 %v1451, %v1445
    %v1992 = vpack.c.b16 %v1458, %v1452
    %v1993 = vpack.c.b16 %v1459, %v1453
    %v1994 = vpack.c.b16 %v1460, %v1454
    %v1995 = vpack.c.b16 %v1461, %v1455
    %v1996 = vpack.c.b16 %v1462, %v1456
    %v1997 = vpack.c.b16 %v1463, %v1457
    %v1998 = vpack.c.b16 %v1470, %v1464
    %v1999 = vpack.c.b16 %v1471, %v1465
    %v2000 = vpack.c.b16 %v1472, %v1466
    %v2001 = vpack.c.b16 %v1473, %v1467
    %v2002 = vpack.c.b16 %v1474, %v1468
    %v2003 = vpack.c.b16 %v1475, %v1469
    %v2004 = vpack.c.b16 %v1482, %v1476
    %v2005 = vpack.c.b16 %v1483, %v1477
    %v2006 = vpack.c.b16 %v1484, %v1478
    %v2007 = vpack.c.b16 %v1485, %v1479
    %v2008 = vpack.c.b16 %v1486, %v1480
    %v2009 = vpack.c.b16 %v1487, %v1481
    %v2010 = vpack.c.b16 %v1494, %v1488
    %v2011 = vpack.c.b16 %v1495, %v1489
    %v2012 = vpack.c.b16 %v1496, %v1490
    %v2013 = vpack.c.b16 %v1497, %v1491
    %v2014 = vpack.c.b16 %v1498, %v1492
    %v2015 = vpack.c.b16 %v1499, %v1493
    %v2016 = vpack.c.b16 %v1506, %v1500
    %v2017 = vpack.c.b16 %v1507, %v1501
    %v2018 = vpack.c.b16 %v1508, %v1502
    %v2019 = vpack.c.b16 %v1509, %v1503
    %v2020 = vpack.c.b16 %v1510, %v1504
    %v2021 = vpack.c.b16 %v1511, %v1505
    %v2022 = vpack.c.b16 %v1518, %v1512
    %v2023 = vpack.c.b16 %v1519, %v1513
    %v2024 = vpack.c.b16 %v1520, %v1514
    %v2025 = vpack.c.b16 %v1521, %v1515
    %v2026 = vpack.c.b16 %v1522, %v1516
    %v2027 = vpack.c.b16 %v1523, %v1517
    %v2028 = vpack.c.b16 %v1530, %v1524
    %v2029 = vpack.c.b16 %v1531, %v1525
    %v2030 = vpack.c.b16 %v1532, %v1526
    %v2031 = vpack.c.b16 %v1533, %v1527
    %v2032 = vpack.c.b16 %v1534, %v1528
    %v2033 = vpack.c.b16 %v1535, %v1529
    %v2034 = vpack.c.b16 %v1542, %v1536
    %v2035 = vpack.c.b16 %v1543, %v1537
    %v2036 = vpack.c.b16 %v1544, %v1538
    %v2037 = vpack.c.b16 %v1545, %v1539
    %v2038 = vpack.c.b16 %v1546, %v1540
    %v2039 = vpack.c.b16 %v1547, %v1541
    %v2040 = vpack.c.b16 %v1554, %v1548
    %v2041 = vpack.c.b16 %v1555, %v1549
    %v2042 = vpack.c.b16 %v1556, %v1550
    %v2043 = vpack.c.b16 %v1557, %v1551
    %v2044 = vpack.c.b16 %v1558, %v1552
    %v2045 = vpack.c.b16 %v1559, %v1553
    %v2046 = vpack.c.b16 %v1566, %v1560
    %v2047 = vpack.c.b16 %v1567, %v1561
    %v2048 = vpack.c.b16 %v1568, %v1562
    %v2049 = vpack.c.b16 %v1569, %v1563
    %v2050 = vpack.c.b16 %v1570, %v1564
    %v2051 = vpack.c.b16 %v1571, %v1565
    %v2052 = vpack.c.b16 %v1578, %v1572
    %v2053 = vpack.c.b16 %v1579, %v1573
    %v2054 = vpack.c.b16 %v1580, %v1574
    %v2055 = vpack.c.b16 %v1581, %v1575
    %v2056 = vpack.c.b16 %v1582, %v1576
    %v2057 = vpack.c.b16 %v1583, %v1577
    %v2058 = vpack.c.b16 %v1590, %v1584
    %v2059 = vpack.c.b16 %v1591, %v1585
    %v2060 = vpack.c.b16 %v1592, %v1586
    %v2061 = vpack.c.b16 %v1593, %v1587
    %v2062 = vpack.c.b16 %v1594, %v1588
    %v2063 = vpack.c.b16 %v1595, %v1589
    %v2064 = vpack.c.b16 %v1602, %v1596
    %v2065 = vpack.c.b16 %v1603, %v1597
    %v2066 = vpack.c.b16 %v1604, %v1598
    %v2067 = vpack.c.b16 %v1605, %v1599
    %v2068 = vpack.c.b16 %v1606, %v1600
    %v2069 = vpack.c.b16 %v1607, %v1601
    %v2070 = vpack.c.b16 %v1614, %v1608
    %v2071 = vpack.c.b16 %v1615, %v1609
    %v2072 = vpack.c.b16 %v1616, %v1610
    %v2073 = vpack.c.b16 %v1617, %v1611
    %v2074 = vpack.c.b16 %v1618, %v1612
    %v2075 = vpack.c.b16 %v1619, %v1613
    %v2076 = vpack.c.b16 %v1626, %v1620
    %v2077 = vpack.c.b16 %v1627, %v1621
    %v2078 = vpack.c.b16 %v1628, %v1622
    %v2079 = vpack.c.b16 %v1629, %v1623
    %v2080 = vpack.c.b16 %v1630, %v1624
    %v2081 = vpack.c.b16 %v1631, %v1625
    %v2082 = vpack.c.b16 %v1638, %v1632
    %v2083 = vpack.c.b16 %v1639, %v1633
    %v2084 = vpack.c.b16 %v1640, %v1634
    %v2085 = vpack.c.b16 %v1641, %v1635
    %v2086 = vpack.c.b16 %v1642, %v1636
    %v2087 = vpack.c.b16 %v1643, %v1637
    %v2088 = vpack.c.b16 %v1650, %v1644
    %v2089 = vpack.c.b16 %v1651, %v1645
    %v2090 = vpack.c.b16 %v1652, %v1646
    %v2091 = vpack.c.b16 %v1653, %v1647
    %v2092 = vpack.c.b16 %v1654, %v1648
    %v2093 = vpack.c.b16 %v1655, %v1649
    %v2094 = vpack.c.b16 %v1662, %v1656
    %v2095 = vpack.c.b16 %v1663, %v1657
    %v2096 = vpack.c.b16 %v1664, %v1658
    %v2097 = vpack.c.b16 %v1665, %v1659
    %v2098 = vpack.c.b16 %v1666, %v1660
    %v2099 = vpack.c.b16 %v1667, %v1661
    %v2100 = vpack.c.b16 %v1674, %v1668
    %v2101 = vpack.c.b16 %v1675, %v1669
    %v2102 = vpack.c.b16 %v1676, %v1670
    %v2103 = vpack.c.b16 %v1677, %v1671
    %v2104 = vpack.c.b16 %v1678, %v1672
    %v2105 = vpack.c.b16 %v1679, %v1673
    %v2106 = vpack.c.b16 %v1686, %v1680
    %v2107 = vpack.c.b16 %v1687, %v1681
    %v2108 = vpack.c.b16 %v1688, %v1682
    %v2109 = vpack.c.b16 %v1689, %v1683
    %v2110 = vpack.c.b16 %v1690, %v1684
    %v2111 = vpack.c.b16 %v1691, %v1685
    %v2112 = vpack.c.b16 %v1698, %v1692
    %v2113 = vpack.c.b16 %v1699, %v1693
    %v2114 = vpack.c.b16 %v1700, %v1694
    %v2115 = vpack.c.b16 %v1701, %v1695
    %v2116 = vpack.c.b16 %v1702, %v1696
    %v2117 = vpack.c.b16 %v1703, %v1697
    %v2118 = vpack.c.b16 %v1710, %v1704
    %v2119 = vpack.c.b16 %v1711, %v1705
    %v2120 = vpack.c.b16 %v1712, %v1706
    %v2121 = vpack.c.b16 %v1713, %v1707
    %v2122 = vpack.c.b16 %v1714, %v1708
    %v2123 = vpack.c.b16 %v1715, %v1709
    %v2124 = vpack.c.b16 %v1722, %v1716
    %v2125 = vpack.c.b16 %v1723, %v1717
    %v2126 = vpack.c.b16 %v1724, %v1718
    %v2127 = vpack.c.b16 %v1725, %v1719
    %v2128 = vpack.c.b16 %v1726, %v1720
    %v2129 = vpack.c.b16 %v1727, %v1721
    %v2130 = vpack.c.b16 %v1734, %v1728
    %v2131 = vpack.c.b16 %v1735, %v1729
    %v2132 = vpack.c.b16 %v1736, %v1730
    %v2133 = vpack.c.b16 %v1737, %v1731
    %v2134 = vpack.c.b16 %v1738, %v1732
    %v2135 = vpack.c.b16 %v1739, %v1733
    %v2136 = vpack.c.b16 %v1746, %v1740
    %v2137 = vpack.c.b16 %v1747, %v1741
    %v2138 = vpack.c.b16 %v1748, %v1742
    %v2139 = vpack.c.b16 %v1749, %v1743
    %v2140 = vpack.c.b16 %v1750, %v1744
    %v2141 = vpack.c.b16 %v1751, %v1745
    %v2142 = vpack.c.b16 %v1758, %v1752
    %v2143 = vpack.c.b16 %v1759, %v1753
    %v2144 = vpack.c.b16 %v1760, %v1754
    %v2145 = vpack.c.b16 %v1761, %v1755
    %v2146 = vpack.c.b16 %v1762, %v1756
    %v2147 = vpack.c.b16 %v1763, %v1757
    %2532 = vmatpush.bf16.msra.mxu0 %v1806
    %2533 = vmatpush.bf16.msra.mxu0 %v1800
    %2534 = vmatpush.bf16.msra.mxu0 %v1794
    %2535 = vmatpush.bf16.msra.mxu0 %v1788
    %2536 = vmatpush.bf16.msra.mxu0 %v1782
    %2537 = vmatpush.bf16.msra.mxu0 %v1776
    %2538 = vmatpush.bf16.msra.mxu0 %v1770
    %2539 = vmatpush.bf16.msra.mxu0 %v1764
    %2540 = vmatmul.bf16.gmra.mxu0 %v596
    %v2541 = vpop.f32.mrf.mxu0
    %v2542 = vadd.f32 %v572, %v2541
    %v2543 = vpop.f32.mrf.mxu0
    %2544 = vdwg.mxu0
    %2545 = vmatpush.bf16.msra.mxu0 %v1854
    %2546 = vmatpush.bf16.msra.mxu0 %v1848
    %2547 = vmatpush.bf16.msra.mxu0 %v1842
    %2548 = vmatpush.bf16.msra.mxu0 %v1836
    %2549 = vmatpush.bf16.msra.mxu0 %v1830
    %2550 = vmatpush.bf16.msra.mxu0 %v1824
    %2551 = vmatpush.bf16.msra.mxu0 %v1818
    %2552 = vmatpush.bf16.msra.mxu0 %v1812
    %2553 = vmatmul.bf16.gmra.mxu0 %v597
    %v2554 = vpop.f32.mrf.mxu0
    %v2555 = vadd.f32 %v2542, %v2554
    %v2556 = vpop.f32.mrf.mxu0
    %2557 = vdwg.mxu0
    %2558 = vmatpush.bf16.msra.mxu0 %v1902
    %2559 = vmatpush.bf16.msra.mxu0 %v1896
    %2560 = vmatpush.bf16.msra.mxu0 %v1890
    %2561 = vmatpush.bf16.msra.mxu0 %v1884
    %2562 = vmatpush.bf16.msra.mxu0 %v1878
    %2563 = vmatpush.bf16.msra.mxu0 %v1872
    %2564 = vmatpush.bf16.msra.mxu0 %v1866
    %2565 = vmatpush.bf16.msra.mxu0 %v1860
    %2566 = vmatmul.bf16.gmra.mxu0 %v598
    %v2567 = vpop.f32.mrf.mxu0
    %v2568 = vadd.f32 %v2555, %v2567
    %v2569 = vpop.f32.mrf.mxu0
    %2570 = vdwg.mxu0
    %2571 = vmatpush.bf16.msra.mxu0 %v1950
    %2572 = vmatpush.bf16.msra.mxu0 %v1944
    %2573 = vmatpush.bf16.msra.mxu0 %v1938
    %2574 = vmatpush.bf16.msra.mxu0 %v1932
    %2575 = vmatpush.bf16.msra.mxu0 %v1926
    %2576 = vmatpush.bf16.msra.mxu0 %v1920
    %2577 = vmatpush.bf16.msra.mxu0 %v1914
    %2578 = vmatpush.bf16.msra.mxu0 %v1908
    %2579 = vmatmul.bf16.gmra.mxu0 %v599
    %v2580 = vpop.f32.mrf.mxu0
    %v2581 = vadd.f32 %v2568, %v2580
    %v2582 = vpop.f32.mrf.mxu0
    %2583 = vdwg.mxu0
    %2584 = vmatpush.bf16.msra.mxu0 %v1998
    %2585 = vmatpush.bf16.msra.mxu0 %v1992
    %2586 = vmatpush.bf16.msra.mxu0 %v1986
    %2587 = vmatpush.bf16.msra.mxu0 %v1980
    %2588 = vmatpush.bf16.msra.mxu0 %v1974
    %2589 = vmatpush.bf16.msra.mxu0 %v1968
    %2590 = vmatpush.bf16.msra.mxu0 %v1962
    %2591 = vmatpush.bf16.msra.mxu0 %v1956
    %2592 = vmatmul.bf16.gmra.mxu0 %v600
    %v2593 = vpop.f32.mrf.mxu0
    %v2594 = vadd.f32 %v2581, %v2593
    %v2595 = vpop.f32.mrf.mxu0
    %2596 = vdwg.mxu0
    %2597 = vmatpush.bf16.msra.mxu0 %v2046
    %2598 = vmatpush.bf16.msra.mxu0 %v2040
    %2599 = vmatpush.bf16.msra.mxu0 %v2034
    %2600 = vmatpush.bf16.msra.mxu0 %v2028
    %2601 = vmatpush.bf16.msra.mxu0 %v2022
    %2602 = vmatpush.bf16.msra.mxu0 %v2016
    %2603 = vmatpush.bf16.msra.mxu0 %v2010
    %2604 = vmatpush.bf16.msra.mxu0 %v2004
    %2605 = vmatmul.bf16.gmra.mxu0 %v601
    %v2606 = vpop.f32.mrf.mxu0
    %v2607 = vadd.f32 %v2594, %v2606
    %v2608 = vpop.f32.mrf.mxu0
    %2609 = vdwg.mxu0
    %2610 = vmatpush.bf16.msra.mxu0 %v2094
    %2611 = vmatpush.bf16.msra.mxu0 %v2088
    %2612 = vmatpush.bf16.msra.mxu0 %v2082
    %2613 = vmatpush.bf16.msra.mxu0 %v2076
    %2614 = vmatpush.bf16.msra.mxu0 %v2070
    %2615 = vmatpush.bf16.msra.mxu0 %v2064
    %2616 = vmatpush.bf16.msra.mxu0 %v2058
    %2617 = vmatpush.bf16.msra.mxu0 %v2052
    %2618 = vmatmul.bf16.gmra.mxu0 %v602
    %v2619 = vpop.f32.mrf.mxu0
    %v2620 = vadd.f32 %v2607, %v2619
    %v2621 = vpop.f32.mrf.mxu0
    %2622 = vdwg.mxu0
    %2623 = vmatpush.bf16.msra.mxu0 %v2142
    %2624 = vmatpush.bf16.msra.mxu0 %v2136
    %2625 = vmatpush.bf16.msra.mxu0 %v2130
    %2626 = vmatpush.bf16.msra.mxu0 %v2124
    %2627 = vmatpush.bf16.msra.mxu0 %v2118
    %2628 = vmatpush.bf16.msra.mxu0 %v2112
    %2629 = vmatpush.bf16.msra.mxu0 %v2106
    %2630 = vmatpush.bf16.msra.mxu0 %v2100
    %2631 = vmatmul.bf16.gmra.mxu0 %v603
    %v2632 = vpop.f32.mrf.mxu0
    %v2633 = vadd.f32 %v2620, %v2632
    %v2634 = vpop.f32.mrf.mxu0
    %2635 = vdwg.mxu0
    %2636 = vmatpush.bf16.msra.mxu0 %v1807
    %2637 = vmatpush.bf16.msra.mxu0 %v1801
    %2638 = vmatpush.bf16.msra.mxu0 %v1795
    %2639 = vmatpush.bf16.msra.mxu0 %v1789
    %2640 = vmatpush.bf16.msra.mxu0 %v1783
    %2641 = vmatpush.bf16.msra.mxu0 %v1777
    %2642 = vmatpush.bf16.msra.mxu0 %v1771
    %2643 = vmatpush.bf16.msra.mxu0 %v1765
    %2644 = vmatmul.bf16.gmra.mxu0 %v596
    %v2645 = vpop.f32.mrf.mxu0
    %v2646 = vadd.f32 %v573, %v2645
    %v2647 = vpop.f32.mrf.mxu0
    %2648 = vdwg.mxu0
    %2649 = vmatpush.bf16.msra.mxu0 %v1855
    %2650 = vmatpush.bf16.msra.mxu0 %v1849
    %2651 = vmatpush.bf16.msra.mxu0 %v1843
    %2652 = vmatpush.bf16.msra.mxu0 %v1837
    %2653 = vmatpush.bf16.msra.mxu0 %v1831
    %2654 = vmatpush.bf16.msra.mxu0 %v1825
    %2655 = vmatpush.bf16.msra.mxu0 %v1819
    %2656 = vmatpush.bf16.msra.mxu0 %v1813
    %2657 = vmatmul.bf16.gmra.mxu0 %v597
    %v2658 = vpop.f32.mrf.mxu0
    %v2659 = vadd.f32 %v2646, %v2658
    %v2660 = vpop.f32.mrf.mxu0
    %2661 = vdwg.mxu0
    %2662 = vmatpush.bf16.msra.mxu0 %v1903
    %2663 = vmatpush.bf16.msra.mxu0 %v1897
    %2664 = vmatpush.bf16.msra.mxu0 %v1891
    %2665 = vmatpush.bf16.msra.mxu0 %v1885
    %2666 = vmatpush.bf16.msra.mxu0 %v1879
    %2667 = vmatpush.bf16.msra.mxu0 %v1873
    %2668 = vmatpush.bf16.msra.mxu0 %v1867
    %2669 = vmatpush.bf16.msra.mxu0 %v1861
    %2670 = vmatmul.bf16.gmra.mxu0 %v598
    %v2671 = vpop.f32.mrf.mxu0
    %v2672 = vadd.f32 %v2659, %v2671
    %v2673 = vpop.f32.mrf.mxu0
    %2674 = vdwg.mxu0
    %2675 = vmatpush.bf16.msra.mxu0 %v1951
    %2676 = vmatpush.bf16.msra.mxu0 %v1945
    %2677 = vmatpush.bf16.msra.mxu0 %v1939
    %2678 = vmatpush.bf16.msra.mxu0 %v1933
    %2679 = vmatpush.bf16.msra.mxu0 %v1927
    %2680 = vmatpush.bf16.msra.mxu0 %v1921
    %2681 = vmatpush.bf16.msra.mxu0 %v1915
    %2682 = vmatpush.bf16.msra.mxu0 %v1909
    %2683 = vmatmul.bf16.gmra.mxu0 %v599
    %v2684 = vpop.f32.mrf.mxu0
    %v2685 = vadd.f32 %v2672, %v2684
    %v2686 = vpop.f32.mrf.mxu0
    %2687 = vdwg.mxu0
    %2688 = vmatpush.bf16.msra.mxu0 %v1999
    %2689 = vmatpush.bf16.msra.mxu0 %v1993
    %2690 = vmatpush.bf16.msra.mxu0 %v1987
    %2691 = vmatpush.bf16.msra.mxu0 %v1981
    %2692 = vmatpush.bf16.msra.mxu0 %v1975
    %2693 = vmatpush.bf16.msra.mxu0 %v1969
    %2694 = vmatpush.bf16.msra.mxu0 %v1963
    %2695 = vmatpush.bf16.msra.mxu0 %v1957
    %2696 = vmatmul.bf16.gmra.mxu0 %v600
    %v2697 = vpop.f32.mrf.mxu0
    %v2698 = vadd.f32 %v2685, %v2697
    %v2699 = vpop.f32.mrf.mxu0
    %2700 = vdwg.mxu0
    %2701 = vmatpush.bf16.msra.mxu0 %v2047
    %2702 = vmatpush.bf16.msra.mxu0 %v2041
    %2703 = vmatpush.bf16.msra.mxu0 %v2035
    %2704 = vmatpush.bf16.msra.mxu0 %v2029
    %2705 = vmatpush.bf16.msra.mxu0 %v2023
    %2706 = vmatpush.bf16.msra.mxu0 %v2017
    %2707 = vmatpush.bf16.msra.mxu0 %v2011
    %2708 = vmatpush.bf16.msra.mxu0 %v2005
    %2709 = vmatmul.bf16.gmra.mxu0 %v601
    %v2710 = vpop.f32.mrf.mxu0
    %v2711 = vadd.f32 %v2698, %v2710
    %v2712 = vpop.f32.mrf.mxu0
    %2713 = vdwg.mxu0
    %2714 = vmatpush.bf16.msra.mxu0 %v2095
    %2715 = vmatpush.bf16.msra.mxu0 %v2089
    %2716 = vmatpush.bf16.msra.mxu0 %v2083
    %2717 = vmatpush.bf16.msra.mxu0 %v2077
    %2718 = vmatpush.bf16.msra.mxu0 %v2071
    %2719 = vmatpush.bf16.msra.mxu0 %v2065
    %2720 = vmatpush.bf16.msra.mxu0 %v2059
    %2721 = vmatpush.bf16.msra.mxu0 %v2053
    %2722 = vmatmul.bf16.gmra.mxu0 %v602
    %v2723 = vpop.f32.mrf.mxu0
    %v2724 = vadd.f32 %v2711, %v2723
    %v2725 = vpop.f32.mrf.mxu0
    %2726 = vdwg.mxu0
    %2727 = vmatpush.bf16.msra.mxu0 %v2143
    %2728 = vmatpush.bf16.msra.mxu0 %v2137
    %2729 = vmatpush.bf16.msra.mxu0 %v2131
    %2730 = vmatpush.bf16.msra.mxu0 %v2125
    %2731 = vmatpush.bf16.msra.mxu0 %v2119
    %2732 = vmatpush.bf16.msra.mxu0 %v2113
    %2733 = vmatpush.bf16.msra.mxu0 %v2107
    %2734 = vmatpush.bf16.msra.mxu0 %v2101
    %2735 = vmatmul.bf16.gmra.mxu0 %v603
    %v2736 = vpop.f32.mrf.mxu0
    %v2737 = vadd.f32 %v2724, %v2736
    %v2738 = vpop.f32.mrf.mxu0
    %2739 = vdwg.mxu0
    %2740 = vmatpush.bf16.msra.mxu0 %v1808
    %2741 = vmatpush.bf16.msra.mxu0 %v1802
    %2742 = vmatpush.bf16.msra.mxu0 %v1796
    %2743 = vmatpush.bf16.msra.mxu0 %v1790
    %2744 = vmatpush.bf16.msra.mxu0 %v1784
    %2745 = vmatpush.bf16.msra.mxu0 %v1778
    %2746 = vmatpush.bf16.msra.mxu0 %v1772
    %2747 = vmatpush.bf16.msra.mxu0 %v1766
    %2748 = vmatmul.bf16.gmra.mxu0 %v596
    %v2749 = vpop.f32.mrf.mxu0
    %v2750 = vadd.f32 %v574, %v2749
    %v2751 = vpop.f32.mrf.mxu0
    %2752 = vdwg.mxu0
    %2753 = vmatpush.bf16.msra.mxu0 %v1856
    %2754 = vmatpush.bf16.msra.mxu0 %v1850
    %2755 = vmatpush.bf16.msra.mxu0 %v1844
    %2756 = vmatpush.bf16.msra.mxu0 %v1838
    %2757 = vmatpush.bf16.msra.mxu0 %v1832
    %2758 = vmatpush.bf16.msra.mxu0 %v1826
    %2759 = vmatpush.bf16.msra.mxu0 %v1820
    %2760 = vmatpush.bf16.msra.mxu0 %v1814
    %2761 = vmatmul.bf16.gmra.mxu0 %v597
    %v2762 = vpop.f32.mrf.mxu0
    %v2763 = vadd.f32 %v2750, %v2762
    %v2764 = vpop.f32.mrf.mxu0
    %2765 = vdwg.mxu0
    %2766 = vmatpush.bf16.msra.mxu0 %v1904
    %2767 = vmatpush.bf16.msra.mxu0 %v1898
    %2768 = vmatpush.bf16.msra.mxu0 %v1892
    %2769 = vmatpush.bf16.msra.mxu0 %v1886
    %2770 = vmatpush.bf16.msra.mxu0 %v1880
    %2771 = vmatpush.bf16.msra.mxu0 %v1874
    %2772 = vmatpush.bf16.msra.mxu0 %v1868
    %2773 = vmatpush.bf16.msra.mxu0 %v1862
    %2774 = vmatmul.bf16.gmra.mxu0 %v598
    %v2775 = vpop.f32.mrf.mxu0
    %v2776 = vadd.f32 %v2763, %v2775
    %v2777 = vpop.f32.mrf.mxu0
    %2778 = vdwg.mxu0
    %2779 = vmatpush.bf16.msra.mxu0 %v1952
    %2780 = vmatpush.bf16.msra.mxu0 %v1946
    %2781 = vmatpush.bf16.msra.mxu0 %v1940
    %2782 = vmatpush.bf16.msra.mxu0 %v1934
    %2783 = vmatpush.bf16.msra.mxu0 %v1928
    %2784 = vmatpush.bf16.msra.mxu0 %v1922
    %2785 = vmatpush.bf16.msra.mxu0 %v1916
    %2786 = vmatpush.bf16.msra.mxu0 %v1910
    %2787 = vmatmul.bf16.gmra.mxu0 %v599
    %v2788 = vpop.f32.mrf.mxu0
    %v2789 = vadd.f32 %v2776, %v2788
    %v2790 = vpop.f32.mrf.mxu0
    %2791 = vdwg.mxu0
    %2792 = vmatpush.bf16.msra.mxu0 %v2000
    %2793 = vmatpush.bf16.msra.mxu0 %v1994
    %2794 = vmatpush.bf16.msra.mxu0 %v1988
    %2795 = vmatpush.bf16.msra.mxu0 %v1982
    %2796 = vmatpush.bf16.msra.mxu0 %v1976
    %2797 = vmatpush.bf16.msra.mxu0 %v1970
    %2798 = vmatpush.bf16.msra.mxu0 %v1964
    %2799 = vmatpush.bf16.msra.mxu0 %v1958
    %2800 = vmatmul.bf16.gmra.mxu0 %v600
    %v2801 = vpop.f32.mrf.mxu0
    %v2802 = vadd.f32 %v2789, %v2801
    %v2803 = vpop.f32.mrf.mxu0
    %2804 = vdwg.mxu0
    %2805 = vmatpush.bf16.msra.mxu0 %v2048
    %2806 = vmatpush.bf16.msra.mxu0 %v2042
    %2807 = vmatpush.bf16.msra.mxu0 %v2036
    %2808 = vmatpush.bf16.msra.mxu0 %v2030
    %2809 = vmatpush.bf16.msra.mxu0 %v2024
    %2810 = vmatpush.bf16.msra.mxu0 %v2018
    %2811 = vmatpush.bf16.msra.mxu0 %v2012
    %2812 = vmatpush.bf16.msra.mxu0 %v2006
    %2813 = vmatmul.bf16.gmra.mxu0 %v601
    %v2814 = vpop.f32.mrf.mxu0
    %v2815 = vadd.f32 %v2802, %v2814
    %v2816 = vpop.f32.mrf.mxu0
    %2817 = vdwg.mxu0
    %2818 = vmatpush.bf16.msra.mxu0 %v2096
    %2819 = vmatpush.bf16.msra.mxu0 %v2090
    %2820 = vmatpush.bf16.msra.mxu0 %v2084
    %2821 = vmatpush.bf16.msra.mxu0 %v2078
    %2822 = vmatpush.bf16.msra.mxu0 %v2072
    %2823 = vmatpush.bf16.msra.mxu0 %v2066
    %2824 = vmatpush.bf16.msra.mxu0 %v2060
    %2825 = vmatpush.bf16.msra.mxu0 %v2054
    %2826 = vmatmul.bf16.gmra.mxu0 %v602
    %v2827 = vpop.f32.mrf.mxu0
    %v2828 = vadd.f32 %v2815, %v2827
    %v2829 = vpop.f32.mrf.mxu0
    %2830 = vdwg.mxu0
    %2831 = vmatpush.bf16.msra.mxu0 %v2144
    %2832 = vmatpush.bf16.msra.mxu0 %v2138
    %2833 = vmatpush.bf16.msra.mxu0 %v2132
    %2834 = vmatpush.bf16.msra.mxu0 %v2126
    %2835 = vmatpush.bf16.msra.mxu0 %v2120
    %2836 = vmatpush.bf16.msra.mxu0 %v2114
    %2837 = vmatpush.bf16.msra.mxu0 %v2108
    %2838 = vmatpush.bf16.msra.mxu0 %v2102
    %2839 = vmatmul.bf16.gmra.mxu0 %v603
    %v2840 = vpop.f32.mrf.mxu0
    %v2841 = vadd.f32 %v2828, %v2840
    %v2842 = vpop.f32.mrf.mxu0
    %2843 = vdwg.mxu0
    %2844 = vmatpush.bf16.msra.mxu0 %v1809
    %2845 = vmatpush.bf16.msra.mxu0 %v1803
    %2846 = vmatpush.bf16.msra.mxu0 %v1797
    %2847 = vmatpush.bf16.msra.mxu0 %v1791
    %2848 = vmatpush.bf16.msra.mxu0 %v1785
    %2849 = vmatpush.bf16.msra.mxu0 %v1779
    %2850 = vmatpush.bf16.msra.mxu0 %v1773
    %2851 = vmatpush.bf16.msra.mxu0 %v1767
    %2852 = vmatmul.bf16.gmra.mxu0 %v596
    %v2853 = vpop.f32.mrf.mxu0
    %v2854 = vadd.f32 %v575, %v2853
    %v2855 = vpop.f32.mrf.mxu0
    %2856 = vdwg.mxu0
    %2857 = vmatpush.bf16.msra.mxu0 %v1857
    %2858 = vmatpush.bf16.msra.mxu0 %v1851
    %2859 = vmatpush.bf16.msra.mxu0 %v1845
    %2860 = vmatpush.bf16.msra.mxu0 %v1839
    %2861 = vmatpush.bf16.msra.mxu0 %v1833
    %2862 = vmatpush.bf16.msra.mxu0 %v1827
    %2863 = vmatpush.bf16.msra.mxu0 %v1821
    %2864 = vmatpush.bf16.msra.mxu0 %v1815
    %2865 = vmatmul.bf16.gmra.mxu0 %v597
    %v2866 = vpop.f32.mrf.mxu0
    %v2867 = vadd.f32 %v2854, %v2866
    %v2868 = vpop.f32.mrf.mxu0
    %2869 = vdwg.mxu0
    %2870 = vmatpush.bf16.msra.mxu0 %v1905
    %2871 = vmatpush.bf16.msra.mxu0 %v1899
    %2872 = vmatpush.bf16.msra.mxu0 %v1893
    %2873 = vmatpush.bf16.msra.mxu0 %v1887
    %2874 = vmatpush.bf16.msra.mxu0 %v1881
    %2875 = vmatpush.bf16.msra.mxu0 %v1875
    %2876 = vmatpush.bf16.msra.mxu0 %v1869
    %2877 = vmatpush.bf16.msra.mxu0 %v1863
    %2878 = vmatmul.bf16.gmra.mxu0 %v598
    %v2879 = vpop.f32.mrf.mxu0
    %v2880 = vadd.f32 %v2867, %v2879
    %v2881 = vpop.f32.mrf.mxu0
    %2882 = vdwg.mxu0
    %2883 = vmatpush.bf16.msra.mxu0 %v1953
    %2884 = vmatpush.bf16.msra.mxu0 %v1947
    %2885 = vmatpush.bf16.msra.mxu0 %v1941
    %2886 = vmatpush.bf16.msra.mxu0 %v1935
    %2887 = vmatpush.bf16.msra.mxu0 %v1929
    %2888 = vmatpush.bf16.msra.mxu0 %v1923
    %2889 = vmatpush.bf16.msra.mxu0 %v1917
    %2890 = vmatpush.bf16.msra.mxu0 %v1911
    %2891 = vmatmul.bf16.gmra.mxu0 %v599
    %v2892 = vpop.f32.mrf.mxu0
    %v2893 = vadd.f32 %v2880, %v2892
    %v2894 = vpop.f32.mrf.mxu0
    %2895 = vdwg.mxu0
    %2896 = vmatpush.bf16.msra.mxu0 %v2001
    %2897 = vmatpush.bf16.msra.mxu0 %v1995
    %2898 = vmatpush.bf16.msra.mxu0 %v1989
    %2899 = vmatpush.bf16.msra.mxu0 %v1983
    %2900 = vmatpush.bf16.msra.mxu0 %v1977
    %2901 = vmatpush.bf16.msra.mxu0 %v1971
    %2902 = vmatpush.bf16.msra.mxu0 %v1965
    %2903 = vmatpush.bf16.msra.mxu0 %v1959
    %2904 = vmatmul.bf16.gmra.mxu0 %v600
    %v2905 = vpop.f32.mrf.mxu0
    %v2906 = vadd.f32 %v2893, %v2905
    %v2907 = vpop.f32.mrf.mxu0
    %2908 = vdwg.mxu0
    %2909 = vmatpush.bf16.msra.mxu0 %v2049
    %2910 = vmatpush.bf16.msra.mxu0 %v2043
    %2911 = vmatpush.bf16.msra.mxu0 %v2037
    %2912 = vmatpush.bf16.msra.mxu0 %v2031
    %2913 = vmatpush.bf16.msra.mxu0 %v2025
    %2914 = vmatpush.bf16.msra.mxu0 %v2019
    %2915 = vmatpush.bf16.msra.mxu0 %v2013
    %2916 = vmatpush.bf16.msra.mxu0 %v2007
    %2917 = vmatmul.bf16.gmra.mxu0 %v601
    %v2918 = vpop.f32.mrf.mxu0
    %v2919 = vadd.f32 %v2906, %v2918
    %v2920 = vpop.f32.mrf.mxu0
    %2921 = vdwg.mxu0
    %2922 = vmatpush.bf16.msra.mxu0 %v2097
    %2923 = vmatpush.bf16.msra.mxu0 %v2091
    %2924 = vmatpush.bf16.msra.mxu0 %v2085
    %2925 = vmatpush.bf16.msra.mxu0 %v2079
    %2926 = vmatpush.bf16.msra.mxu0 %v2073
    %2927 = vmatpush.bf16.msra.mxu0 %v2067
    %2928 = vmatpush.bf16.msra.mxu0 %v2061
    %2929 = vmatpush.bf16.msra.mxu0 %v2055
    %2930 = vmatmul.bf16.gmra.mxu0 %v602
    %v2931 = vpop.f32.mrf.mxu0
    %v2932 = vadd.f32 %v2919, %v2931
    %v2933 = vpop.f32.mrf.mxu0
    %2934 = vdwg.mxu0
    %2935 = vmatpush.bf16.msra.mxu0 %v2145
    %2936 = vmatpush.bf16.msra.mxu0 %v2139
    %2937 = vmatpush.bf16.msra.mxu0 %v2133
    %2938 = vmatpush.bf16.msra.mxu0 %v2127
    %2939 = vmatpush.bf16.msra.mxu0 %v2121
    %2940 = vmatpush.bf16.msra.mxu0 %v2115
    %2941 = vmatpush.bf16.msra.mxu0 %v2109
    %2942 = vmatpush.bf16.msra.mxu0 %v2103
    %2943 = vmatmul.bf16.gmra.mxu0 %v603
    %v2944 = vpop.f32.mrf.mxu0
    %v2945 = vadd.f32 %v2932, %v2944
    %v2946 = vpop.f32.mrf.mxu0
    %2947 = vdwg.mxu0
    %2948 = vmatpush.bf16.msra.mxu0 %v1810
    %2949 = vmatpush.bf16.msra.mxu0 %v1804
    %2950 = vmatpush.bf16.msra.mxu0 %v1798
    %2951 = vmatpush.bf16.msra.mxu0 %v1792
    %2952 = vmatpush.bf16.msra.mxu0 %v1786
    %2953 = vmatpush.bf16.msra.mxu0 %v1780
    %2954 = vmatpush.bf16.msra.mxu0 %v1774
    %2955 = vmatpush.bf16.msra.mxu0 %v1768
    %2956 = vmatmul.bf16.gmra.mxu0 %v596
    %v2957 = vpop.f32.mrf.mxu0
    %v2958 = vadd.f32 %v576, %v2957
    %v2959 = vpop.f32.mrf.mxu0
    %2960 = vdwg.mxu0
    %2961 = vmatpush.bf16.msra.mxu0 %v1858
    %2962 = vmatpush.bf16.msra.mxu0 %v1852
    %2963 = vmatpush.bf16.msra.mxu0 %v1846
    %2964 = vmatpush.bf16.msra.mxu0 %v1840
    %2965 = vmatpush.bf16.msra.mxu0 %v1834
    %2966 = vmatpush.bf16.msra.mxu0 %v1828
    %2967 = vmatpush.bf16.msra.mxu0 %v1822
    %2968 = vmatpush.bf16.msra.mxu0 %v1816
    %2969 = vmatmul.bf16.gmra.mxu0 %v597
    %v2970 = vpop.f32.mrf.mxu0
    %v2971 = vadd.f32 %v2958, %v2970
    %v2972 = vpop.f32.mrf.mxu0
    %2973 = vdwg.mxu0
    %2974 = vmatpush.bf16.msra.mxu0 %v1906
    %2975 = vmatpush.bf16.msra.mxu0 %v1900
    %2976 = vmatpush.bf16.msra.mxu0 %v1894
    %2977 = vmatpush.bf16.msra.mxu0 %v1888
    %2978 = vmatpush.bf16.msra.mxu0 %v1882
    %2979 = vmatpush.bf16.msra.mxu0 %v1876
    %2980 = vmatpush.bf16.msra.mxu0 %v1870
    %2981 = vmatpush.bf16.msra.mxu0 %v1864
    %2982 = vmatmul.bf16.gmra.mxu0 %v598
    %v2983 = vpop.f32.mrf.mxu0
    %v2984 = vadd.f32 %v2971, %v2983
    %v2985 = vpop.f32.mrf.mxu0
    %2986 = vdwg.mxu0
    %2987 = vmatpush.bf16.msra.mxu0 %v1954
    %2988 = vmatpush.bf16.msra.mxu0 %v1948
    %2989 = vmatpush.bf16.msra.mxu0 %v1942
    %2990 = vmatpush.bf16.msra.mxu0 %v1936
    %2991 = vmatpush.bf16.msra.mxu0 %v1930
    %2992 = vmatpush.bf16.msra.mxu0 %v1924
    %2993 = vmatpush.bf16.msra.mxu0 %v1918
    %2994 = vmatpush.bf16.msra.mxu0 %v1912
    %2995 = vmatmul.bf16.gmra.mxu0 %v599
    %v2996 = vpop.f32.mrf.mxu0
    %v2997 = vadd.f32 %v2984, %v2996
    %v2998 = vpop.f32.mrf.mxu0
    %2999 = vdwg.mxu0
    %3000 = vmatpush.bf16.msra.mxu0 %v2002
    %3001 = vmatpush.bf16.msra.mxu0 %v1996
    %3002 = vmatpush.bf16.msra.mxu0 %v1990
    %3003 = vmatpush.bf16.msra.mxu0 %v1984
    %3004 = vmatpush.bf16.msra.mxu0 %v1978
    %3005 = vmatpush.bf16.msra.mxu0 %v1972
    %3006 = vmatpush.bf16.msra.mxu0 %v1966
    %3007 = vmatpush.bf16.msra.mxu0 %v1960
    %3008 = vmatmul.bf16.gmra.mxu0 %v600
    %v3009 = vpop.f32.mrf.mxu0
    %v3010 = vadd.f32 %v2997, %v3009
    %v3011 = vpop.f32.mrf.mxu0
    %3012 = vdwg.mxu0
    %3013 = vmatpush.bf16.msra.mxu0 %v2050
    %3014 = vmatpush.bf16.msra.mxu0 %v2044
    %3015 = vmatpush.bf16.msra.mxu0 %v2038
    %3016 = vmatpush.bf16.msra.mxu0 %v2032
    %3017 = vmatpush.bf16.msra.mxu0 %v2026
    %3018 = vmatpush.bf16.msra.mxu0 %v2020
    %3019 = vmatpush.bf16.msra.mxu0 %v2014
    %3020 = vmatpush.bf16.msra.mxu0 %v2008
    %3021 = vmatmul.bf16.gmra.mxu0 %v601
    %v3022 = vpop.f32.mrf.mxu0
    %v3023 = vadd.f32 %v3010, %v3022
    %v3024 = vpop.f32.mrf.mxu0
    %3025 = vdwg.mxu0
    %3026 = vmatpush.bf16.msra.mxu0 %v2098
    %3027 = vmatpush.bf16.msra.mxu0 %v2092
    %3028 = vmatpush.bf16.msra.mxu0 %v2086
    %3029 = vmatpush.bf16.msra.mxu0 %v2080
    %3030 = vmatpush.bf16.msra.mxu0 %v2074
    %3031 = vmatpush.bf16.msra.mxu0 %v2068
    %3032 = vmatpush.bf16.msra.mxu0 %v2062
    %3033 = vmatpush.bf16.msra.mxu0 %v2056
    %3034 = vmatmul.bf16.gmra.mxu0 %v602
    %v3035 = vpop.f32.mrf.mxu0
    %v3036 = vadd.f32 %v3023, %v3035
    %v3037 = vpop.f32.mrf.mxu0
    %3038 = vdwg.mxu0
    %3039 = vmatpush.bf16.msra.mxu0 %v2146
    %3040 = vmatpush.bf16.msra.mxu0 %v2140
    %3041 = vmatpush.bf16.msra.mxu0 %v2134
    %3042 = vmatpush.bf16.msra.mxu0 %v2128
    %3043 = vmatpush.bf16.msra.mxu0 %v2122
    %3044 = vmatpush.bf16.msra.mxu0 %v2116
    %3045 = vmatpush.bf16.msra.mxu0 %v2110
    %3046 = vmatpush.bf16.msra.mxu0 %v2104
    %3047 = vmatmul.bf16.gmra.mxu0 %v603
    %v3048 = vpop.f32.mrf.mxu0
    %v3049 = vadd.f32 %v3036, %v3048
    %v3050 = vpop.f32.mrf.mxu0
    %3051 = vdwg.mxu0
    %3052 = vmatpush.bf16.msra.mxu0 %v1811
    %3053 = vmatpush.bf16.msra.mxu0 %v1805
    %3054 = vmatpush.bf16.msra.mxu0 %v1799
    %3055 = vmatpush.bf16.msra.mxu0 %v1793
    %3056 = vmatpush.bf16.msra.mxu0 %v1787
    %3057 = vmatpush.bf16.msra.mxu0 %v1781
    %3058 = vmatpush.bf16.msra.mxu0 %v1775
    %3059 = vmatpush.bf16.msra.mxu0 %v1769
    %3060 = vmatmul.bf16.gmra.mxu0 %v596
    %v3061 = vpop.f32.mrf.mxu0
    %v3062 = vadd.f32 %v577, %v3061
    %v3063 = vpop.f32.mrf.mxu0
    %3064 = vdwg.mxu0
    %3065 = vmatpush.bf16.msra.mxu0 %v1859
    %3066 = vmatpush.bf16.msra.mxu0 %v1853
    %3067 = vmatpush.bf16.msra.mxu0 %v1847
    %3068 = vmatpush.bf16.msra.mxu0 %v1841
    %3069 = vmatpush.bf16.msra.mxu0 %v1835
    %3070 = vmatpush.bf16.msra.mxu0 %v1829
    %3071 = vmatpush.bf16.msra.mxu0 %v1823
    %3072 = vmatpush.bf16.msra.mxu0 %v1817
    %3073 = vmatmul.bf16.gmra.mxu0 %v597
    %v3074 = vpop.f32.mrf.mxu0
    %v3075 = vadd.f32 %v3062, %v3074
    %v3076 = vpop.f32.mrf.mxu0
    %3077 = vdwg.mxu0
    %3078 = vmatpush.bf16.msra.mxu0 %v1907
    %3079 = vmatpush.bf16.msra.mxu0 %v1901
    %3080 = vmatpush.bf16.msra.mxu0 %v1895
    %3081 = vmatpush.bf16.msra.mxu0 %v1889
    %3082 = vmatpush.bf16.msra.mxu0 %v1883
    %3083 = vmatpush.bf16.msra.mxu0 %v1877
    %3084 = vmatpush.bf16.msra.mxu0 %v1871
    %3085 = vmatpush.bf16.msra.mxu0 %v1865
    %3086 = vmatmul.bf16.gmra.mxu0 %v598
    %v3087 = vpop.f32.mrf.mxu0
    %v3088 = vadd.f32 %v3075, %v3087
    %v3089 = vpop.f32.mrf.mxu0
    %3090 = vdwg.mxu0
    %3091 = vmatpush.bf16.msra.mxu0 %v1955
    %3092 = vmatpush.bf16.msra.mxu0 %v1949
    %3093 = vmatpush.bf16.msra.mxu0 %v1943
    %3094 = vmatpush.bf16.msra.mxu0 %v1937
    %3095 = vmatpush.bf16.msra.mxu0 %v1931
    %3096 = vmatpush.bf16.msra.mxu0 %v1925
    %3097 = vmatpush.bf16.msra.mxu0 %v1919
    %3098 = vmatpush.bf16.msra.mxu0 %v1913
    %3099 = vmatmul.bf16.gmra.mxu0 %v599
    %v3100 = vpop.f32.mrf.mxu0
    %v3101 = vadd.f32 %v3088, %v3100
    %v3102 = vpop.f32.mrf.mxu0
    %3103 = vdwg.mxu0
    %3104 = vmatpush.bf16.msra.mxu0 %v2003
    %3105 = vmatpush.bf16.msra.mxu0 %v1997
    %3106 = vmatpush.bf16.msra.mxu0 %v1991
    %3107 = vmatpush.bf16.msra.mxu0 %v1985
    %3108 = vmatpush.bf16.msra.mxu0 %v1979
    %3109 = vmatpush.bf16.msra.mxu0 %v1973
    %3110 = vmatpush.bf16.msra.mxu0 %v1967
    %3111 = vmatpush.bf16.msra.mxu0 %v1961
    %3112 = vmatmul.bf16.gmra.mxu0 %v600
    %v3113 = vpop.f32.mrf.mxu0
    %v3114 = vadd.f32 %v3101, %v3113
    %v3115 = vpop.f32.mrf.mxu0
    %3116 = vdwg.mxu0
    %3117 = vmatpush.bf16.msra.mxu0 %v2051
    %3118 = vmatpush.bf16.msra.mxu0 %v2045
    %3119 = vmatpush.bf16.msra.mxu0 %v2039
    %3120 = vmatpush.bf16.msra.mxu0 %v2033
    %3121 = vmatpush.bf16.msra.mxu0 %v2027
    %3122 = vmatpush.bf16.msra.mxu0 %v2021
    %3123 = vmatpush.bf16.msra.mxu0 %v2015
    %3124 = vmatpush.bf16.msra.mxu0 %v2009
    %3125 = vmatmul.bf16.gmra.mxu0 %v601
    %v3126 = vpop.f32.mrf.mxu0
    %v3127 = vadd.f32 %v3114, %v3126
    %v3128 = vpop.f32.mrf.mxu0
    %3129 = vdwg.mxu0
    %3130 = vmatpush.bf16.msra.mxu0 %v2099
    %3131 = vmatpush.bf16.msra.mxu0 %v2093
    %3132 = vmatpush.bf16.msra.mxu0 %v2087
    %3133 = vmatpush.bf16.msra.mxu0 %v2081
    %3134 = vmatpush.bf16.msra.mxu0 %v2075
    %3135 = vmatpush.bf16.msra.mxu0 %v2069
    %3136 = vmatpush.bf16.msra.mxu0 %v2063
    %3137 = vmatpush.bf16.msra.mxu0 %v2057
    %3138 = vmatmul.bf16.gmra.mxu0 %v602
    %v3139 = vpop.f32.mrf.mxu0
    %v3140 = vadd.f32 %v3127, %v3139
    %v3141 = vpop.f32.mrf.mxu0
    %3142 = vdwg.mxu0
    %3143 = vmatpush.bf16.msra.mxu0 %v2147
    %3144 = vmatpush.bf16.msra.mxu0 %v2141
    %3145 = vmatpush.bf16.msra.mxu0 %v2135
    %3146 = vmatpush.bf16.msra.mxu0 %v2129
    %3147 = vmatpush.bf16.msra.mxu0 %v2123
    %3148 = vmatpush.bf16.msra.mxu0 %v2117
    %3149 = vmatpush.bf16.msra.mxu0 %v2111
    %3150 = vmatpush.bf16.msra.mxu0 %v2105
    %3151 = vmatmul.bf16.gmra.mxu0 %v603
    %v3152 = vpop.f32.mrf.mxu0
    %v3153 = vadd.f32 %v3140, %v3152
    %v3154 = vpop.f32.mrf.mxu0
    %3155 = vdwg.mxu0
    %vm3156 = vcmp.gt.f32.partialorder %v2633, 0.0
    %vm3157 = vcmp.gt.f32.partialorder %v2737, 0.0
    %vm3158 = vcmp.gt.f32.partialorder %v2841, 0.0
    %vm3159 = vcmp.gt.f32.partialorder %v2945, 0.0
    %vm3160 = vcmp.gt.f32.partialorder %v3049, 0.0
    %vm3161 = vcmp.gt.f32.partialorder %v3153, 0.0
    %v3162 = vmul.f32 %v2633, 0.2
    %v3163 = vmul.f32 %v2737, 0.2
    %v3164 = vmul.f32 %v2841, 0.2
    %v3165 = vmul.f32 %v2945, 0.2
    %v3166 = vmul.f32 %v3049, 0.2
    %v3167 = vmul.f32 %v3153, 0.2
    %v3168 = vsel %vm3156, %v2633, %v3162
    %v3169 = vsel %vm3157, %v2737, %v3163
    %v3170 = vsel %vm3158, %v2841, %v3164
    %v3171 = vsel %vm3159, %v2945, %v3165
    %v3172 = vsel %vm3160, %v3049, %v3166
    %v3173 = vsel %vm3161, %v3153, %v3167
    %3174 = vst [vmem:[%s11] sm:$0xff] %v3168
    %3175 = vst [vmem:[%s11 + $0x8] sm:$0xff] %v3169
    %3176 = vst [vmem:[%s11 + $0x10] sm:$0xff] %v3170
    %3177 = vst [vmem:[%s11 + $0x18] sm:$0xff] %v3171
    %3178 = vst [vmem:[%s11 + $0x20] sm:$0xff] %v3172
    %3179 = vst [vmem:[%s11 + $0x28] sm:$0xff] %v3173
    %s3180 = smul.u32 4, 96
    %s3181 = smul.u32 %s3180, 4
    %s3182 = sshll.u32 %s3181, 4
    %3183 = dma.done [#allocation5], %s3182
    %v3184 = vld [vmem:[#allocation2] sm:$0xff]
    %v3185 = vld [vmem:[#allocation2 + $0x8] sm:$0xff]
    %v3186 = vld [vmem:[#allocation2 + $0x10] sm:$0xff]
    %v3187 = vld [vmem:[#allocation2 + $0x18] sm:$0xff]
    %v3188 = vld [vmem:[#allocation2 + $0x20] sm:$0xff]
    %v3189 = vld [vmem:[#allocation2 + $0x28] sm:$0xff]
    %v3190 = vld [vmem:[#allocation2 + $0x30] sm:$0xff]
    %v3191 = vld [vmem:[#allocation2 + $0x38] sm:$0xff]
    %v3192 = vld [vmem:[#allocation2 + $0x40] sm:$0xff]
    %v3193 = vld [vmem:[#allocation2 + $0x48] sm:$0xff]
    %v3194 = vld [vmem:[#allocation2 + $0x50] sm:$0xff]
    %v3195 = vld [vmem:[#allocation2 + $0x58] sm:$0xff]
    %v3196 = vld [vmem:[#allocation2 + $0x60] sm:$0xff]
    %v3197 = vld [vmem:[#allocation2 + $0x68] sm:$0xff]
    %v3198 = vld [vmem:[#allocation2 + $0x70] sm:$0xff]
    %v3199 = vld [vmem:[#allocation2 + $0x78] sm:$0xff]
    %v3200 = vld [vmem:[#allocation2 + $0x80] sm:$0xff]
    %v3201 = vld [vmem:[#allocation2 + $0x88] sm:$0xff]
    %v3202 = vld [vmem:[#allocation2 + $0x90] sm:$0xff]
    %v3203 = vld [vmem:[#allocation2 + $0x98] sm:$0xff]
    %v3204 = vld [vmem:[#allocation2 + $0xa0] sm:$0xff]
    %v3205 = vld [vmem:[#allocation2 + $0xa8] sm:$0xff]
    %v3206 = vld [vmem:[#allocation2 + $0xb0] sm:$0xff]
    %v3207 = vld [vmem:[#allocation2 + $0xb8] sm:$0xff]
    %v3208 = vld [vmem:[#allocation2 + $0xc0] sm:$0xff]
    %v3209 = vld [vmem:[#allocation2 + $0xc8] sm:$0xff]
    %v3210 = vld [vmem:[#allocation2 + $0xd0] sm:$0xff]
    %v3211 = vld [vmem:[#allocation2 + $0xd8] sm:$0xff]
    %v3212 = vld [vmem:[#allocation2 + $0xe0] sm:$0xff]
    %v3213 = vld [vmem:[#allocation2 + $0xe8] sm:$0xff]
    %v3214 = vld [vmem:[#allocation2 + $0xf0] sm:$0xff]
    %v3215 = vld [vmem:[#allocation2 + $0xf8] sm:$0xff]
    %v3216 = vld [vmem:[#allocation2 + $0x100] sm:$0xff]
    %v3217 = vld [vmem:[#allocation2 + $0x108] sm:$0xff]
    %v3218 = vld [vmem:[#allocation2 + $0x110] sm:$0xff]
    %v3219 = vld [vmem:[#allocation2 + $0x118] sm:$0xff]
    %v3220 = vld [vmem:[#allocation2 + $0x120] sm:$0xff]
    %v3221 = vld [vmem:[#allocation2 + $0x128] sm:$0xff]
    %v3222 = vld [vmem:[#allocation2 + $0x130] sm:$0xff]
    %v3223 = vld [vmem:[#allocation2 + $0x138] sm:$0xff]
    %v3224 = vld [vmem:[#allocation2 + $0x140] sm:$0xff]
    %v3225 = vld [vmem:[#allocation2 + $0x148] sm:$0xff]
    %v3226 = vld [vmem:[#allocation2 + $0x150] sm:$0xff]
    %v3227 = vld [vmem:[#allocation2 + $0x158] sm:$0xff]
    %v3228 = vld [vmem:[#allocation2 + $0x160] sm:$0xff]
    %v3229 = vld [vmem:[#allocation2 + $0x168] sm:$0xff]
    %v3230 = vld [vmem:[#allocation2 + $0x170] sm:$0xff]
    %v3231 = vld [vmem:[#allocation2 + $0x178] sm:$0xff]
    %v3232 = vld [vmem:[#allocation2 + $0x180] sm:$0xff]
    %v3233 = vld [vmem:[#allocation2 + $0x188] sm:$0xff]
    %v3234 = vld [vmem:[#allocation2 + $0x190] sm:$0xff]
    %v3235 = vld [vmem:[#allocation2 + $0x198] sm:$0xff]
    %v3236 = vld [vmem:[#allocation2 + $0x1a0] sm:$0xff]
    %v3237 = vld [vmem:[#allocation2 + $0x1a8] sm:$0xff]
    %v3238 = vld [vmem:[#allocation2 + $0x1b0] sm:$0xff]
    %v3239 = vld [vmem:[#allocation2 + $0x1b8] sm:$0xff]
    %v3240 = vld [vmem:[#allocation2 + $0x1c0] sm:$0xff]
    %v3241 = vld [vmem:[#allocation2 + $0x1c8] sm:$0xff]
    %v3242 = vld [vmem:[#allocation2 + $0x1d0] sm:$0xff]
    %v3243 = vld [vmem:[#allocation2 + $0x1d8] sm:$0xff]
    %v3244 = vld [vmem:[#allocation2 + $0x1e0] sm:$0xff]
    %v3245 = vld [vmem:[#allocation2 + $0x1e8] sm:$0xff]
    %v3246 = vld [vmem:[#allocation2 + $0x1f0] sm:$0xff]
    %v3247 = vld [vmem:[#allocation2 + $0x1f8] sm:$0xff]
    %v3248 = vld [vmem:[#allocation2 + $0x200] sm:$0xff]
    %v3249 = vld [vmem:[#allocation2 + $0x208] sm:$0xff]
    %v3250 = vld [vmem:[#allocation2 + $0x210] sm:$0xff]
    %v3251 = vld [vmem:[#allocation2 + $0x218] sm:$0xff]
    %v3252 = vld [vmem:[#allocation2 + $0x220] sm:$0xff]
    %v3253 = vld [vmem:[#allocation2 + $0x228] sm:$0xff]
    %v3254 = vld [vmem:[#allocation2 + $0x230] sm:$0xff]
    %v3255 = vld [vmem:[#allocation2 + $0x238] sm:$0xff]
    %v3256 = vld [vmem:[#allocation2 + $0x240] sm:$0xff]
    %v3257 = vld [vmem:[#allocation2 + $0x248] sm:$0xff]
    %v3258 = vld [vmem:[#allocation2 + $0x250] sm:$0xff]
    %v3259 = vld [vmem:[#allocation2 + $0x258] sm:$0xff]
    %v3260 = vld [vmem:[#allocation2 + $0x260] sm:$0xff]
    %v3261 = vld [vmem:[#allocation2 + $0x268] sm:$0xff]
    %v3262 = vld [vmem:[#allocation2 + $0x270] sm:$0xff]
    %v3263 = vld [vmem:[#allocation2 + $0x278] sm:$0xff]
    %v3264 = vld [vmem:[#allocation2 + $0x280] sm:$0xff]
    %v3265 = vld [vmem:[#allocation2 + $0x288] sm:$0xff]
    %v3266 = vld [vmem:[#allocation2 + $0x290] sm:$0xff]
    %v3267 = vld [vmem:[#allocation2 + $0x298] sm:$0xff]
    %v3268 = vld [vmem:[#allocation2 + $0x2a0] sm:$0xff]
    %v3269 = vld [vmem:[#allocation2 + $0x2a8] sm:$0xff]
    %v3270 = vld [vmem:[#allocation2 + $0x2b0] sm:$0xff]
    %v3271 = vld [vmem:[#allocation2 + $0x2b8] sm:$0xff]
    %v3272 = vld [vmem:[#allocation2 + $0x2c0] sm:$0xff]
    %v3273 = vld [vmem:[#allocation2 + $0x2c8] sm:$0xff]
    %v3274 = vld [vmem:[#allocation2 + $0x2d0] sm:$0xff]
    %v3275 = vld [vmem:[#allocation2 + $0x2d8] sm:$0xff]
    %v3276 = vld [vmem:[#allocation2 + $0x2e0] sm:$0xff]
    %v3277 = vld [vmem:[#allocation2 + $0x2e8] sm:$0xff]
    %v3278 = vld [vmem:[#allocation2 + $0x2f0] sm:$0xff]
    %v3279 = vld [vmem:[#allocation2 + $0x2f8] sm:$0xff]
    %v3280 = vld [vmem:[#allocation2 + $0x300] sm:$0xff]
    %v3281 = vld [vmem:[#allocation2 + $0x308] sm:$0xff]
    %v3282 = vld [vmem:[#allocation2 + $0x310] sm:$0xff]
    %v3283 = vld [vmem:[#allocation2 + $0x318] sm:$0xff]
    %v3284 = vld [vmem:[#allocation2 + $0x320] sm:$0xff]
    %v3285 = vld [vmem:[#allocation2 + $0x328] sm:$0xff]
    %v3286 = vld [vmem:[#allocation2 + $0x330] sm:$0xff]
    %v3287 = vld [vmem:[#allocation2 + $0x338] sm:$0xff]
    %v3288 = vld [vmem:[#allocation2 + $0x340] sm:$0xff]
    %v3289 = vld [vmem:[#allocation2 + $0x348] sm:$0xff]
    %v3290 = vld [vmem:[#allocation2 + $0x350] sm:$0xff]
    %v3291 = vld [vmem:[#allocation2 + $0x358] sm:$0xff]
    %v3292 = vld [vmem:[#allocation2 + $0x360] sm:$0xff]
    %v3293 = vld [vmem:[#allocation2 + $0x368] sm:$0xff]
    %v3294 = vld [vmem:[#allocation2 + $0x370] sm:$0xff]
    %v3295 = vld [vmem:[#allocation2 + $0x378] sm:$0xff]
    %v3296 = vld [vmem:[#allocation2 + $0x380] sm:$0xff]
    %v3297 = vld [vmem:[#allocation2 + $0x388] sm:$0xff]
    %v3298 = vld [vmem:[#allocation2 + $0x390] sm:$0xff]
    %v3299 = vld [vmem:[#allocation2 + $0x398] sm:$0xff]
    %v3300 = vld [vmem:[#allocation2 + $0x3a0] sm:$0xff]
    %v3301 = vld [vmem:[#allocation2 + $0x3a8] sm:$0xff]
    %v3302 = vld [vmem:[#allocation2 + $0x3b0] sm:$0xff]
    %v3303 = vld [vmem:[#allocation2 + $0x3b8] sm:$0xff]
    %v3304 = vld [vmem:[#allocation2 + $0x3c0] sm:$0xff]
    %v3305 = vld [vmem:[#allocation2 + $0x3c8] sm:$0xff]
    %v3306 = vld [vmem:[#allocation2 + $0x3d0] sm:$0xff]
    %v3307 = vld [vmem:[#allocation2 + $0x3d8] sm:$0xff]
    %v3308 = vld [vmem:[#allocation2 + $0x3e0] sm:$0xff]
    %v3309 = vld [vmem:[#allocation2 + $0x3e8] sm:$0xff]
    %v3310 = vld [vmem:[#allocation2 + $0x3f0] sm:$0xff]
    %v3311 = vld [vmem:[#allocation2 + $0x3f8] sm:$0xff]
    %v3312 = vld [vmem:[#allocation2 + $0x400] sm:$0xff]
    %v3313 = vld [vmem:[#allocation2 + $0x408] sm:$0xff]
    %v3314 = vld [vmem:[#allocation2 + $0x410] sm:$0xff]
    %v3315 = vld [vmem:[#allocation2 + $0x418] sm:$0xff]
    %v3316 = vld [vmem:[#allocation2 + $0x420] sm:$0xff]
    %v3317 = vld [vmem:[#allocation2 + $0x428] sm:$0xff]
    %v3318 = vld [vmem:[#allocation2 + $0x430] sm:$0xff]
    %v3319 = vld [vmem:[#allocation2 + $0x438] sm:$0xff]
    %v3320 = vld [vmem:[#allocation2 + $0x440] sm:$0xff]
    %v3321 = vld [vmem:[#allocation2 + $0x448] sm:$0xff]
    %v3322 = vld [vmem:[#allocation2 + $0x450] sm:$0xff]
    %v3323 = vld [vmem:[#allocation2 + $0x458] sm:$0xff]
    %v3324 = vld [vmem:[#allocation2 + $0x460] sm:$0xff]
    %v3325 = vld [vmem:[#allocation2 + $0x468] sm:$0xff]
    %v3326 = vld [vmem:[#allocation2 + $0x470] sm:$0xff]
    %v3327 = vld [vmem:[#allocation2 + $0x478] sm:$0xff]
    %v3328 = vld [vmem:[#allocation2 + $0x480] sm:$0xff]
    %v3329 = vld [vmem:[#allocation2 + $0x488] sm:$0xff]
    %v3330 = vld [vmem:[#allocation2 + $0x490] sm:$0xff]
    %v3331 = vld [vmem:[#allocation2 + $0x498] sm:$0xff]
    %v3332 = vld [vmem:[#allocation2 + $0x4a0] sm:$0xff]
    %v3333 = vld [vmem:[#allocation2 + $0x4a8] sm:$0xff]
    %v3334 = vld [vmem:[#allocation2 + $0x4b0] sm:$0xff]
    %v3335 = vld [vmem:[#allocation2 + $0x4b8] sm:$0xff]
    %v3336 = vld [vmem:[#allocation2 + $0x4c0] sm:$0xff]
    %v3337 = vld [vmem:[#allocation2 + $0x4c8] sm:$0xff]
    %v3338 = vld [vmem:[#allocation2 + $0x4d0] sm:$0xff]
    %v3339 = vld [vmem:[#allocation2 + $0x4d8] sm:$0xff]
    %v3340 = vld [vmem:[#allocation2 + $0x4e0] sm:$0xff]
    %v3341 = vld [vmem:[#allocation2 + $0x4e8] sm:$0xff]
    %v3342 = vld [vmem:[#allocation2 + $0x4f0] sm:$0xff]
    %v3343 = vld [vmem:[#allocation2 + $0x4f8] sm:$0xff]
    %v3344 = vld [vmem:[#allocation2 + $0x500] sm:$0xff]
    %v3345 = vld [vmem:[#allocation2 + $0x508] sm:$0xff]
    %v3346 = vld [vmem:[#allocation2 + $0x510] sm:$0xff]
    %v3347 = vld [vmem:[#allocation2 + $0x518] sm:$0xff]
    %v3348 = vld [vmem:[#allocation2 + $0x520] sm:$0xff]
    %v3349 = vld [vmem:[#allocation2 + $0x528] sm:$0xff]
    %v3350 = vld [vmem:[#allocation2 + $0x530] sm:$0xff]
    %v3351 = vld [vmem:[#allocation2 + $0x538] sm:$0xff]
    %v3352 = vld [vmem:[#allocation2 + $0x540] sm:$0xff]
    %v3353 = vld [vmem:[#allocation2 + $0x548] sm:$0xff]
    %v3354 = vld [vmem:[#allocation2 + $0x550] sm:$0xff]
    %v3355 = vld [vmem:[#allocation2 + $0x558] sm:$0xff]
    %v3356 = vld [vmem:[#allocation2 + $0x560] sm:$0xff]
    %v3357 = vld [vmem:[#allocation2 + $0x568] sm:$0xff]
    %v3358 = vld [vmem:[#allocation2 + $0x570] sm:$0xff]
    %v3359 = vld [vmem:[#allocation2 + $0x578] sm:$0xff]
    %v3360 = vld [vmem:[#allocation2 + $0x580] sm:$0xff]
    %v3361 = vld [vmem:[#allocation2 + $0x588] sm:$0xff]
    %v3362 = vld [vmem:[#allocation2 + $0x590] sm:$0xff]
    %v3363 = vld [vmem:[#allocation2 + $0x598] sm:$0xff]
    %v3364 = vld [vmem:[#allocation2 + $0x5a0] sm:$0xff]
    %v3365 = vld [vmem:[#allocation2 + $0x5a8] sm:$0xff]
    %v3366 = vld [vmem:[#allocation2 + $0x5b0] sm:$0xff]
    %v3367 = vld [vmem:[#allocation2 + $0x5b8] sm:$0xff]
    %v3368 = vld [vmem:[#allocation2 + $0x5c0] sm:$0xff]
    %v3369 = vld [vmem:[#allocation2 + $0x5c8] sm:$0xff]
    %v3370 = vld [vmem:[#allocation2 + $0x5d0] sm:$0xff]
    %v3371 = vld [vmem:[#allocation2 + $0x5d8] sm:$0xff]
    %v3372 = vld [vmem:[#allocation2 + $0x5e0] sm:$0xff]
    %v3373 = vld [vmem:[#allocation2 + $0x5e8] sm:$0xff]
    %v3374 = vld [vmem:[#allocation2 + $0x5f0] sm:$0xff]
    %v3375 = vld [vmem:[#allocation2 + $0x5f8] sm:$0xff]
    %v3376 = vpack.c.bf16 %v3168, %v3168
    %v3377 = vpack.c.bf16 %v3169, %v3169
    %v3378 = vpack.c.bf16 %v3170, %v3170
    %v3379 = vpack.c.bf16 %v3171, %v3171
    %v3380 = vpack.c.bf16 %v3172, %v3172
    %v3381 = vpack.c.bf16 %v3173, %v3173
    %v3574 = vunpack.c.l.b16 %v3184
    %v3575 = vunpack.c.h.b16 %v3184
    %v3576 = vunpack.c.l.b16 %v3185
    %v3577 = vunpack.c.h.b16 %v3185
    %v3578 = vunpack.c.l.b16 %v3186
    %v3579 = vunpack.c.h.b16 %v3186
    %v3580 = vunpack.c.l.b16 %v3187
    %v3581 = vunpack.c.h.b16 %v3187
    %v3582 = vunpack.c.l.b16 %v3188
    %v3583 = vunpack.c.h.b16 %v3188
    %v3584 = vunpack.c.l.b16 %v3189
    %v3585 = vunpack.c.h.b16 %v3189
    %v3586 = vunpack.c.l.b16 %v3190
    %v3587 = vunpack.c.h.b16 %v3190
    %v3588 = vunpack.c.l.b16 %v3191
    %v3589 = vunpack.c.h.b16 %v3191
    %v3590 = vunpack.c.l.b16 %v3192
    %v3591 = vunpack.c.h.b16 %v3192
    %v3592 = vunpack.c.l.b16 %v3193
    %v3593 = vunpack.c.h.b16 %v3193
    %v3594 = vunpack.c.l.b16 %v3194
    %v3595 = vunpack.c.h.b16 %v3194
    %v3596 = vunpack.c.l.b16 %v3195
    %v3597 = vunpack.c.h.b16 %v3195
    %v3598 = vunpack.c.l.b16 %v3196
    %v3599 = vunpack.c.h.b16 %v3196
    %v3600 = vunpack.c.l.b16 %v3197
    %v3601 = vunpack.c.h.b16 %v3197
    %v3602 = vunpack.c.l.b16 %v3198
    %v3603 = vunpack.c.h.b16 %v3198
    %v3604 = vunpack.c.l.b16 %v3199
    %v3605 = vunpack.c.h.b16 %v3199
    %v3606 = vunpack.c.l.b16 %v3200
    %v3607 = vunpack.c.h.b16 %v3200
    %v3608 = vunpack.c.l.b16 %v3201
    %v3609 = vunpack.c.h.b16 %v3201
    %v3610 = vunpack.c.l.b16 %v3202
    %v3611 = vunpack.c.h.b16 %v3202
    %v3612 = vunpack.c.l.b16 %v3203
    %v3613 = vunpack.c.h.b16 %v3203
    %v3614 = vunpack.c.l.b16 %v3204
    %v3615 = vunpack.c.h.b16 %v3204
    %v3616 = vunpack.c.l.b16 %v3205
    %v3617 = vunpack.c.h.b16 %v3205
    %v3618 = vunpack.c.l.b16 %v3206
    %v3619 = vunpack.c.h.b16 %v3206
    %v3620 = vunpack.c.l.b16 %v3207
    %v3621 = vunpack.c.h.b16 %v3207
    %v3622 = vunpack.c.l.b16 %v3208
    %v3623 = vunpack.c.h.b16 %v3208
    %v3624 = vunpack.c.l.b16 %v3209
    %v3625 = vunpack.c.h.b16 %v3209
    %v3626 = vunpack.c.l.b16 %v3210
    %v3627 = vunpack.c.h.b16 %v3210
    %v3628 = vunpack.c.l.b16 %v3211
    %v3629 = vunpack.c.h.b16 %v3211
    %v3630 = vunpack.c.l.b16 %v3212
    %v3631 = vunpack.c.h.b16 %v3212
    %v3632 = vunpack.c.l.b16 %v3213
    %v3633 = vunpack.c.h.b16 %v3213
    %v3634 = vunpack.c.l.b16 %v3214
    %v3635 = vunpack.c.h.b16 %v3214
    %v3636 = vunpack.c.l.b16 %v3215
    %v3637 = vunpack.c.h.b16 %v3215
    %v3638 = vunpack.c.l.b16 %v3216
    %v3639 = vunpack.c.h.b16 %v3216
    %v3640 = vunpack.c.l.b16 %v3217
    %v3641 = vunpack.c.h.b16 %v3217
    %v3642 = vunpack.c.l.b16 %v3218
    %v3643 = vunpack.c.h.b16 %v3218
    %v3644 = vunpack.c.l.b16 %v3219
    %v3645 = vunpack.c.h.b16 %v3219
    %v3646 = vunpack.c.l.b16 %v3220
    %v3647 = vunpack.c.h.b16 %v3220
    %v3648 = vunpack.c.l.b16 %v3221
    %v3649 = vunpack.c.h.b16 %v3221
    %v3650 = vunpack.c.l.b16 %v3222
    %v3651 = vunpack.c.h.b16 %v3222
    %v3652 = vunpack.c.l.b16 %v3223
    %v3653 = vunpack.c.h.b16 %v3223
    %v3654 = vunpack.c.l.b16 %v3224
    %v3655 = vunpack.c.h.b16 %v3224
    %v3656 = vunpack.c.l.b16 %v3225
    %v3657 = vunpack.c.h.b16 %v3225
    %v3658 = vunpack.c.l.b16 %v3226
    %v3659 = vunpack.c.h.b16 %v3226
    %v3660 = vunpack.c.l.b16 %v3227
    %v3661 = vunpack.c.h.b16 %v3227
    %v3662 = vunpack.c.l.b16 %v3228
    %v3663 = vunpack.c.h.b16 %v3228
    %v3664 = vunpack.c.l.b16 %v3229
    %v3665 = vunpack.c.h.b16 %v3229
    %v3666 = vunpack.c.l.b16 %v3230
    %v3667 = vunpack.c.h.b16 %v3230
    %v3668 = vunpack.c.l.b16 %v3231
    %v3669 = vunpack.c.h.b16 %v3231
    %v3670 = vunpack.c.l.b16 %v3232
    %v3671 = vunpack.c.h.b16 %v3232
    %v3672 = vunpack.c.l.b16 %v3233
    %v3673 = vunpack.c.h.b16 %v3233
    %v3674 = vunpack.c.l.b16 %v3234
    %v3675 = vunpack.c.h.b16 %v3234
    %v3676 = vunpack.c.l.b16 %v3235
    %v3677 = vunpack.c.h.b16 %v3235
    %v3678 = vunpack.c.l.b16 %v3236
    %v3679 = vunpack.c.h.b16 %v3236
    %v3680 = vunpack.c.l.b16 %v3237
    %v3681 = vunpack.c.h.b16 %v3237
    %v3682 = vunpack.c.l.b16 %v3238
    %v3683 = vunpack.c.h.b16 %v3238
    %v3684 = vunpack.c.l.b16 %v3239
    %v3685 = vunpack.c.h.b16 %v3239
    %v3686 = vunpack.c.l.b16 %v3240
    %v3687 = vunpack.c.h.b16 %v3240
    %v3688 = vunpack.c.l.b16 %v3241
    %v3689 = vunpack.c.h.b16 %v3241
    %v3690 = vunpack.c.l.b16 %v3242
    %v3691 = vunpack.c.h.b16 %v3242
    %v3692 = vunpack.c.l.b16 %v3243
    %v3693 = vunpack.c.h.b16 %v3243
    %v3694 = vunpack.c.l.b16 %v3244
    %v3695 = vunpack.c.h.b16 %v3244
    %v3696 = vunpack.c.l.b16 %v3245
    %v3697 = vunpack.c.h.b16 %v3245
    %v3698 = vunpack.c.l.b16 %v3246
    %v3699 = vunpack.c.h.b16 %v3246
    %v3700 = vunpack.c.l.b16 %v3247
    %v3701 = vunpack.c.h.b16 %v3247
    %v3702 = vunpack.c.l.b16 %v3248
    %v3703 = vunpack.c.h.b16 %v3248
    %v3704 = vunpack.c.l.b16 %v3249
    %v3705 = vunpack.c.h.b16 %v3249
    %v3706 = vunpack.c.l.b16 %v3250
    %v3707 = vunpack.c.h.b16 %v3250
    %v3708 = vunpack.c.l.b16 %v3251
    %v3709 = vunpack.c.h.b16 %v3251
    %v3710 = vunpack.c.l.b16 %v3252
    %v3711 = vunpack.c.h.b16 %v3252
    %v3712 = vunpack.c.l.b16 %v3253
    %v3713 = vunpack.c.h.b16 %v3253
    %v3714 = vunpack.c.l.b16 %v3254
    %v3715 = vunpack.c.h.b16 %v3254
    %v3716 = vunpack.c.l.b16 %v3255
    %v3717 = vunpack.c.h.b16 %v3255
    %v3718 = vunpack.c.l.b16 %v3256
    %v3719 = vunpack.c.h.b16 %v3256
    %v3720 = vunpack.c.l.b16 %v3257
    %v3721 = vunpack.c.h.b16 %v3257
    %v3722 = vunpack.c.l.b16 %v3258
    %v3723 = vunpack.c.h.b16 %v3258
    %v3724 = vunpack.c.l.b16 %v3259
    %v3725 = vunpack.c.h.b16 %v3259
    %v3726 = vunpack.c.l.b16 %v3260
    %v3727 = vunpack.c.h.b16 %v3260
    %v3728 = vunpack.c.l.b16 %v3261
    %v3729 = vunpack.c.h.b16 %v3261
    %v3730 = vunpack.c.l.b16 %v3262
    %v3731 = vunpack.c.h.b16 %v3262
    %v3732 = vunpack.c.l.b16 %v3263
    %v3733 = vunpack.c.h.b16 %v3263
    %v3734 = vunpack.c.l.b16 %v3264
    %v3735 = vunpack.c.h.b16 %v3264
    %v3736 = vunpack.c.l.b16 %v3265
    %v3737 = vunpack.c.h.b16 %v3265
    %v3738 = vunpack.c.l.b16 %v3266
    %v3739 = vunpack.c.h.b16 %v3266
    %v3740 = vunpack.c.l.b16 %v3267
    %v3741 = vunpack.c.h.b16 %v3267
    %v3742 = vunpack.c.l.b16 %v3268
    %v3743 = vunpack.c.h.b16 %v3268
    %v3744 = vunpack.c.l.b16 %v3269
    %v3745 = vunpack.c.h.b16 %v3269
    %v3746 = vunpack.c.l.b16 %v3270
    %v3747 = vunpack.c.h.b16 %v3270
    %v3748 = vunpack.c.l.b16 %v3271
    %v3749 = vunpack.c.h.b16 %v3271
    %v3750 = vunpack.c.l.b16 %v3272
    %v3751 = vunpack.c.h.b16 %v3272
    %v3752 = vunpack.c.l.b16 %v3273
    %v3753 = vunpack.c.h.b16 %v3273
    %v3754 = vunpack.c.l.b16 %v3274
    %v3755 = vunpack.c.h.b16 %v3274
    %v3756 = vunpack.c.l.b16 %v3275
    %v3757 = vunpack.c.h.b16 %v3275
    %v3758 = vunpack.c.l.b16 %v3276
    %v3759 = vunpack.c.h.b16 %v3276
    %v3760 = vunpack.c.l.b16 %v3277
    %v3761 = vunpack.c.h.b16 %v3277
    %v3762 = vunpack.c.l.b16 %v3278
    %v3763 = vunpack.c.h.b16 %v3278
    %v3764 = vunpack.c.l.b16 %v3279
    %v3765 = vunpack.c.h.b16 %v3279
    %v3766 = vunpack.c.l.b16 %v3280
    %v3767 = vunpack.c.h.b16 %v3280
    %v3768 = vunpack.c.l.b16 %v3281
    %v3769 = vunpack.c.h.b16 %v3281
    %v3770 = vunpack.c.l.b16 %v3282
    %v3771 = vunpack.c.h.b16 %v3282
    %v3772 = vunpack.c.l.b16 %v3283
    %v3773 = vunpack.c.h.b16 %v3283
    %v3774 = vunpack.c.l.b16 %v3284
    %v3775 = vunpack.c.h.b16 %v3284
    %v3776 = vunpack.c.l.b16 %v3285
    %v3777 = vunpack.c.h.b16 %v3285
    %v3778 = vunpack.c.l.b16 %v3286
    %v3779 = vunpack.c.h.b16 %v3286
    %v3780 = vunpack.c.l.b16 %v3287
    %v3781 = vunpack.c.h.b16 %v3287
    %v3782 = vunpack.c.l.b16 %v3288
    %v3783 = vunpack.c.h.b16 %v3288
    %v3784 = vunpack.c.l.b16 %v3289
    %v3785 = vunpack.c.h.b16 %v3289
    %v3786 = vunpack.c.l.b16 %v3290
    %v3787 = vunpack.c.h.b16 %v3290
    %v3788 = vunpack.c.l.b16 %v3291
    %v3789 = vunpack.c.h.b16 %v3291
    %v3790 = vunpack.c.l.b16 %v3292
    %v3791 = vunpack.c.h.b16 %v3292
    %v3792 = vunpack.c.l.b16 %v3293
    %v3793 = vunpack.c.h.b16 %v3293
    %v3794 = vunpack.c.l.b16 %v3294
    %v3795 = vunpack.c.h.b16 %v3294
    %v3796 = vunpack.c.l.b16 %v3295
    %v3797 = vunpack.c.h.b16 %v3295
    %v3798 = vunpack.c.l.b16 %v3296
    %v3799 = vunpack.c.h.b16 %v3296
    %v3800 = vunpack.c.l.b16 %v3297
    %v3801 = vunpack.c.h.b16 %v3297
    %v3802 = vunpack.c.l.b16 %v3298
    %v3803 = vunpack.c.h.b16 %v3298
    %v3804 = vunpack.c.l.b16 %v3299
    %v3805 = vunpack.c.h.b16 %v3299
    %v3806 = vunpack.c.l.b16 %v3300
    %v3807 = vunpack.c.h.b16 %v3300
    %v3808 = vunpack.c.l.b16 %v3301
    %v3809 = vunpack.c.h.b16 %v3301
    %v3810 = vunpack.c.l.b16 %v3302
    %v3811 = vunpack.c.h.b16 %v3302
    %v3812 = vunpack.c.l.b16 %v3303
    %v3813 = vunpack.c.h.b16 %v3303
    %v3814 = vunpack.c.l.b16 %v3304
    %v3815 = vunpack.c.h.b16 %v3304
    %v3816 = vunpack.c.l.b16 %v3305
    %v3817 = vunpack.c.h.b16 %v3305
    %v3818 = vunpack.c.l.b16 %v3306
    %v3819 = vunpack.c.h.b16 %v3306
    %v3820 = vunpack.c.l.b16 %v3307
    %v3821 = vunpack.c.h.b16 %v3307
    %v3822 = vunpack.c.l.b16 %v3308
    %v3823 = vunpack.c.h.b16 %v3308
    %v3824 = vunpack.c.l.b16 %v3309
    %v3825 = vunpack.c.h.b16 %v3309
    %v3826 = vunpack.c.l.b16 %v3310
    %v3827 = vunpack.c.h.b16 %v3310
    %v3828 = vunpack.c.l.b16 %v3311
    %v3829 = vunpack.c.h.b16 %v3311
    %v3830 = vunpack.c.l.b16 %v3312
    %v3831 = vunpack.c.h.b16 %v3312
    %v3832 = vunpack.c.l.b16 %v3313
    %v3833 = vunpack.c.h.b16 %v3313
    %v3834 = vunpack.c.l.b16 %v3314
    %v3835 = vunpack.c.h.b16 %v3314
    %v3836 = vunpack.c.l.b16 %v3315
    %v3837 = vunpack.c.h.b16 %v3315
    %v3838 = vunpack.c.l.b16 %v3316
    %v3839 = vunpack.c.h.b16 %v3316
    %v3840 = vunpack.c.l.b16 %v3317
    %v3841 = vunpack.c.h.b16 %v3317
    %v3842 = vunpack.c.l.b16 %v3318
    %v3843 = vunpack.c.h.b16 %v3318
    %v3844 = vunpack.c.l.b16 %v3319
    %v3845 = vunpack.c.h.b16 %v3319
    %v3846 = vunpack.c.l.b16 %v3320
    %v3847 = vunpack.c.h.b16 %v3320
    %v3848 = vunpack.c.l.b16 %v3321
    %v3849 = vunpack.c.h.b16 %v3321
    %v3850 = vunpack.c.l.b16 %v3322
    %v3851 = vunpack.c.h.b16 %v3322
    %v3852 = vunpack.c.l.b16 %v3323
    %v3853 = vunpack.c.h.b16 %v3323
    %v3854 = vunpack.c.l.b16 %v3324
    %v3855 = vunpack.c.h.b16 %v3324
    %v3856 = vunpack.c.l.b16 %v3325
    %v3857 = vunpack.c.h.b16 %v3325
    %v3858 = vunpack.c.l.b16 %v3326
    %v3859 = vunpack.c.h.b16 %v3326
    %v3860 = vunpack.c.l.b16 %v3327
    %v3861 = vunpack.c.h.b16 %v3327
    %v3862 = vunpack.c.l.b16 %v3328
    %v3863 = vunpack.c.h.b16 %v3328
    %v3864 = vunpack.c.l.b16 %v3329
    %v3865 = vunpack.c.h.b16 %v3329
    %v3866 = vunpack.c.l.b16 %v3330
    %v3867 = vunpack.c.h.b16 %v3330
    %v3868 = vunpack.c.l.b16 %v3331
    %v3869 = vunpack.c.h.b16 %v3331
    %v3870 = vunpack.c.l.b16 %v3332
    %v3871 = vunpack.c.h.b16 %v3332
    %v3872 = vunpack.c.l.b16 %v3333
    %v3873 = vunpack.c.h.b16 %v3333
    %v3874 = vunpack.c.l.b16 %v3334
    %v3875 = vunpack.c.h.b16 %v3334
    %v3876 = vunpack.c.l.b16 %v3335
    %v3877 = vunpack.c.h.b16 %v3335
    %v3878 = vunpack.c.l.b16 %v3336
    %v3879 = vunpack.c.h.b16 %v3336
    %v3880 = vunpack.c.l.b16 %v3337
    %v3881 = vunpack.c.h.b16 %v3337
    %v3882 = vunpack.c.l.b16 %v3338
    %v3883 = vunpack.c.h.b16 %v3338
    %v3884 = vunpack.c.l.b16 %v3339
    %v3885 = vunpack.c.h.b16 %v3339
    %v3886 = vunpack.c.l.b16 %v3340
    %v3887 = vunpack.c.h.b16 %v3340
    %v3888 = vunpack.c.l.b16 %v3341
    %v3889 = vunpack.c.h.b16 %v3341
    %v3890 = vunpack.c.l.b16 %v3342
    %v3891 = vunpack.c.h.b16 %v3342
    %v3892 = vunpack.c.l.b16 %v3343
    %v3893 = vunpack.c.h.b16 %v3343
    %v3894 = vunpack.c.l.b16 %v3344
    %v3895 = vunpack.c.h.b16 %v3344
    %v3896 = vunpack.c.l.b16 %v3345
    %v3897 = vunpack.c.h.b16 %v3345
    %v3898 = vunpack.c.l.b16 %v3346
    %v3899 = vunpack.c.h.b16 %v3346
    %v3900 = vunpack.c.l.b16 %v3347
    %v3901 = vunpack.c.h.b16 %v3347
    %v3902 = vunpack.c.l.b16 %v3348
    %v3903 = vunpack.c.h.b16 %v3348
    %v3904 = vunpack.c.l.b16 %v3349
    %v3905 = vunpack.c.h.b16 %v3349
    %v3906 = vunpack.c.l.b16 %v3350
    %v3907 = vunpack.c.h.b16 %v3350
    %v3908 = vunpack.c.l.b16 %v3351
    %v3909 = vunpack.c.h.b16 %v3351
    %v3910 = vunpack.c.l.b16 %v3352
    %v3911 = vunpack.c.h.b16 %v3352
    %v3912 = vunpack.c.l.b16 %v3353
    %v3913 = vunpack.c.h.b16 %v3353
    %v3914 = vunpack.c.l.b16 %v3354
    %v3915 = vunpack.c.h.b16 %v3354
    %v3916 = vunpack.c.l.b16 %v3355
    %v3917 = vunpack.c.h.b16 %v3355
    %v3918 = vunpack.c.l.b16 %v3356
    %v3919 = vunpack.c.h.b16 %v3356
    %v3920 = vunpack.c.l.b16 %v3357
    %v3921 = vunpack.c.h.b16 %v3357
    %v3922 = vunpack.c.l.b16 %v3358
    %v3923 = vunpack.c.h.b16 %v3358
    %v3924 = vunpack.c.l.b16 %v3359
    %v3925 = vunpack.c.h.b16 %v3359
    %v3926 = vunpack.c.l.b16 %v3360
    %v3927 = vunpack.c.h.b16 %v3360
    %v3928 = vunpack.c.l.b16 %v3361
    %v3929 = vunpack.c.h.b16 %v3361
    %v3930 = vunpack.c.l.b16 %v3362
    %v3931 = vunpack.c.h.b16 %v3362
    %v3932 = vunpack.c.l.b16 %v3363
    %v3933 = vunpack.c.h.b16 %v3363
    %v3934 = vunpack.c.l.b16 %v3364
    %v3935 = vunpack.c.h.b16 %v3364
    %v3936 = vunpack.c.l.b16 %v3365
    %v3937 = vunpack.c.h.b16 %v3365
    %v3938 = vunpack.c.l.b16 %v3366
    %v3939 = vunpack.c.h.b16 %v3366
    %v3940 = vunpack.c.l.b16 %v3367
    %v3941 = vunpack.c.h.b16 %v3367
    %v3942 = vunpack.c.l.b16 %v3368
    %v3943 = vunpack.c.h.b16 %v3368
    %v3944 = vunpack.c.l.b16 %v3369
    %v3945 = vunpack.c.h.b16 %v3369
    %v3946 = vunpack.c.l.b16 %v3370
    %v3947 = vunpack.c.h.b16 %v3370
    %v3948 = vunpack.c.l.b16 %v3371
    %v3949 = vunpack.c.h.b16 %v3371
    %v3950 = vunpack.c.l.b16 %v3372
    %v3951 = vunpack.c.h.b16 %v3372
    %v3952 = vunpack.c.l.b16 %v3373
    %v3953 = vunpack.c.h.b16 %v3373
    %v3954 = vunpack.c.l.b16 %v3374
    %v3955 = vunpack.c.h.b16 %v3374
    %v3956 = vunpack.c.l.b16 %v3375
    %v3957 = vunpack.c.h.b16 %v3375
    %v3958 = vpack.c.b16 %v3578, %v3574
    %v3959 = vpack.c.b16 %v3579, %v3575
    %v3960 = vpack.c.b16 %v3580, %v3576
    %v3961 = vpack.c.b16 %v3581, %v3577
    %v3962 = vpack.c.b16 %v3586, %v3582
    %v3963 = vpack.c.b16 %v3587, %v3583
    %v3964 = vpack.c.b16 %v3588, %v3584
    %v3965 = vpack.c.b16 %v3589, %v3585
    %v3966 = vpack.c.b16 %v3594, %v3590
    %v3967 = vpack.c.b16 %v3595, %v3591
    %v3968 = vpack.c.b16 %v3596, %v3592
    %v3969 = vpack.c.b16 %v3597, %v3593
    %v3970 = vpack.c.b16 %v3602, %v3598
    %v3971 = vpack.c.b16 %v3603, %v3599
    %v3972 = vpack.c.b16 %v3604, %v3600
    %v3973 = vpack.c.b16 %v3605, %v3601
    %v3974 = vpack.c.b16 %v3610, %v3606
    %v3975 = vpack.c.b16 %v3611, %v3607
    %v3976 = vpack.c.b16 %v3612, %v3608
    %v3977 = vpack.c.b16 %v3613, %v3609
    %v3978 = vpack.c.b16 %v3618, %v3614
    %v3979 = vpack.c.b16 %v3619, %v3615
    %v3980 = vpack.c.b16 %v3620, %v3616
    %v3981 = vpack.c.b16 %v3621, %v3617
    %v3982 = vpack.c.b16 %v3626, %v3622
    %v3983 = vpack.c.b16 %v3627, %v3623
    %v3984 = vpack.c.b16 %v3628, %v3624
    %v3985 = vpack.c.b16 %v3629, %v3625
    %v3986 = vpack.c.b16 %v3634, %v3630
    %v3987 = vpack.c.b16 %v3635, %v3631
    %v3988 = vpack.c.b16 %v3636, %v3632
    %v3989 = vpack.c.b16 %v3637, %v3633
    %v3990 = vpack.c.b16 %v3642, %v3638
    %v3991 = vpack.c.b16 %v3643, %v3639
    %v3992 = vpack.c.b16 %v3644, %v3640
    %v3993 = vpack.c.b16 %v3645, %v3641
    %v3994 = vpack.c.b16 %v3650, %v3646
    %v3995 = vpack.c.b16 %v3651, %v3647
    %v3996 = vpack.c.b16 %v3652, %v3648
    %v3997 = vpack.c.b16 %v3653, %v3649
    %v3998 = vpack.c.b16 %v3658, %v3654
    %v3999 = vpack.c.b16 %v3659, %v3655
    %v4000 = vpack.c.b16 %v3660, %v3656
    %v4001 = vpack.c.b16 %v3661, %v3657
    %v4002 = vpack.c.b16 %v3666, %v3662
    %v4003 = vpack.c.b16 %v3667, %v3663
    %v4004 = vpack.c.b16 %v3668, %v3664
    %v4005 = vpack.c.b16 %v3669, %v3665
    %v4006 = vpack.c.b16 %v3674, %v3670
    %v4007 = vpack.c.b16 %v3675, %v3671
    %v4008 = vpack.c.b16 %v3676, %v3672
    %v4009 = vpack.c.b16 %v3677, %v3673
    %v4010 = vpack.c.b16 %v3682, %v3678
    %v4011 = vpack.c.b16 %v3683, %v3679
    %v4012 = vpack.c.b16 %v3684, %v3680
    %v4013 = vpack.c.b16 %v3685, %v3681
    %v4014 = vpack.c.b16 %v3690, %v3686
    %v4015 = vpack.c.b16 %v3691, %v3687
    %v4016 = vpack.c.b16 %v3692, %v3688
    %v4017 = vpack.c.b16 %v3693, %v3689
    %v4018 = vpack.c.b16 %v3698, %v3694
    %v4019 = vpack.c.b16 %v3699, %v3695
    %v4020 = vpack.c.b16 %v3700, %v3696
    %v4021 = vpack.c.b16 %v3701, %v3697
    %v4022 = vpack.c.b16 %v3706, %v3702
    %v4023 = vpack.c.b16 %v3707, %v3703
    %v4024 = vpack.c.b16 %v3708, %v3704
    %v4025 = vpack.c.b16 %v3709, %v3705
    %v4026 = vpack.c.b16 %v3714, %v3710
    %v4027 = vpack.c.b16 %v3715, %v3711
    %v4028 = vpack.c.b16 %v3716, %v3712
    %v4029 = vpack.c.b16 %v3717, %v3713
    %v4030 = vpack.c.b16 %v3722, %v3718
    %v4031 = vpack.c.b16 %v3723, %v3719
    %v4032 = vpack.c.b16 %v3724, %v3720
    %v4033 = vpack.c.b16 %v3725, %v3721
    %v4034 = vpack.c.b16 %v3730, %v3726
    %v4035 = vpack.c.b16 %v3731, %v3727
    %v4036 = vpack.c.b16 %v3732, %v3728
    %v4037 = vpack.c.b16 %v3733, %v3729
    %v4038 = vpack.c.b16 %v3738, %v3734
    %v4039 = vpack.c.b16 %v3739, %v3735
    %v4040 = vpack.c.b16 %v3740, %v3736
    %v4041 = vpack.c.b16 %v3741, %v3737
    %v4042 = vpack.c.b16 %v3746, %v3742
    %v4043 = vpack.c.b16 %v3747, %v3743
    %v4044 = vpack.c.b16 %v3748, %v3744
    %v4045 = vpack.c.b16 %v3749, %v3745
    %v4046 = vpack.c.b16 %v3754, %v3750
    %v4047 = vpack.c.b16 %v3755, %v3751
    %v4048 = vpack.c.b16 %v3756, %v3752
    %v4049 = vpack.c.b16 %v3757, %v3753
    %v4050 = vpack.c.b16 %v3762, %v3758
    %v4051 = vpack.c.b16 %v3763, %v3759
    %v4052 = vpack.c.b16 %v3764, %v3760
    %v4053 = vpack.c.b16 %v3765, %v3761
    %v4054 = vpack.c.b16 %v3770, %v3766
    %v4055 = vpack.c.b16 %v3771, %v3767
    %v4056 = vpack.c.b16 %v3772, %v3768
    %v4057 = vpack.c.b16 %v3773, %v3769
    %v4058 = vpack.c.b16 %v3778, %v3774
    %v4059 = vpack.c.b16 %v3779, %v3775
    %v4060 = vpack.c.b16 %v3780, %v3776
    %v4061 = vpack.c.b16 %v3781, %v3777
    %v4062 = vpack.c.b16 %v3786, %v3782
    %v4063 = vpack.c.b16 %v3787, %v3783
    %v4064 = vpack.c.b16 %v3788, %v3784
    %v4065 = vpack.c.b16 %v3789, %v3785
    %v4066 = vpack.c.b16 %v3794, %v3790
    %v4067 = vpack.c.b16 %v3795, %v3791
    %v4068 = vpack.c.b16 %v3796, %v3792
    %v4069 = vpack.c.b16 %v3797, %v3793
    %v4070 = vpack.c.b16 %v3802, %v3798
    %v4071 = vpack.c.b16 %v3803, %v3799
    %v4072 = vpack.c.b16 %v3804, %v3800
    %v4073 = vpack.c.b16 %v3805, %v3801
    %v4074 = vpack.c.b16 %v3810, %v3806
    %v4075 = vpack.c.b16 %v3811, %v3807
    %v4076 = vpack.c.b16 %v3812, %v3808
    %v4077 = vpack.c.b16 %v3813, %v3809
    %v4078 = vpack.c.b16 %v3818, %v3814
    %v4079 = vpack.c.b16 %v3819, %v3815
    %v4080 = vpack.c.b16 %v3820, %v3816
    %v4081 = vpack.c.b16 %v3821, %v3817
    %v4082 = vpack.c.b16 %v3826, %v3822
    %v4083 = vpack.c.b16 %v3827, %v3823
    %v4084 = vpack.c.b16 %v3828, %v3824
    %v4085 = vpack.c.b16 %v3829, %v3825
    %v4086 = vpack.c.b16 %v3834, %v3830
    %v4087 = vpack.c.b16 %v3835, %v3831
    %v4088 = vpack.c.b16 %v3836, %v3832
    %v4089 = vpack.c.b16 %v3837, %v3833
    %v4090 = vpack.c.b16 %v3842, %v3838
    %v4091 = vpack.c.b16 %v3843, %v3839
    %v4092 = vpack.c.b16 %v3844, %v3840
    %v4093 = vpack.c.b16 %v3845, %v3841
    %v4094 = vpack.c.b16 %v3850, %v3846
    %v4095 = vpack.c.b16 %v3851, %v3847
    %v4096 = vpack.c.b16 %v3852, %v3848
    %v4097 = vpack.c.b16 %v3853, %v3849
    %v4098 = vpack.c.b16 %v3858, %v3854
    %v4099 = vpack.c.b16 %v3859, %v3855
    %v4100 = vpack.c.b16 %v3860, %v3856
    %v4101 = vpack.c.b16 %v3861, %v3857
    %v4102 = vpack.c.b16 %v3866, %v3862
    %v4103 = vpack.c.b16 %v3867, %v3863
    %v4104 = vpack.c.b16 %v3868, %v3864
    %v4105 = vpack.c.b16 %v3869, %v3865
    %v4106 = vpack.c.b16 %v3874, %v3870
    %v4107 = vpack.c.b16 %v3875, %v3871
    %v4108 = vpack.c.b16 %v3876, %v3872
    %v4109 = vpack.c.b16 %v3877, %v3873
    %v4110 = vpack.c.b16 %v3882, %v3878
    %v4111 = vpack.c.b16 %v3883, %v3879
    %v4112 = vpack.c.b16 %v3884, %v3880
    %v4113 = vpack.c.b16 %v3885, %v3881
    %v4114 = vpack.c.b16 %v3890, %v3886
    %v4115 = vpack.c.b16 %v3891, %v3887
    %v4116 = vpack.c.b16 %v3892, %v3888
    %v4117 = vpack.c.b16 %v3893, %v3889
    %v4118 = vpack.c.b16 %v3898, %v3894
    %v4119 = vpack.c.b16 %v3899, %v3895
    %v4120 = vpack.c.b16 %v3900, %v3896
    %v4121 = vpack.c.b16 %v3901, %v3897
    %v4122 = vpack.c.b16 %v3906, %v3902
    %v4123 = vpack.c.b16 %v3907, %v3903
    %v4124 = vpack.c.b16 %v3908, %v3904
    %v4125 = vpack.c.b16 %v3909, %v3905
    %v4126 = vpack.c.b16 %v3914, %v3910
    %v4127 = vpack.c.b16 %v3915, %v3911
    %v4128 = vpack.c.b16 %v3916, %v3912
    %v4129 = vpack.c.b16 %v3917, %v3913
    %v4130 = vpack.c.b16 %v3922, %v3918
    %v4131 = vpack.c.b16 %v3923, %v3919
    %v4132 = vpack.c.b16 %v3924, %v3920
    %v4133 = vpack.c.b16 %v3925, %v3921
    %v4134 = vpack.c.b16 %v3930, %v3926
    %v4135 = vpack.c.b16 %v3931, %v3927
    %v4136 = vpack.c.b16 %v3932, %v3928
    %v4137 = vpack.c.b16 %v3933, %v3929
    %v4138 = vpack.c.b16 %v3938, %v3934
    %v4139 = vpack.c.b16 %v3939, %v3935
    %v4140 = vpack.c.b16 %v3940, %v3936
    %v4141 = vpack.c.b16 %v3941, %v3937
    %v4142 = vpack.c.b16 %v3946, %v3942
    %v4143 = vpack.c.b16 %v3947, %v3943
    %v4144 = vpack.c.b16 %v3948, %v3944
    %v4145 = vpack.c.b16 %v3949, %v3945
    %v4146 = vpack.c.b16 %v3954, %v3950
    %v4147 = vpack.c.b16 %v3955, %v3951
    %v4148 = vpack.c.b16 %v3956, %v3952
    %v4149 = vpack.c.b16 %v3957, %v3953
    %4342 = vmatpush.bf16.msra.mxu0 %v3986
    %4343 = vmatpush.bf16.msra.mxu0 %v3982
    %4344 = vmatpush.bf16.msra.mxu0 %v3978
    %4345 = vmatpush.bf16.msra.mxu0 %v3974
    %4346 = vmatpush.bf16.msra.mxu0 %v3970
    %4347 = vmatpush.bf16.msra.mxu0 %v3966
    %4348 = vmatpush.bf16.msra.mxu0 %v3962
    %4349 = vmatpush.bf16.msra.mxu0 %v3958
    %4350 = vmatmul.bf16.gmra.mxu0 %v3376
    %v4351 = vpop.f32.mrf.mxu0
    %v4352 = vadd.f32 0.0, %v4351
    %v4353 = vpop.f32.mrf.mxu0
    %4354 = vdwg.mxu0
    %4355 = vmatpush.bf16.msra.mxu0 %v4018
    %4356 = vmatpush.bf16.msra.mxu0 %v4014
    %4357 = vmatpush.bf16.msra.mxu0 %v4010
    %4358 = vmatpush.bf16.msra.mxu0 %v4006
    %4359 = vmatpush.bf16.msra.mxu0 %v4002
    %4360 = vmatpush.bf16.msra.mxu0 %v3998
    %4361 = vmatpush.bf16.msra.mxu0 %v3994
    %4362 = vmatpush.bf16.msra.mxu0 %v3990
    %4363 = vmatmul.bf16.gmra.mxu0 %v3377
    %v4364 = vpop.f32.mrf.mxu0
    %v4365 = vadd.f32 %v4352, %v4364
    %v4366 = vpop.f32.mrf.mxu0
    %4367 = vdwg.mxu0
    %4368 = vmatpush.bf16.msra.mxu0 %v4050
    %4369 = vmatpush.bf16.msra.mxu0 %v4046
    %4370 = vmatpush.bf16.msra.mxu0 %v4042
    %4371 = vmatpush.bf16.msra.mxu0 %v4038
    %4372 = vmatpush.bf16.msra.mxu0 %v4034
    %4373 = vmatpush.bf16.msra.mxu0 %v4030
    %4374 = vmatpush.bf16.msra.mxu0 %v4026
    %4375 = vmatpush.bf16.msra.mxu0 %v4022
    %4376 = vmatmul.bf16.gmra.mxu0 %v3378
    %v4377 = vpop.f32.mrf.mxu0
    %v4378 = vadd.f32 %v4365, %v4377
    %v4379 = vpop.f32.mrf.mxu0
    %4380 = vdwg.mxu0
    %4381 = vmatpush.bf16.msra.mxu0 %v4082
    %4382 = vmatpush.bf16.msra.mxu0 %v4078
    %4383 = vmatpush.bf16.msra.mxu0 %v4074
    %4384 = vmatpush.bf16.msra.mxu0 %v4070
    %4385 = vmatpush.bf16.msra.mxu0 %v4066
    %4386 = vmatpush.bf16.msra.mxu0 %v4062
    %4387 = vmatpush.bf16.msra.mxu0 %v4058
    %4388 = vmatpush.bf16.msra.mxu0 %v4054
    %4389 = vmatmul.bf16.gmra.mxu0 %v3379
    %v4390 = vpop.f32.mrf.mxu0
    %v4391 = vadd.f32 %v4378, %v4390
    %v4392 = vpop.f32.mrf.mxu0
    %4393 = vdwg.mxu0
    %4394 = vmatpush.bf16.msra.mxu0 %v4114
    %4395 = vmatpush.bf16.msra.mxu0 %v4110
    %4396 = vmatpush.bf16.msra.mxu0 %v4106
    %4397 = vmatpush.bf16.msra.mxu0 %v4102
    %4398 = vmatpush.bf16.msra.mxu0 %v4098
    %4399 = vmatpush.bf16.msra.mxu0 %v4094
    %4400 = vmatpush.bf16.msra.mxu0 %v4090
    %4401 = vmatpush.bf16.msra.mxu0 %v4086
    %4402 = vmatmul.bf16.gmra.mxu0 %v3380
    %v4403 = vpop.f32.mrf.mxu0
    %v4404 = vadd.f32 %v4391, %v4403
    %v4405 = vpop.f32.mrf.mxu0
    %4406 = vdwg.mxu0
    %4407 = vmatpush.bf16.msra.mxu0 %v4146
    %4408 = vmatpush.bf16.msra.mxu0 %v4142
    %4409 = vmatpush.bf16.msra.mxu0 %v4138
    %4410 = vmatpush.bf16.msra.mxu0 %v4134
    %4411 = vmatpush.bf16.msra.mxu0 %v4130
    %4412 = vmatpush.bf16.msra.mxu0 %v4126
    %4413 = vmatpush.bf16.msra.mxu0 %v4122
    %4414 = vmatpush.bf16.msra.mxu0 %v4118
    %4415 = vmatmul.bf16.gmra.mxu0 %v3381
    %v4416 = vpop.f32.mrf.mxu0
    %v4417 = vadd.f32 %v4404, %v4416
    %v4418 = vpop.f32.mrf.mxu0
    %4419 = vdwg.mxu0
    %4420 = vmatpush.bf16.msra.mxu0 %v3987
    %4421 = vmatpush.bf16.msra.mxu0 %v3983
    %4422 = vmatpush.bf16.msra.mxu0 %v3979
    %4423 = vmatpush.bf16.msra.mxu0 %v3975
    %4424 = vmatpush.bf16.msra.mxu0 %v3971
    %4425 = vmatpush.bf16.msra.mxu0 %v3967
    %4426 = vmatpush.bf16.msra.mxu0 %v3963
    %4427 = vmatpush.bf16.msra.mxu0 %v3959
    %4428 = vmatmul.bf16.gmra.mxu0 %v3376
    %v4429 = vpop.f32.mrf.mxu0
    %v4430 = vadd.f32 0.0, %v4429
    %v4431 = vpop.f32.mrf.mxu0
    %4432 = vdwg.mxu0
    %4433 = vmatpush.bf16.msra.mxu0 %v4019
    %4434 = vmatpush.bf16.msra.mxu0 %v4015
    %4435 = vmatpush.bf16.msra.mxu0 %v4011
    %4436 = vmatpush.bf16.msra.mxu0 %v4007
    %4437 = vmatpush.bf16.msra.mxu0 %v4003
    %4438 = vmatpush.bf16.msra.mxu0 %v3999
    %4439 = vmatpush.bf16.msra.mxu0 %v3995
    %4440 = vmatpush.bf16.msra.mxu0 %v3991
    %4441 = vmatmul.bf16.gmra.mxu0 %v3377
    %v4442 = vpop.f32.mrf.mxu0
    %v4443 = vadd.f32 %v4430, %v4442
    %v4444 = vpop.f32.mrf.mxu0
    %4445 = vdwg.mxu0
    %4446 = vmatpush.bf16.msra.mxu0 %v4051
    %4447 = vmatpush.bf16.msra.mxu0 %v4047
    %4448 = vmatpush.bf16.msra.mxu0 %v4043
    %4449 = vmatpush.bf16.msra.mxu0 %v4039
    %4450 = vmatpush.bf16.msra.mxu0 %v4035
    %4451 = vmatpush.bf16.msra.mxu0 %v4031
    %4452 = vmatpush.bf16.msra.mxu0 %v4027
    %4453 = vmatpush.bf16.msra.mxu0 %v4023
    %4454 = vmatmul.bf16.gmra.mxu0 %v3378
    %v4455 = vpop.f32.mrf.mxu0
    %v4456 = vadd.f32 %v4443, %v4455
    %v4457 = vpop.f32.mrf.mxu0
    %4458 = vdwg.mxu0
    %4459 = vmatpush.bf16.msra.mxu0 %v4083
    %4460 = vmatpush.bf16.msra.mxu0 %v4079
    %4461 = vmatpush.bf16.msra.mxu0 %v4075
    %4462 = vmatpush.bf16.msra.mxu0 %v4071
    %4463 = vmatpush.bf16.msra.mxu0 %v4067
    %4464 = vmatpush.bf16.msra.mxu0 %v4063
    %4465 = vmatpush.bf16.msra.mxu0 %v4059
    %4466 = vmatpush.bf16.msra.mxu0 %v4055
    %4467 = vmatmul.bf16.gmra.mxu0 %v3379
    %v4468 = vpop.f32.mrf.mxu0
    %v4469 = vadd.f32 %v4456, %v4468
    %v4470 = vpop.f32.mrf.mxu0
    %4471 = vdwg.mxu0
    %4472 = vmatpush.bf16.msra.mxu0 %v4115
    %4473 = vmatpush.bf16.msra.mxu0 %v4111
    %4474 = vmatpush.bf16.msra.mxu0 %v4107
    %4475 = vmatpush.bf16.msra.mxu0 %v4103
    %4476 = vmatpush.bf16.msra.mxu0 %v4099
    %4477 = vmatpush.bf16.msra.mxu0 %v4095
    %4478 = vmatpush.bf16.msra.mxu0 %v4091
    %4479 = vmatpush.bf16.msra.mxu0 %v4087
    %4480 = vmatmul.bf16.gmra.mxu0 %v3380
    %v4481 = vpop.f32.mrf.mxu0
    %v4482 = vadd.f32 %v4469, %v4481
    %v4483 = vpop.f32.mrf.mxu0
    %4484 = vdwg.mxu0
    %4485 = vmatpush.bf16.msra.mxu0 %v4147
    %4486 = vmatpush.bf16.msra.mxu0 %v4143
    %4487 = vmatpush.bf16.msra.mxu0 %v4139
    %4488 = vmatpush.bf16.msra.mxu0 %v4135
    %4489 = vmatpush.bf16.msra.mxu0 %v4131
    %4490 = vmatpush.bf16.msra.mxu0 %v4127
    %4491 = vmatpush.bf16.msra.mxu0 %v4123
    %4492 = vmatpush.bf16.msra.mxu0 %v4119
    %4493 = vmatmul.bf16.gmra.mxu0 %v3381
    %v4494 = vpop.f32.mrf.mxu0
    %v4495 = vadd.f32 %v4482, %v4494
    %v4496 = vpop.f32.mrf.mxu0
    %4497 = vdwg.mxu0
    %4498 = vmatpush.bf16.msra.mxu0 %v3988
    %4499 = vmatpush.bf16.msra.mxu0 %v3984
    %4500 = vmatpush.bf16.msra.mxu0 %v3980
    %4501 = vmatpush.bf16.msra.mxu0 %v3976
    %4502 = vmatpush.bf16.msra.mxu0 %v3972
    %4503 = vmatpush.bf16.msra.mxu0 %v3968
    %4504 = vmatpush.bf16.msra.mxu0 %v3964
    %4505 = vmatpush.bf16.msra.mxu0 %v3960
    %4506 = vmatmul.bf16.gmra.mxu0 %v3376
    %v4507 = vpop.f32.mrf.mxu0
    %v4508 = vadd.f32 0.0, %v4507
    %v4509 = vpop.f32.mrf.mxu0
    %4510 = vdwg.mxu0
    %4511 = vmatpush.bf16.msra.mxu0 %v4020
    %4512 = vmatpush.bf16.msra.mxu0 %v4016
    %4513 = vmatpush.bf16.msra.mxu0 %v4012
    %4514 = vmatpush.bf16.msra.mxu0 %v4008
    %4515 = vmatpush.bf16.msra.mxu0 %v4004
    %4516 = vmatpush.bf16.msra.mxu0 %v4000
    %4517 = vmatpush.bf16.msra.mxu0 %v3996
    %4518 = vmatpush.bf16.msra.mxu0 %v3992
    %4519 = vmatmul.bf16.gmra.mxu0 %v3377
    %v4520 = vpop.f32.mrf.mxu0
    %v4521 = vadd.f32 %v4508, %v4520
    %v4522 = vpop.f32.mrf.mxu0
    %4523 = vdwg.mxu0
    %4524 = vmatpush.bf16.msra.mxu0 %v4052
    %4525 = vmatpush.bf16.msra.mxu0 %v4048
    %4526 = vmatpush.bf16.msra.mxu0 %v4044
    %4527 = vmatpush.bf16.msra.mxu0 %v4040
    %4528 = vmatpush.bf16.msra.mxu0 %v4036
    %4529 = vmatpush.bf16.msra.mxu0 %v4032
    %4530 = vmatpush.bf16.msra.mxu0 %v4028
    %4531 = vmatpush.bf16.msra.mxu0 %v4024
    %4532 = vmatmul.bf16.gmra.mxu0 %v3378
    %v4533 = vpop.f32.mrf.mxu0
    %v4534 = vadd.f32 %v4521, %v4533
    %v4535 = vpop.f32.mrf.mxu0
    %4536 = vdwg.mxu0
    %4537 = vmatpush.bf16.msra.mxu0 %v4084
    %4538 = vmatpush.bf16.msra.mxu0 %v4080
    %4539 = vmatpush.bf16.msra.mxu0 %v4076
    %4540 = vmatpush.bf16.msra.mxu0 %v4072
    %4541 = vmatpush.bf16.msra.mxu0 %v4068
    %4542 = vmatpush.bf16.msra.mxu0 %v4064
    %4543 = vmatpush.bf16.msra.mxu0 %v4060
    %4544 = vmatpush.bf16.msra.mxu0 %v4056
    %4545 = vmatmul.bf16.gmra.mxu0 %v3379
    %v4546 = vpop.f32.mrf.mxu0
    %v4547 = vadd.f32 %v4534, %v4546
    %v4548 = vpop.f32.mrf.mxu0
    %4549 = vdwg.mxu0
    %4550 = vmatpush.bf16.msra.mxu0 %v4116
    %4551 = vmatpush.bf16.msra.mxu0 %v4112
    %4552 = vmatpush.bf16.msra.mxu0 %v4108
    %4553 = vmatpush.bf16.msra.mxu0 %v4104
    %4554 = vmatpush.bf16.msra.mxu0 %v4100
    %4555 = vmatpush.bf16.msra.mxu0 %v4096
    %4556 = vmatpush.bf16.msra.mxu0 %v4092
    %4557 = vmatpush.bf16.msra.mxu0 %v4088
    %4558 = vmatmul.bf16.gmra.mxu0 %v3380
    %v4559 = vpop.f32.mrf.mxu0
    %v4560 = vadd.f32 %v4547, %v4559
    %v4561 = vpop.f32.mrf.mxu0
    %4562 = vdwg.mxu0
    %4563 = vmatpush.bf16.msra.mxu0 %v4148
    %4564 = vmatpush.bf16.msra.mxu0 %v4144
    %4565 = vmatpush.bf16.msra.mxu0 %v4140
    %4566 = vmatpush.bf16.msra.mxu0 %v4136
    %4567 = vmatpush.bf16.msra.mxu0 %v4132
    %4568 = vmatpush.bf16.msra.mxu0 %v4128
    %4569 = vmatpush.bf16.msra.mxu0 %v4124
    %4570 = vmatpush.bf16.msra.mxu0 %v4120
    %4571 = vmatmul.bf16.gmra.mxu0 %v3381
    %v4572 = vpop.f32.mrf.mxu0
    %v4573 = vadd.f32 %v4560, %v4572
    %v4574 = vpop.f32.mrf.mxu0
    %4575 = vdwg.mxu0
    %4576 = vmatpush.bf16.msra.mxu0 %v3989
    %4577 = vmatpush.bf16.msra.mxu0 %v3985
    %4578 = vmatpush.bf16.msra.mxu0 %v3981
    %4579 = vmatpush.bf16.msra.mxu0 %v3977
    %4580 = vmatpush.bf16.msra.mxu0 %v3973
    %4581 = vmatpush.bf16.msra.mxu0 %v3969
    %4582 = vmatpush.bf16.msra.mxu0 %v3965
    %4583 = vmatpush.bf16.msra.mxu0 %v3961
    %4584 = vmatmul.bf16.gmra.mxu0 %v3376
    %v4585 = vpop.f32.mrf.mxu0
    %v4586 = vadd.f32 0.0, %v4585
    %v4587 = vpop.f32.mrf.mxu0
    %4588 = vdwg.mxu0
    %4589 = vmatpush.bf16.msra.mxu0 %v4021
    %4590 = vmatpush.bf16.msra.mxu0 %v4017
    %4591 = vmatpush.bf16.msra.mxu0 %v4013
    %4592 = vmatpush.bf16.msra.mxu0 %v4009
    %4593 = vmatpush.bf16.msra.mxu0 %v4005
    %4594 = vmatpush.bf16.msra.mxu0 %v4001
    %4595 = vmatpush.bf16.msra.mxu0 %v3997
    %4596 = vmatpush.bf16.msra.mxu0 %v3993
    %4597 = vmatmul.bf16.gmra.mxu0 %v3377
    %v4598 = vpop.f32.mrf.mxu0
    %v4599 = vadd.f32 %v4586, %v4598
    %v4600 = vpop.f32.mrf.mxu0
    %4601 = vdwg.mxu0
    %4602 = vmatpush.bf16.msra.mxu0 %v4053
    %4603 = vmatpush.bf16.msra.mxu0 %v4049
    %4604 = vmatpush.bf16.msra.mxu0 %v4045
    %4605 = vmatpush.bf16.msra.mxu0 %v4041
    %4606 = vmatpush.bf16.msra.mxu0 %v4037
    %4607 = vmatpush.bf16.msra.mxu0 %v4033
    %4608 = vmatpush.bf16.msra.mxu0 %v4029
    %4609 = vmatpush.bf16.msra.mxu0 %v4025
    %4610 = vmatmul.bf16.gmra.mxu0 %v3378
    %v4611 = vpop.f32.mrf.mxu0
    %v4612 = vadd.f32 %v4599, %v4611
    %v4613 = vpop.f32.mrf.mxu0
    %4614 = vdwg.mxu0
    %4615 = vmatpush.bf16.msra.mxu0 %v4085
    %4616 = vmatpush.bf16.msra.mxu0 %v4081
    %4617 = vmatpush.bf16.msra.mxu0 %v4077
    %4618 = vmatpush.bf16.msra.mxu0 %v4073
    %4619 = vmatpush.bf16.msra.mxu0 %v4069
    %4620 = vmatpush.bf16.msra.mxu0 %v4065
    %4621 = vmatpush.bf16.msra.mxu0 %v4061
    %4622 = vmatpush.bf16.msra.mxu0 %v4057
    %4623 = vmatmul.bf16.gmra.mxu0 %v3379
    %v4624 = vpop.f32.mrf.mxu0
    %v4625 = vadd.f32 %v4612, %v4624
    %v4626 = vpop.f32.mrf.mxu0
    %4627 = vdwg.mxu0
    %4628 = vmatpush.bf16.msra.mxu0 %v4117
    %4629 = vmatpush.bf16.msra.mxu0 %v4113
    %4630 = vmatpush.bf16.msra.mxu0 %v4109
    %4631 = vmatpush.bf16.msra.mxu0 %v4105
    %4632 = vmatpush.bf16.msra.mxu0 %v4101
    %4633 = vmatpush.bf16.msra.mxu0 %v4097
    %4634 = vmatpush.bf16.msra.mxu0 %v4093
    %4635 = vmatpush.bf16.msra.mxu0 %v4089
    %4636 = vmatmul.bf16.gmra.mxu0 %v3380
    %v4637 = vpop.f32.mrf.mxu0
    %v4638 = vadd.f32 %v4625, %v4637
    %v4639 = vpop.f32.mrf.mxu0
    %4640 = vdwg.mxu0
    %4641 = vmatpush.bf16.msra.mxu0 %v4149
    %4642 = vmatpush.bf16.msra.mxu0 %v4145
    %4643 = vmatpush.bf16.msra.mxu0 %v4141
    %4644 = vmatpush.bf16.msra.mxu0 %v4137
    %4645 = vmatpush.bf16.msra.mxu0 %v4133
    %4646 = vmatpush.bf16.msra.mxu0 %v4129
    %4647 = vmatpush.bf16.msra.mxu0 %v4125
    %4648 = vmatpush.bf16.msra.mxu0 %v4121
    %4649 = vmatmul.bf16.gmra.mxu0 %v3381
    %v4650 = vpop.f32.mrf.mxu0
    %v4651 = vadd.f32 %v4638, %v4650
    %v4652 = vpop.f32.mrf.mxu0
    %4653 = vdwg.mxu0
    %v4654 = vmul.f32 %v4417, %v4417
    %v4655 = vmul.f32 %v4495, %v4495
    %v4656 = vmul.f32 %v4573, %v4573
    %v4657 = vmul.f32 %v4651, %v4651
    %v4658 = vpack.c.bf16 %v4654, %v4417
    %v4659 = vpack.c.bf16 %v4655, %v4495
    %v4660 = vpack.c.bf16 %v4656, %v4573
    %v4661 = vpack.c.bf16 %v4657, %v4651
    %v4662 = vld [vmem:[#allocation10] sm:$0xf]
    %v4663 = vld [vmem:[#allocation10 + $0x4] sm:$0xf]
    %v4664 = vld [vmem:[#allocation10 + $0x8] sm:$0xf]
    %v4665 = vld [vmem:[#allocation10 + $0xc] sm:$0xf]
    %v4666 = vld [vmem:[#allocation10 + $0x10] sm:$0xf]
    %v4667 = vld [vmem:[#allocation10 + $0x14] sm:$0xf]
    %v4668 = vld [vmem:[#allocation10 + $0x18] sm:$0xf]
    %v4669 = vld [vmem:[#allocation10 + $0x1c] sm:$0xf]
    %v4670 = vld [vmem:[#allocation10 + $0x20] sm:$0xf]
    %v4671 = vld [vmem:[#allocation10 + $0x24] sm:$0xf]
    %v4672 = vld [vmem:[#allocation10 + $0x28] sm:$0xf]
    %v4673 = vld [vmem:[#allocation10 + $0x2c] sm:$0xf]
    %v4674 = vld [vmem:[#allocation10 + $0x30] sm:$0xf]
    %v4675 = vld [vmem:[#allocation10 + $0x34] sm:$0xf]
    %v4676 = vld [vmem:[#allocation10 + $0x38] sm:$0xf]
    %v4677 = vld [vmem:[#allocation10 + $0x3c] sm:$0xf]
    %v4678 = vld [vmem:[#allocation10 + $0x40] sm:$0xf]
    %v4679 = vld [vmem:[#allocation10 + $0x44] sm:$0xf]
    %v4680 = vld [vmem:[#allocation10 + $0x48] sm:$0xf]
    %v4681 = vld [vmem:[#allocation10 + $0x4c] sm:$0xf]
    %v4682 = vld [vmem:[#allocation10 + $0x50] sm:$0xf]
    %v4683 = vld [vmem:[#allocation10 + $0x54] sm:$0xf]
    %v4684 = vld [vmem:[#allocation10 + $0x58] sm:$0xf]
    %v4685 = vld [vmem:[#allocation10 + $0x5c] sm:$0xf]
    %v4686 = vld [vmem:[#allocation10 + $0x60] sm:$0xf]
    %v4687 = vld [vmem:[#allocation10 + $0x64] sm:$0xf]
    %v4688 = vld [vmem:[#allocation10 + $0x68] sm:$0xf]
    %v4689 = vld [vmem:[#allocation10 + $0x6c] sm:$0xf]
    %v4690 = vld [vmem:[#allocation10 + $0x70] sm:$0xf]
    %v4691 = vld [vmem:[#allocation10 + $0x74] sm:$0xf]
    %v4692 = vld [vmem:[#allocation10 + $0x78] sm:$0xf]
    %v4693 = vld [vmem:[#allocation10 + $0x7c] sm:$0xf]
    %v4694 = vld [vmem:[#allocation10 + $0x80] sm:$0xf]
    %v4695 = vld [vmem:[#allocation10 + $0x84] sm:$0xf]
    %v4696 = vld [vmem:[#allocation10 + $0x88] sm:$0xf]
    %v4697 = vld [vmem:[#allocation10 + $0x8c] sm:$0xf]
    %v4698 = vld [vmem:[#allocation10 + $0x90] sm:$0xf]
    %v4699 = vld [vmem:[#allocation10 + $0x94] sm:$0xf]
    %v4700 = vld [vmem:[#allocation10 + $0x98] sm:$0xf]
    %v4701 = vld [vmem:[#allocation10 + $0x9c] sm:$0xf]
    %v4702 = vld [vmem:[#allocation10 + $0xa0] sm:$0xf]
    %v4703 = vld [vmem:[#allocation10 + $0xa4] sm:$0xf]
    %v4704 = vld [vmem:[#allocation10 + $0xa8] sm:$0xf]
    %v4705 = vld [vmem:[#allocation10 + $0xac] sm:$0xf]
    %v4706 = vld [vmem:[#allocation10 + $0xb0] sm:$0xf]
    %v4707 = vld [vmem:[#allocation10 + $0xb4] sm:$0xf]
    %v4708 = vld [vmem:[#allocation10 + $0xb8] sm:$0xf]
    %v4709 = vld [vmem:[#allocation10 + $0xbc] sm:$0xf]
    %v4710 = vld [vmem:[#allocation10 + $0xc0] sm:$0xf]
    %v4711 = vld [vmem:[#allocation10 + $0xc4] sm:$0xf]
    %v4712 = vld [vmem:[#allocation10 + $0xc8] sm:$0xf]
    %v4713 = vld [vmem:[#allocation10 + $0xcc] sm:$0xf]
    %v4714 = vld [vmem:[#allocation10 + $0xd0] sm:$0xf]
    %v4715 = vld [vmem:[#allocation10 + $0xd4] sm:$0xf]
    %v4716 = vld [vmem:[#allocation10 + $0xd8] sm:$0xf]
    %v4717 = vld [vmem:[#allocation10 + $0xdc] sm:$0xf]
    %v4718 = vld [vmem:[#allocation10 + $0xe0] sm:$0xf]
    %v4719 = vld [vmem:[#allocation10 + $0xe4] sm:$0xf]
    %v4720 = vld [vmem:[#allocation10 + $0xe8] sm:$0xf]
    %v4721 = vld [vmem:[#allocation10 + $0xec] sm:$0xf]
    %v4722 = vld [vmem:[#allocation10 + $0xf0] sm:$0xf]
    %v4723 = vld [vmem:[#allocation10 + $0xf4] sm:$0xf]
    %v4724 = vld [vmem:[#allocation10 + $0xf8] sm:$0xf]
    %v4725 = vld [vmem:[#allocation10 + $0xfc] sm:$0xf]
    %v4790 = vunpack.c.l.b16 %v4662
    %v4791 = vunpack.c.l.b16 %v4663
    %v4792 = vunpack.c.l.b16 %v4664
    %v4793 = vunpack.c.l.b16 %v4665
    %v4794 = vunpack.c.l.b16 %v4666
    %v4795 = vunpack.c.l.b16 %v4667
    %v4796 = vunpack.c.l.b16 %v4668
    %v4797 = vunpack.c.l.b16 %v4669
    %v4798 = vunpack.c.l.b16 %v4670
    %v4799 = vunpack.c.l.b16 %v4671
    %v4800 = vunpack.c.l.b16 %v4672
    %v4801 = vunpack.c.l.b16 %v4673
    %v4802 = vunpack.c.l.b16 %v4674
    %v4803 = vunpack.c.l.b16 %v4675
    %v4804 = vunpack.c.l.b16 %v4676
    %v4805 = vunpack.c.l.b16 %v4677
    %v4806 = vunpack.c.l.b16 %v4678
    %v4807 = vunpack.c.l.b16 %v4679
    %v4808 = vunpack.c.l.b16 %v4680
    %v4809 = vunpack.c.l.b16 %v4681
    %v4810 = vunpack.c.l.b16 %v4682
    %v4811 = vunpack.c.l.b16 %v4683
    %v4812 = vunpack.c.l.b16 %v4684
    %v4813 = vunpack.c.l.b16 %v4685
    %v4814 = vunpack.c.l.b16 %v4686
    %v4815 = vunpack.c.l.b16 %v4687
    %v4816 = vunpack.c.l.b16 %v4688
    %v4817 = vunpack.c.l.b16 %v4689
    %v4818 = vunpack.c.l.b16 %v4690
    %v4819 = vunpack.c.l.b16 %v4691
    %v4820 = vunpack.c.l.b16 %v4692
    %v4821 = vunpack.c.l.b16 %v4693
    %v4822 = vunpack.c.l.b16 %v4694
    %v4823 = vunpack.c.l.b16 %v4695
    %v4824 = vunpack.c.l.b16 %v4696
    %v4825 = vunpack.c.l.b16 %v4697
    %v4826 = vunpack.c.l.b16 %v4698
    %v4827 = vunpack.c.l.b16 %v4699
    %v4828 = vunpack.c.l.b16 %v4700
    %v4829 = vunpack.c.l.b16 %v4701
    %v4830 = vunpack.c.l.b16 %v4702
    %v4831 = vunpack.c.l.b16 %v4703
    %v4832 = vunpack.c.l.b16 %v4704
    %v4833 = vunpack.c.l.b16 %v4705
    %v4834 = vunpack.c.l.b16 %v4706
    %v4835 = vunpack.c.l.b16 %v4707
    %v4836 = vunpack.c.l.b16 %v4708
    %v4837 = vunpack.c.l.b16 %v4709
    %v4838 = vunpack.c.l.b16 %v4710
    %v4839 = vunpack.c.l.b16 %v4711
    %v4840 = vunpack.c.l.b16 %v4712
    %v4841 = vunpack.c.l.b16 %v4713
    %v4842 = vunpack.c.l.b16 %v4714
    %v4843 = vunpack.c.l.b16 %v4715
    %v4844 = vunpack.c.l.b16 %v4716
    %v4845 = vunpack.c.l.b16 %v4717
    %v4846 = vunpack.c.l.b16 %v4718
    %v4847 = vunpack.c.l.b16 %v4719
    %v4848 = vunpack.c.l.b16 %v4720
    %v4849 = vunpack.c.l.b16 %v4721
    %v4850 = vunpack.c.l.b16 %v4722
    %v4851 = vunpack.c.l.b16 %v4723
    %v4852 = vunpack.c.l.b16 %v4724
    %v4853 = vunpack.c.l.b16 %v4725
    %v4854 = vpack.c.b16 %v4791, %v4790
    %v4855 = vpack.c.b16 %v4793, %v4792
    %v4856 = vpack.c.b16 %v4795, %v4794
    %v4857 = vpack.c.b16 %v4797, %v4796
    %v4858 = vpack.c.b16 %v4799, %v4798
    %v4859 = vpack.c.b16 %v4801, %v4800
    %v4860 = vpack.c.b16 %v4803, %v4802
    %v4861 = vpack.c.b16 %v4805, %v4804
    %v4862 = vpack.c.b16 %v4807, %v4806
    %v4863 = vpack.c.b16 %v4809, %v4808
    %v4864 = vpack.c.b16 %v4811, %v4810
    %v4865 = vpack.c.b16 %v4813, %v4812
    %v4866 = vpack.c.b16 %v4815, %v4814
    %v4867 = vpack.c.b16 %v4817, %v4816
    %v4868 = vpack.c.b16 %v4819, %v4818
    %v4869 = vpack.c.b16 %v4821, %v4820
    %v4870 = vpack.c.b16 %v4823, %v4822
    %v4871 = vpack.c.b16 %v4825, %v4824
    %v4872 = vpack.c.b16 %v4827, %v4826
    %v4873 = vpack.c.b16 %v4829, %v4828
    %v4874 = vpack.c.b16 %v4831, %v4830
    %v4875 = vpack.c.b16 %v4833, %v4832
    %v4876 = vpack.c.b16 %v4835, %v4834
    %v4877 = vpack.c.b16 %v4837, %v4836
    %v4878 = vpack.c.b16 %v4839, %v4838
    %v4879 = vpack.c.b16 %v4841, %v4840
    %v4880 = vpack.c.b16 %v4843, %v4842
    %v4881 = vpack.c.b16 %v4845, %v4844
    %v4882 = vpack.c.b16 %v4847, %v4846
    %v4883 = vpack.c.b16 %v4849, %v4848
    %v4884 = vpack.c.b16 %v4851, %v4850
    %v4885 = vpack.c.b16 %v4853, %v4852
    %4918 = vmatpush.bf16.msra.mxu0 %v4861
    %4919 = vmatpush.bf16.msra.mxu0 %v4860
    %4920 = vmatpush.bf16.msra.mxu0 %v4859
    %4921 = vmatpush.bf16.msra.mxu0 %v4858
    %4922 = vmatpush.bf16.msra.mxu0 %v4857
    %4923 = vmatpush.bf16.msra.mxu0 %v4856
    %4924 = vmatpush.bf16.msra.mxu0 %v4855
    %4925 = vmatpush.bf16.msra.mxu0 %v4854
    %4926 = vmatmul.bf16.gmra.mxu0 %v4658
    %v4927 = vpop.f32.mrf.mxu0
    %v4928 = vadd.f32 0.0, %v4927
    %v4929 = vpop.f32.mrf.mxu0
    %v4930 = vadd.f32 0.0, %v4929
    %4931 = vdwg.mxu0
    %4932 = vmatpush.bf16.msra.mxu0 %v4869
    %4933 = vmatpush.bf16.msra.mxu0 %v4868
    %4934 = vmatpush.bf16.msra.mxu0 %v4867
    %4935 = vmatpush.bf16.msra.mxu0 %v4866
    %4936 = vmatpush.bf16.msra.mxu0 %v4865
    %4937 = vmatpush.bf16.msra.mxu0 %v4864
    %4938 = vmatpush.bf16.msra.mxu0 %v4863
    %4939 = vmatpush.bf16.msra.mxu0 %v4862
    %4940 = vmatmul.bf16.gmra.mxu0 %v4659
    %v4941 = vpop.f32.mrf.mxu0
    %v4942 = vadd.f32 %v4928, %v4941
    %v4943 = vpop.f32.mrf.mxu0
    %v4944 = vadd.f32 %v4930, %v4943
    %4945 = vdwg.mxu0
    %4946 = vmatpush.bf16.msra.mxu0 %v4877
    %4947 = vmatpush.bf16.msra.mxu0 %v4876
    %4948 = vmatpush.bf16.msra.mxu0 %v4875
    %4949 = vmatpush.bf16.msra.mxu0 %v4874
    %4950 = vmatpush.bf16.msra.mxu0 %v4873
    %4951 = vmatpush.bf16.msra.mxu0 %v4872
    %4952 = vmatpush.bf16.msra.mxu0 %v4871
    %4953 = vmatpush.bf16.msra.mxu0 %v4870
    %4954 = vmatmul.bf16.gmra.mxu0 %v4660
    %v4955 = vpop.f32.mrf.mxu0
    %v4956 = vadd.f32 %v4942, %v4955
    %v4957 = vpop.f32.mrf.mxu0
    %v4958 = vadd.f32 %v4944, %v4957
    %4959 = vdwg.mxu0
    %4960 = vmatpush.bf16.msra.mxu0 %v4885
    %4961 = vmatpush.bf16.msra.mxu0 %v4884
    %4962 = vmatpush.bf16.msra.mxu0 %v4883
    %4963 = vmatpush.bf16.msra.mxu0 %v4882
    %4964 = vmatpush.bf16.msra.mxu0 %v4881
    %4965 = vmatpush.bf16.msra.mxu0 %v4880
    %4966 = vmatpush.bf16.msra.mxu0 %v4879
    %4967 = vmatpush.bf16.msra.mxu0 %v4878
    %4968 = vmatmul.bf16.gmra.mxu0 %v4661
    %v4969 = vpop.f32.mrf.mxu0
    %v4970 = vadd.f32 %v4956, %v4969
    %v4971 = vpop.f32.mrf.mxu0
    %v4972 = vadd.f32 %v4958, %v4971
    %4973 = vdwg.mxu0
    %v4974 = vmul.f32 %v4970, 0.04
    %v4975 = vmul.f32 %v4972, 0.04
    %v4976 = vmul.f32 %v4974, %v4974
    %v4977 = vsub.f32 %v4975, %v4976
    %v4978 = vmax.f32 %v4977, 0.0
    %v4979 = vadd.f32 %v4978, 1e-05
    %v4980 = vrsqrt.pop %v4979
    %v4981 = vmul.f32 %v4980, %v4979
    %v4982 = vmul.f32 %v4981, %v4980
    %v4983 = vmul.f32 0.5, %v4982
    %v4984 = vsub.f32 1.5, %v4983
    %v4985 = vmul.f32 %v4980, %v4984
    %vm4986 = vweird.f32 %v4979
    %vm4987 = vweird.f32 %v4980
    %vm4988 = vmor %vm4986, %vm4987
    %v4989 = vsel %vm4988, %v4980, %v4985
    %v4990 = vsub.f32 0.0, %v4974
    %v4991 = vmul.f32 %v4990, %v4989
    %v4992 = vld [vmem:[#allocation11] sm:$0xff]
    %v4993 = vld [vmem:[#allocation11 + $0x8] sm:$0xff]
    %v4994 = vld [vmem:[#allocation11 + $0x10] sm:$0xff]
    %v4995 = vld [vmem:[#allocation11 + $0x18] sm:$0xff]
    %v4996 = vld [vmem:[#allocation11 + $0x20] sm:$0xff]
    %v4997 = vld [vmem:[#allocation11 + $0x28] sm:$0xff]
    %v4998 = vld [vmem:[#allocation11 + $0x30] sm:$0xff]
    %v4999 = vld [vmem:[#allocation11 + $0x38] sm:$0xff]
    %vm5000 = vcmask 130048
    %v5002 = vsel %vm5000, %v4989, 0
    %v5005 = vsel %vm5000, %v4991, 0
    %5007 = vmatpush.msra.mxu0 0.0
    %5008 = vmatpush.msra.mxu0 0.0
    %5009 = vmatpush.msra.mxu0 0.0
    %5010 = vmatpush.msra.mxu0 0.0
    %5011 = vmatpush.msra.mxu0 0.0
    %5012 = vmatpush.msra.mxu0 0.0
    %5013 = vmatpush.msra.mxu0 0.0
    %5014 = vmatpush.msra.mxu0 0.0
    %5015 = vmatpush.msra.mxu0 0.0
    %5016 = vmatpush.msra.mxu0 0.0
    %5017 = vmatpush.msra.mxu0 0.0
    %5018 = vmatpush.msra.mxu0 0.0
    %5019 = vmatpush.msra.mxu0 0.0
    %5020 = vmatpush.msra.mxu0 0.0
    %5021 = vmatpush.msra.mxu0 %v4996
    %5022 = vmatpush.msra.mxu0 %v4992
    %5023 = vmatmul.f32.gmra.mxu0 %v5002
    %v5024 = vpop.f32.mrf.mxu0
    %v5025 = vadd.f32 0.0, %v5024
    %5026 = vmatmul.f32.gmra.mxu0 %v5005
    %v5027 = vpop.f32.mrf.mxu0
    %v5028 = vadd.f32 0.0, %v5027
    %5029 = vdwg.mxu0
    %5030 = vmatpush.msra.mxu0 0.0
    %5031 = vmatpush.msra.mxu0 0.0
    %5032 = vmatpush.msra.mxu0 0.0
    %5033 = vmatpush.msra.mxu0 0.0
    %5034 = vmatpush.msra.mxu0 0.0
    %5035 = vmatpush.msra.mxu0 0.0
    %5036 = vmatpush.msra.mxu0 0.0
    %5037 = vmatpush.msra.mxu0 0.0
    %5038 = vmatpush.msra.mxu0 0.0
    %5039 = vmatpush.msra.mxu0 0.0
    %5040 = vmatpush.msra.mxu0 0.0
    %5041 = vmatpush.msra.mxu0 0.0
    %5042 = vmatpush.msra.mxu0 0.0
    %5043 = vmatpush.msra.mxu0 0.0
    %5044 = vmatpush.msra.mxu0 %v4997
    %5045 = vmatpush.msra.mxu0 %v4993
    %5046 = vmatmul.f32.gmra.mxu0 %v5002
    %v5047 = vpop.f32.mrf.mxu0
    %v5048 = vadd.f32 0.0, %v5047
    %5049 = vmatmul.f32.gmra.mxu0 %v5005
    %v5050 = vpop.f32.mrf.mxu0
    %v5051 = vadd.f32 0.0, %v5050
    %5052 = vdwg.mxu0
    %5053 = vmatpush.msra.mxu0 0.0
    %5054 = vmatpush.msra.mxu0 0.0
    %5055 = vmatpush.msra.mxu0 0.0
    %5056 = vmatpush.msra.mxu0 0.0
    %5057 = vmatpush.msra.mxu0 0.0
    %5058 = vmatpush.msra.mxu0 0.0
    %5059 = vmatpush.msra.mxu0 0.0
    %5060 = vmatpush.msra.mxu0 0.0
    %5061 = vmatpush.msra.mxu0 0.0
    %5062 = vmatpush.msra.mxu0 0.0
    %5063 = vmatpush.msra.mxu0 0.0
    %5064 = vmatpush.msra.mxu0 0.0
    %5065 = vmatpush.msra.mxu0 0.0
    %5066 = vmatpush.msra.mxu0 0.0
    %5067 = vmatpush.msra.mxu0 %v4998
    %5068 = vmatpush.msra.mxu0 %v4994
    %5069 = vmatmul.f32.gmra.mxu0 %v5002
    %v5070 = vpop.f32.mrf.mxu0
    %v5071 = vadd.f32 0.0, %v5070
    %5072 = vmatmul.f32.gmra.mxu0 %v5005
    %v5073 = vpop.f32.mrf.mxu0
    %v5074 = vadd.f32 0.0, %v5073
    %5075 = vdwg.mxu0
    %5076 = vmatpush.msra.mxu0 0.0
    %5077 = vmatpush.msra.mxu0 0.0
    %5078 = vmatpush.msra.mxu0 0.0
    %5079 = vmatpush.msra.mxu0 0.0
    %5080 = vmatpush.msra.mxu0 0.0
    %5081 = vmatpush.msra.mxu0 0.0
    %5082 = vmatpush.msra.mxu0 0.0
    %5083 = vmatpush.msra.mxu0 0.0
    %5084 = vmatpush.msra.mxu0 0.0
    %5085 = vmatpush.msra.mxu0 0.0
    %5086 = vmatpush.msra.mxu0 0.0
    %5087 = vmatpush.msra.mxu0 0.0
    %5088 = vmatpush.msra.mxu0 0.0
    %5089 = vmatpush.msra.mxu0 0.0
    %5090 = vmatpush.msra.mxu0 %v4999
    %5091 = vmatpush.msra.mxu0 %v4995
    %5092 = vmatmul.f32.gmra.mxu0 %v5002
    %v5093 = vpop.f32.mrf.mxu0
    %v5094 = vadd.f32 0.0, %v5093
    %5095 = vmatmul.f32.gmra.mxu0 %v5005
    %v5096 = vpop.f32.mrf.mxu0
    %v5097 = vadd.f32 0.0, %v5096
    %5098 = vdwg.mxu0
    %v5099 = vmul.f32 %v4417, %v5025
    %v5100 = vmul.f32 %v4495, %v5048
    %v5101 = vmul.f32 %v4573, %v5071
    %v5102 = vmul.f32 %v4651, %v5094
    %v5103 = vadd.f32 %v5099, %v5028
    %v5104 = vadd.f32 %v5100, %v5051
    %v5105 = vadd.f32 %v5101, %v5074
    %v5106 = vadd.f32 %v5102, %v5097
    %vm5107 = vcmp.gt.f32.partialorder %v5103, 0.0
    %vm5108 = vcmp.gt.f32.partialorder %v5104, 0.0
    %vm5109 = vcmp.gt.f32.partialorder %v5105, 0.0
    %vm5110 = vcmp.gt.f32.partialorder %v5106, 0.0
    %v5111 = vmul.f32 %v5103, 0.2
    %v5112 = vmul.f32 %v5104, 0.2
    %v5113 = vmul.f32 %v5105, 0.2
    %v5114 = vmul.f32 %v5106, 0.2
    %v5115 = vsel %vm5107, %v5103, %v5111
    %v5116 = vsel %vm5108, %v5104, %v5112
    %v5117 = vsel %vm5109, %v5105, %v5113
    %v5118 = vsel %vm5110, %v5106, %v5114
    %5119 = vst [vmem:[%s12] sm:$0xff] %v5115
    %5120 = vst [vmem:[%s12 + $0x8] sm:$0xff] %v5116
    %5121 = vst [vmem:[%s12 + $0x10] sm:$0xff] %v5117
    %5122 = vst [vmem:[%s12 + $0x18] sm:$0xff] %v5118
    %s5123 = smul.u32 4, 64
    %s5124 = smul.u32 %s5123, 4
    %s5125 = sshll.u32 %s5124, 4
    %5126 = dma.done %s154, %s5125
    %v5127 = vld [vmem:[#allocation3] sm:$0xff]
    %v5128 = vld [vmem:[#allocation3 + $0x8] sm:$0xff]
    %v5129 = vld [vmem:[#allocation3 + $0x10] sm:$0xff]
    %v5130 = vld [vmem:[#allocation3 + $0x18] sm:$0xff]
    %v5131 = vld [vmem:[#allocation3 + $0x20] sm:$0xff]
    %v5132 = vld [vmem:[#allocation3 + $0x28] sm:$0xff]
    %v5133 = vld [vmem:[#allocation3 + $0x30] sm:$0xff]
    %v5134 = vld [vmem:[#allocation3 + $0x38] sm:$0xff]
    %v5135 = vld [vmem:[#allocation3 + $0x40] sm:$0xff]
    %v5136 = vld [vmem:[#allocation3 + $0x48] sm:$0xff]
    %v5137 = vld [vmem:[#allocation3 + $0x50] sm:$0xff]
    %v5138 = vld [vmem:[#allocation3 + $0x58] sm:$0xff]
    %v5139 = vld [vmem:[#allocation3 + $0x60] sm:$0xff]
    %v5140 = vld [vmem:[#allocation3 + $0x68] sm:$0xff]
    %v5141 = vld [vmem:[#allocation3 + $0x70] sm:$0xff]
    %v5142 = vld [vmem:[#allocation3 + $0x78] sm:$0xff]
    %v5143 = vld [vmem:[#allocation3 + $0x80] sm:$0xff]
    %v5144 = vld [vmem:[#allocation3 + $0x88] sm:$0xff]
    %v5145 = vld [vmem:[#allocation3 + $0x90] sm:$0xff]
    %v5146 = vld [vmem:[#allocation3 + $0x98] sm:$0xff]
    %v5147 = vld [vmem:[#allocation3 + $0xa0] sm:$0xff]
    %v5148 = vld [vmem:[#allocation3 + $0xa8] sm:$0xff]
    %v5149 = vld [vmem:[#allocation3 + $0xb0] sm:$0xff]
    %v5150 = vld [vmem:[#allocation3 + $0xb8] sm:$0xff]
    %v5151 = vld [vmem:[#allocation3 + $0xc0] sm:$0xff]
    %v5152 = vld [vmem:[#allocation3 + $0xc8] sm:$0xff]
    %v5153 = vld [vmem:[#allocation3 + $0xd0] sm:$0xff]
    %v5154 = vld [vmem:[#allocation3 + $0xd8] sm:$0xff]
    %v5155 = vld [vmem:[#allocation3 + $0xe0] sm:$0xff]
    %v5156 = vld [vmem:[#allocation3 + $0xe8] sm:$0xff]
    %v5157 = vld [vmem:[#allocation3 + $0xf0] sm:$0xff]
    %v5158 = vld [vmem:[#allocation3 + $0xf8] sm:$0xff]
    %v5159 = vld [vmem:[#allocation3 + $0x100] sm:$0xff]
    %v5160 = vld [vmem:[#allocation3 + $0x108] sm:$0xff]
    %v5161 = vld [vmem:[#allocation3 + $0x110] sm:$0xff]
    %v5162 = vld [vmem:[#allocation3 + $0x118] sm:$0xff]
    %v5163 = vld [vmem:[#allocation3 + $0x120] sm:$0xff]
    %v5164 = vld [vmem:[#allocation3 + $0x128] sm:$0xff]
    %v5165 = vld [vmem:[#allocation3 + $0x130] sm:$0xff]
    %v5166 = vld [vmem:[#allocation3 + $0x138] sm:$0xff]
    %v5167 = vld [vmem:[#allocation3 + $0x140] sm:$0xff]
    %v5168 = vld [vmem:[#allocation3 + $0x148] sm:$0xff]
    %v5169 = vld [vmem:[#allocation3 + $0x150] sm:$0xff]
    %v5170 = vld [vmem:[#allocation3 + $0x158] sm:$0xff]
    %v5171 = vld [vmem:[#allocation3 + $0x160] sm:$0xff]
    %v5172 = vld [vmem:[#allocation3 + $0x168] sm:$0xff]
    %v5173 = vld [vmem:[#allocation3 + $0x170] sm:$0xff]
    %v5174 = vld [vmem:[#allocation3 + $0x178] sm:$0xff]
    %v5175 = vld [vmem:[#allocation3 + $0x180] sm:$0xff]
    %v5176 = vld [vmem:[#allocation3 + $0x188] sm:$0xff]
    %v5177 = vld [vmem:[#allocation3 + $0x190] sm:$0xff]
    %v5178 = vld [vmem:[#allocation3 + $0x198] sm:$0xff]
    %v5179 = vld [vmem:[#allocation3 + $0x1a0] sm:$0xff]
    %v5180 = vld [vmem:[#allocation3 + $0x1a8] sm:$0xff]
    %v5181 = vld [vmem:[#allocation3 + $0x1b0] sm:$0xff]
    %v5182 = vld [vmem:[#allocation3 + $0x1b8] sm:$0xff]
    %v5183 = vld [vmem:[#allocation3 + $0x1c0] sm:$0xff]
    %v5184 = vld [vmem:[#allocation3 + $0x1c8] sm:$0xff]
    %v5185 = vld [vmem:[#allocation3 + $0x1d0] sm:$0xff]
    %v5186 = vld [vmem:[#allocation3 + $0x1d8] sm:$0xff]
    %v5187 = vld [vmem:[#allocation3 + $0x1e0] sm:$0xff]
    %v5188 = vld [vmem:[#allocation3 + $0x1e8] sm:$0xff]
    %v5189 = vld [vmem:[#allocation3 + $0x1f0] sm:$0xff]
    %v5190 = vld [vmem:[#allocation3 + $0x1f8] sm:$0xff]
    %v5191 = vld [vmem:[#allocation3 + $0x200] sm:$0xff]
    %v5192 = vld [vmem:[#allocation3 + $0x208] sm:$0xff]
    %v5193 = vld [vmem:[#allocation3 + $0x210] sm:$0xff]
    %v5194 = vld [vmem:[#allocation3 + $0x218] sm:$0xff]
    %v5195 = vld [vmem:[#allocation3 + $0x220] sm:$0xff]
    %v5196 = vld [vmem:[#allocation3 + $0x228] sm:$0xff]
    %v5197 = vld [vmem:[#allocation3 + $0x230] sm:$0xff]
    %v5198 = vld [vmem:[#allocation3 + $0x238] sm:$0xff]
    %v5199 = vld [vmem:[#allocation3 + $0x240] sm:$0xff]
    %v5200 = vld [vmem:[#allocation3 + $0x248] sm:$0xff]
    %v5201 = vld [vmem:[#allocation3 + $0x250] sm:$0xff]
    %v5202 = vld [vmem:[#allocation3 + $0x258] sm:$0xff]
    %v5203 = vld [vmem:[#allocation3 + $0x260] sm:$0xff]
    %v5204 = vld [vmem:[#allocation3 + $0x268] sm:$0xff]
    %v5205 = vld [vmem:[#allocation3 + $0x270] sm:$0xff]
    %v5206 = vld [vmem:[#allocation3 + $0x278] sm:$0xff]
    %v5207 = vld [vmem:[#allocation3 + $0x280] sm:$0xff]
    %v5208 = vld [vmem:[#allocation3 + $0x288] sm:$0xff]
    %v5209 = vld [vmem:[#allocation3 + $0x290] sm:$0xff]
    %v5210 = vld [vmem:[#allocation3 + $0x298] sm:$0xff]
    %v5211 = vld [vmem:[#allocation3 + $0x2a0] sm:$0xff]
    %v5212 = vld [vmem:[#allocation3 + $0x2a8] sm:$0xff]
    %v5213 = vld [vmem:[#allocation3 + $0x2b0] sm:$0xff]
    %v5214 = vld [vmem:[#allocation3 + $0x2b8] sm:$0xff]
    %v5215 = vld [vmem:[#allocation3 + $0x2c0] sm:$0xff]
    %v5216 = vld [vmem:[#allocation3 + $0x2c8] sm:$0xff]
    %v5217 = vld [vmem:[#allocation3 + $0x2d0] sm:$0xff]
    %v5218 = vld [vmem:[#allocation3 + $0x2d8] sm:$0xff]
    %v5219 = vld [vmem:[#allocation3 + $0x2e0] sm:$0xff]
    %v5220 = vld [vmem:[#allocation3 + $0x2e8] sm:$0xff]
    %v5221 = vld [vmem:[#allocation3 + $0x2f0] sm:$0xff]
    %v5222 = vld [vmem:[#allocation3 + $0x2f8] sm:$0xff]
    %v5223 = vld [vmem:[#allocation3 + $0x300] sm:$0xff]
    %v5224 = vld [vmem:[#allocation3 + $0x308] sm:$0xff]
    %v5225 = vld [vmem:[#allocation3 + $0x310] sm:$0xff]
    %v5226 = vld [vmem:[#allocation3 + $0x318] sm:$0xff]
    %v5227 = vld [vmem:[#allocation3 + $0x320] sm:$0xff]
    %v5228 = vld [vmem:[#allocation3 + $0x328] sm:$0xff]
    %v5229 = vld [vmem:[#allocation3 + $0x330] sm:$0xff]
    %v5230 = vld [vmem:[#allocation3 + $0x338] sm:$0xff]
    %v5231 = vld [vmem:[#allocation3 + $0x340] sm:$0xff]
    %v5232 = vld [vmem:[#allocation3 + $0x348] sm:$0xff]
    %v5233 = vld [vmem:[#allocation3 + $0x350] sm:$0xff]
    %v5234 = vld [vmem:[#allocation3 + $0x358] sm:$0xff]
    %v5235 = vld [vmem:[#allocation3 + $0x360] sm:$0xff]
    %v5236 = vld [vmem:[#allocation3 + $0x368] sm:$0xff]
    %v5237 = vld [vmem:[#allocation3 + $0x370] sm:$0xff]
    %v5238 = vld [vmem:[#allocation3 + $0x378] sm:$0xff]
    %v5239 = vld [vmem:[#allocation3 + $0x380] sm:$0xff]
    %v5240 = vld [vmem:[#allocation3 + $0x388] sm:$0xff]
    %v5241 = vld [vmem:[#allocation3 + $0x390] sm:$0xff]
    %v5242 = vld [vmem:[#allocation3 + $0x398] sm:$0xff]
    %v5243 = vld [vmem:[#allocation3 + $0x3a0] sm:$0xff]
    %v5244 = vld [vmem:[#allocation3 + $0x3a8] sm:$0xff]
    %v5245 = vld [vmem:[#allocation3 + $0x3b0] sm:$0xff]
    %v5246 = vld [vmem:[#allocation3 + $0x3b8] sm:$0xff]
    %v5247 = vld [vmem:[#allocation3 + $0x3c0] sm:$0xff]
    %v5248 = vld [vmem:[#allocation3 + $0x3c8] sm:$0xff]
    %v5249 = vld [vmem:[#allocation3 + $0x3d0] sm:$0xff]
    %v5250 = vld [vmem:[#allocation3 + $0x3d8] sm:$0xff]
    %v5251 = vld [vmem:[#allocation3 + $0x3e0] sm:$0xff]
    %v5252 = vld [vmem:[#allocation3 + $0x3e8] sm:$0xff]
    %v5253 = vld [vmem:[#allocation3 + $0x3f0] sm:$0xff]
    %v5254 = vld [vmem:[#allocation3 + $0x3f8] sm:$0xff]
    %v5255 = vpack.c.bf16 %v5115, %v5115
    %v5256 = vpack.c.bf16 %v5116, %v5116
    %v5257 = vpack.c.bf16 %v5117, %v5117
    %v5258 = vpack.c.bf16 %v5118, %v5118
    %v5387 = vunpack.c.l.b16 %v5127
    %v5388 = vunpack.c.h.b16 %v5127
    %v5389 = vunpack.c.l.b16 %v5128
    %v5390 = vunpack.c.h.b16 %v5128
    %v5391 = vunpack.c.l.b16 %v5129
    %v5392 = vunpack.c.h.b16 %v5129
    %v5393 = vunpack.c.l.b16 %v5130
    %v5394 = vunpack.c.h.b16 %v5130
    %v5395 = vunpack.c.l.b16 %v5131
    %v5396 = vunpack.c.h.b16 %v5131
    %v5397 = vunpack.c.l.b16 %v5132
    %v5398 = vunpack.c.h.b16 %v5132
    %v5399 = vunpack.c.l.b16 %v5133
    %v5400 = vunpack.c.h.b16 %v5133
    %v5401 = vunpack.c.l.b16 %v5134
    %v5402 = vunpack.c.h.b16 %v5134
    %v5403 = vunpack.c.l.b16 %v5135
    %v5404 = vunpack.c.h.b16 %v5135
    %v5405 = vunpack.c.l.b16 %v5136
    %v5406 = vunpack.c.h.b16 %v5136
    %v5407 = vunpack.c.l.b16 %v5137
    %v5408 = vunpack.c.h.b16 %v5137
    %v5409 = vunpack.c.l.b16 %v5138
    %v5410 = vunpack.c.h.b16 %v5138
    %v5411 = vunpack.c.l.b16 %v5139
    %v5412 = vunpack.c.h.b16 %v5139
    %v5413 = vunpack.c.l.b16 %v5140
    %v5414 = vunpack.c.h.b16 %v5140
    %v5415 = vunpack.c.l.b16 %v5141
    %v5416 = vunpack.c.h.b16 %v5141
    %v5417 = vunpack.c.l.b16 %v5142
    %v5418 = vunpack.c.h.b16 %v5142
    %v5419 = vunpack.c.l.b16 %v5143
    %v5420 = vunpack.c.h.b16 %v5143
    %v5421 = vunpack.c.l.b16 %v5144
    %v5422 = vunpack.c.h.b16 %v5144
    %v5423 = vunpack.c.l.b16 %v5145
    %v5424 = vunpack.c.h.b16 %v5145
    %v5425 = vunpack.c.l.b16 %v5146
    %v5426 = vunpack.c.h.b16 %v5146
    %v5427 = vunpack.c.l.b16 %v5147
    %v5428 = vunpack.c.h.b16 %v5147
    %v5429 = vunpack.c.l.b16 %v5148
    %v5430 = vunpack.c.h.b16 %v5148
    %v5431 = vunpack.c.l.b16 %v5149
    %v5432 = vunpack.c.h.b16 %v5149
    %v5433 = vunpack.c.l.b16 %v5150
    %v5434 = vunpack.c.h.b16 %v5150
    %v5435 = vunpack.c.l.b16 %v5151
    %v5436 = vunpack.c.h.b16 %v5151
    %v5437 = vunpack.c.l.b16 %v5152
    %v5438 = vunpack.c.h.b16 %v5152
    %v5439 = vunpack.c.l.b16 %v5153
    %v5440 = vunpack.c.h.b16 %v5153
    %v5441 = vunpack.c.l.b16 %v5154
    %v5442 = vunpack.c.h.b16 %v5154
    %v5443 = vunpack.c.l.b16 %v5155
    %v5444 = vunpack.c.h.b16 %v5155
    %v5445 = vunpack.c.l.b16 %v5156
    %v5446 = vunpack.c.h.b16 %v5156
    %v5447 = vunpack.c.l.b16 %v5157
    %v5448 = vunpack.c.h.b16 %v5157
    %v5449 = vunpack.c.l.b16 %v5158
    %v5450 = vunpack.c.h.b16 %v5158
    %v5451 = vunpack.c.l.b16 %v5159
    %v5452 = vunpack.c.h.b16 %v5159
    %v5453 = vunpack.c.l.b16 %v5160
    %v5454 = vunpack.c.h.b16 %v5160
    %v5455 = vunpack.c.l.b16 %v5161
    %v5456 = vunpack.c.h.b16 %v5161
    %v5457 = vunpack.c.l.b16 %v5162
    %v5458 = vunpack.c.h.b16 %v5162
    %v5459 = vunpack.c.l.b16 %v5163
    %v5460 = vunpack.c.h.b16 %v5163
    %v5461 = vunpack.c.l.b16 %v5164
    %v5462 = vunpack.c.h.b16 %v5164
    %v5463 = vunpack.c.l.b16 %v5165
    %v5464 = vunpack.c.h.b16 %v5165
    %v5465 = vunpack.c.l.b16 %v5166
    %v5466 = vunpack.c.h.b16 %v5166
    %v5467 = vunpack.c.l.b16 %v5167
    %v5468 = vunpack.c.h.b16 %v5167
    %v5469 = vunpack.c.l.b16 %v5168
    %v5470 = vunpack.c.h.b16 %v5168
    %v5471 = vunpack.c.l.b16 %v5169
    %v5472 = vunpack.c.h.b16 %v5169
    %v5473 = vunpack.c.l.b16 %v5170
    %v5474 = vunpack.c.h.b16 %v5170
    %v5475 = vunpack.c.l.b16 %v5171
    %v5476 = vunpack.c.h.b16 %v5171
    %v5477 = vunpack.c.l.b16 %v5172
    %v5478 = vunpack.c.h.b16 %v5172
    %v5479 = vunpack.c.l.b16 %v5173
    %v5480 = vunpack.c.h.b16 %v5173
    %v5481 = vunpack.c.l.b16 %v5174
    %v5482 = vunpack.c.h.b16 %v5174
    %v5483 = vunpack.c.l.b16 %v5175
    %v5484 = vunpack.c.h.b16 %v5175
    %v5485 = vunpack.c.l.b16 %v5176
    %v5486 = vunpack.c.h.b16 %v5176
    %v5487 = vunpack.c.l.b16 %v5177
    %v5488 = vunpack.c.h.b16 %v5177
    %v5489 = vunpack.c.l.b16 %v5178
    %v5490 = vunpack.c.h.b16 %v5178
    %v5491 = vunpack.c.l.b16 %v5179
    %v5492 = vunpack.c.h.b16 %v5179
    %v5493 = vunpack.c.l.b16 %v5180
    %v5494 = vunpack.c.h.b16 %v5180
    %v5495 = vunpack.c.l.b16 %v5181
    %v5496 = vunpack.c.h.b16 %v5181
    %v5497 = vunpack.c.l.b16 %v5182
    %v5498 = vunpack.c.h.b16 %v5182
    %v5499 = vunpack.c.l.b16 %v5183
    %v5500 = vunpack.c.h.b16 %v5183
    %v5501 = vunpack.c.l.b16 %v5184
    %v5502 = vunpack.c.h.b16 %v5184
    %v5503 = vunpack.c.l.b16 %v5185
    %v5504 = vunpack.c.h.b16 %v5185
    %v5505 = vunpack.c.l.b16 %v5186
    %v5506 = vunpack.c.h.b16 %v5186
    %v5507 = vunpack.c.l.b16 %v5187
    %v5508 = vunpack.c.h.b16 %v5187
    %v5509 = vunpack.c.l.b16 %v5188
    %v5510 = vunpack.c.h.b16 %v5188
    %v5511 = vunpack.c.l.b16 %v5189
    %v5512 = vunpack.c.h.b16 %v5189
    %v5513 = vunpack.c.l.b16 %v5190
    %v5514 = vunpack.c.h.b16 %v5190
    %v5515 = vunpack.c.l.b16 %v5191
    %v5516 = vunpack.c.h.b16 %v5191
    %v5517 = vunpack.c.l.b16 %v5192
    %v5518 = vunpack.c.h.b16 %v5192
    %v5519 = vunpack.c.l.b16 %v5193
    %v5520 = vunpack.c.h.b16 %v5193
    %v5521 = vunpack.c.l.b16 %v5194
    %v5522 = vunpack.c.h.b16 %v5194
    %v5523 = vunpack.c.l.b16 %v5195
    %v5524 = vunpack.c.h.b16 %v5195
    %v5525 = vunpack.c.l.b16 %v5196
    %v5526 = vunpack.c.h.b16 %v5196
    %v5527 = vunpack.c.l.b16 %v5197
    %v5528 = vunpack.c.h.b16 %v5197
    %v5529 = vunpack.c.l.b16 %v5198
    %v5530 = vunpack.c.h.b16 %v5198
    %v5531 = vunpack.c.l.b16 %v5199
    %v5532 = vunpack.c.h.b16 %v5199
    %v5533 = vunpack.c.l.b16 %v5200
    %v5534 = vunpack.c.h.b16 %v5200
    %v5535 = vunpack.c.l.b16 %v5201
    %v5536 = vunpack.c.h.b16 %v5201
    %v5537 = vunpack.c.l.b16 %v5202
    %v5538 = vunpack.c.h.b16 %v5202
    %v5539 = vunpack.c.l.b16 %v5203
    %v5540 = vunpack.c.h.b16 %v5203
    %v5541 = vunpack.c.l.b16 %v5204
    %v5542 = vunpack.c.h.b16 %v5204
    %v5543 = vunpack.c.l.b16 %v5205
    %v5544 = vunpack.c.h.b16 %v5205
    %v5545 = vunpack.c.l.b16 %v5206
    %v5546 = vunpack.c.h.b16 %v5206
    %v5547 = vunpack.c.l.b16 %v5207
    %v5548 = vunpack.c.h.b16 %v5207
    %v5549 = vunpack.c.l.b16 %v5208
    %v5550 = vunpack.c.h.b16 %v5208
    %v5551 = vunpack.c.l.b16 %v5209
    %v5552 = vunpack.c.h.b16 %v5209
    %v5553 = vunpack.c.l.b16 %v5210
    %v5554 = vunpack.c.h.b16 %v5210
    %v5555 = vunpack.c.l.b16 %v5211
    %v5556 = vunpack.c.h.b16 %v5211
    %v5557 = vunpack.c.l.b16 %v5212
    %v5558 = vunpack.c.h.b16 %v5212
    %v5559 = vunpack.c.l.b16 %v5213
    %v5560 = vunpack.c.h.b16 %v5213
    %v5561 = vunpack.c.l.b16 %v5214
    %v5562 = vunpack.c.h.b16 %v5214
    %v5563 = vunpack.c.l.b16 %v5215
    %v5564 = vunpack.c.h.b16 %v5215
    %v5565 = vunpack.c.l.b16 %v5216
    %v5566 = vunpack.c.h.b16 %v5216
    %v5567 = vunpack.c.l.b16 %v5217
    %v5568 = vunpack.c.h.b16 %v5217
    %v5569 = vunpack.c.l.b16 %v5218
    %v5570 = vunpack.c.h.b16 %v5218
    %v5571 = vunpack.c.l.b16 %v5219
    %v5572 = vunpack.c.h.b16 %v5219
    %v5573 = vunpack.c.l.b16 %v5220
    %v5574 = vunpack.c.h.b16 %v5220
    %v5575 = vunpack.c.l.b16 %v5221
    %v5576 = vunpack.c.h.b16 %v5221
    %v5577 = vunpack.c.l.b16 %v5222
    %v5578 = vunpack.c.h.b16 %v5222
    %v5579 = vunpack.c.l.b16 %v5223
    %v5580 = vunpack.c.h.b16 %v5223
    %v5581 = vunpack.c.l.b16 %v5224
    %v5582 = vunpack.c.h.b16 %v5224
    %v5583 = vunpack.c.l.b16 %v5225
    %v5584 = vunpack.c.h.b16 %v5225
    %v5585 = vunpack.c.l.b16 %v5226
    %v5586 = vunpack.c.h.b16 %v5226
    %v5587 = vunpack.c.l.b16 %v5227
    %v5588 = vunpack.c.h.b16 %v5227
    %v5589 = vunpack.c.l.b16 %v5228
    %v5590 = vunpack.c.h.b16 %v5228
    %v5591 = vunpack.c.l.b16 %v5229
    %v5592 = vunpack.c.h.b16 %v5229
    %v5593 = vunpack.c.l.b16 %v5230
    %v5594 = vunpack.c.h.b16 %v5230
    %v5595 = vunpack.c.l.b16 %v5231
    %v5596 = vunpack.c.h.b16 %v5231
    %v5597 = vunpack.c.l.b16 %v5232
    %v5598 = vunpack.c.h.b16 %v5232
    %v5599 = vunpack.c.l.b16 %v5233
    %v5600 = vunpack.c.h.b16 %v5233
    %v5601 = vunpack.c.l.b16 %v5234
    %v5602 = vunpack.c.h.b16 %v5234
    %v5603 = vunpack.c.l.b16 %v5235
    %v5604 = vunpack.c.h.b16 %v5235
    %v5605 = vunpack.c.l.b16 %v5236
    %v5606 = vunpack.c.h.b16 %v5236
    %v5607 = vunpack.c.l.b16 %v5237
    %v5608 = vunpack.c.h.b16 %v5237
    %v5609 = vunpack.c.l.b16 %v5238
    %v5610 = vunpack.c.h.b16 %v5238
    %v5611 = vunpack.c.l.b16 %v5239
    %v5612 = vunpack.c.h.b16 %v5239
    %v5613 = vunpack.c.l.b16 %v5240
    %v5614 = vunpack.c.h.b16 %v5240
    %v5615 = vunpack.c.l.b16 %v5241
    %v5616 = vunpack.c.h.b16 %v5241
    %v5617 = vunpack.c.l.b16 %v5242
    %v5618 = vunpack.c.h.b16 %v5242
    %v5619 = vunpack.c.l.b16 %v5243
    %v5620 = vunpack.c.h.b16 %v5243
    %v5621 = vunpack.c.l.b16 %v5244
    %v5622 = vunpack.c.h.b16 %v5244
    %v5623 = vunpack.c.l.b16 %v5245
    %v5624 = vunpack.c.h.b16 %v5245
    %v5625 = vunpack.c.l.b16 %v5246
    %v5626 = vunpack.c.h.b16 %v5246
    %v5627 = vunpack.c.l.b16 %v5247
    %v5628 = vunpack.c.h.b16 %v5247
    %v5629 = vunpack.c.l.b16 %v5248
    %v5630 = vunpack.c.h.b16 %v5248
    %v5631 = vunpack.c.l.b16 %v5249
    %v5632 = vunpack.c.h.b16 %v5249
    %v5633 = vunpack.c.l.b16 %v5250
    %v5634 = vunpack.c.h.b16 %v5250
    %v5635 = vunpack.c.l.b16 %v5251
    %v5636 = vunpack.c.h.b16 %v5251
    %v5637 = vunpack.c.l.b16 %v5252
    %v5638 = vunpack.c.h.b16 %v5252
    %v5639 = vunpack.c.l.b16 %v5253
    %v5640 = vunpack.c.h.b16 %v5253
    %v5641 = vunpack.c.l.b16 %v5254
    %v5642 = vunpack.c.h.b16 %v5254
    %v5643 = vpack.c.b16 %v5391, %v5387
    %v5644 = vpack.c.b16 %v5392, %v5388
    %v5645 = vpack.c.b16 %v5393, %v5389
    %v5646 = vpack.c.b16 %v5394, %v5390
    %v5647 = vpack.c.b16 %v5399, %v5395
    %v5648 = vpack.c.b16 %v5400, %v5396
    %v5649 = vpack.c.b16 %v5401, %v5397
    %v5650 = vpack.c.b16 %v5402, %v5398
    %v5651 = vpack.c.b16 %v5407, %v5403
    %v5652 = vpack.c.b16 %v5408, %v5404
    %v5653 = vpack.c.b16 %v5409, %v5405
    %v5654 = vpack.c.b16 %v5410, %v5406
    %v5655 = vpack.c.b16 %v5415, %v5411
    %v5656 = vpack.c.b16 %v5416, %v5412
    %v5657 = vpack.c.b16 %v5417, %v5413
    %v5658 = vpack.c.b16 %v5418, %v5414
    %v5659 = vpack.c.b16 %v5423, %v5419
    %v5660 = vpack.c.b16 %v5424, %v5420
    %v5661 = vpack.c.b16 %v5425, %v5421
    %v5662 = vpack.c.b16 %v5426, %v5422
    %v5663 = vpack.c.b16 %v5431, %v5427
    %v5664 = vpack.c.b16 %v5432, %v5428
    %v5665 = vpack.c.b16 %v5433, %v5429
    %v5666 = vpack.c.b16 %v5434, %v5430
    %v5667 = vpack.c.b16 %v5439, %v5435
    %v5668 = vpack.c.b16 %v5440, %v5436
    %v5669 = vpack.c.b16 %v5441, %v5437
    %v5670 = vpack.c.b16 %v5442, %v5438
    %v5671 = vpack.c.b16 %v5447, %v5443
    %v5672 = vpack.c.b16 %v5448, %v5444
    %v5673 = vpack.c.b16 %v5449, %v5445
    %v5674 = vpack.c.b16 %v5450, %v5446
    %v5675 = vpack.c.b16 %v5455, %v5451
    %v5676 = vpack.c.b16 %v5456, %v5452
    %v5677 = vpack.c.b16 %v5457, %v5453
    %v5678 = vpack.c.b16 %v5458, %v5454
    %v5679 = vpack.c.b16 %v5463, %v5459
    %v5680 = vpack.c.b16 %v5464, %v5460
    %v5681 = vpack.c.b16 %v5465, %v5461
    %v5682 = vpack.c.b16 %v5466, %v5462
    %v5683 = vpack.c.b16 %v5471, %v5467
    %v5684 = vpack.c.b16 %v5472, %v5468
    %v5685 = vpack.c.b16 %v5473, %v5469
    %v5686 = vpack.c.b16 %v5474, %v5470
    %v5687 = vpack.c.b16 %v5479, %v5475
    %v5688 = vpack.c.b16 %v5480, %v5476
    %v5689 = vpack.c.b16 %v5481, %v5477
    %v5690 = vpack.c.b16 %v5482, %v5478
    %v5691 = vpack.c.b16 %v5487, %v5483
    %v5692 = vpack.c.b16 %v5488, %v5484
    %v5693 = vpack.c.b16 %v5489, %v5485
    %v5694 = vpack.c.b16 %v5490, %v5486
    %v5695 = vpack.c.b16 %v5495, %v5491
    %v5696 = vpack.c.b16 %v5496, %v5492
    %v5697 = vpack.c.b16 %v5497, %v5493
    %v5698 = vpack.c.b16 %v5498, %v5494
    %v5699 = vpack.c.b16 %v5503, %v5499
    %v5700 = vpack.c.b16 %v5504, %v5500
    %v5701 = vpack.c.b16 %v5505, %v5501
    %v5702 = vpack.c.b16 %v5506, %v5502
    %v5703 = vpack.c.b16 %v5511, %v5507
    %v5704 = vpack.c.b16 %v5512, %v5508
    %v5705 = vpack.c.b16 %v5513, %v5509
    %v5706 = vpack.c.b16 %v5514, %v5510
    %v5707 = vpack.c.b16 %v5519, %v5515
    %v5708 = vpack.c.b16 %v5520, %v5516
    %v5709 = vpack.c.b16 %v5521, %v5517
    %v5710 = vpack.c.b16 %v5522, %v5518
    %v5711 = vpack.c.b16 %v5527, %v5523
    %v5712 = vpack.c.b16 %v5528, %v5524
    %v5713 = vpack.c.b16 %v5529, %v5525
    %v5714 = vpack.c.b16 %v5530, %v5526
    %v5715 = vpack.c.b16 %v5535, %v5531
    %v5716 = vpack.c.b16 %v5536, %v5532
    %v5717 = vpack.c.b16 %v5537, %v5533
    %v5718 = vpack.c.b16 %v5538, %v5534
    %v5719 = vpack.c.b16 %v5543, %v5539
    %v5720 = vpack.c.b16 %v5544, %v5540
    %v5721 = vpack.c.b16 %v5545, %v5541
    %v5722 = vpack.c.b16 %v5546, %v5542
    %v5723 = vpack.c.b16 %v5551, %v5547
    %v5724 = vpack.c.b16 %v5552, %v5548
    %v5725 = vpack.c.b16 %v5553, %v5549
    %v5726 = vpack.c.b16 %v5554, %v5550
    %v5727 = vpack.c.b16 %v5559, %v5555
    %v5728 = vpack.c.b16 %v5560, %v5556
    %v5729 = vpack.c.b16 %v5561, %v5557
    %v5730 = vpack.c.b16 %v5562, %v5558
    %v5731 = vpack.c.b16 %v5567, %v5563
    %v5732 = vpack.c.b16 %v5568, %v5564
    %v5733 = vpack.c.b16 %v5569, %v5565
    %v5734 = vpack.c.b16 %v5570, %v5566
    %v5735 = vpack.c.b16 %v5575, %v5571
    %v5736 = vpack.c.b16 %v5576, %v5572
    %v5737 = vpack.c.b16 %v5577, %v5573
    %v5738 = vpack.c.b16 %v5578, %v5574
    %v5739 = vpack.c.b16 %v5583, %v5579
    %v5740 = vpack.c.b16 %v5584, %v5580
    %v5741 = vpack.c.b16 %v5585, %v5581
    %v5742 = vpack.c.b16 %v5586, %v5582
    %v5743 = vpack.c.b16 %v5591, %v5587
    %v5744 = vpack.c.b16 %v5592, %v5588
    %v5745 = vpack.c.b16 %v5593, %v5589
    %v5746 = vpack.c.b16 %v5594, %v5590
    %v5747 = vpack.c.b16 %v5599, %v5595
    %v5748 = vpack.c.b16 %v5600, %v5596
    %v5749 = vpack.c.b16 %v5601, %v5597
    %v5750 = vpack.c.b16 %v5602, %v5598
    %v5751 = vpack.c.b16 %v5607, %v5603
    %v5752 = vpack.c.b16 %v5608, %v5604
    %v5753 = vpack.c.b16 %v5609, %v5605
    %v5754 = vpack.c.b16 %v5610, %v5606
    %v5755 = vpack.c.b16 %v5615, %v5611
    %v5756 = vpack.c.b16 %v5616, %v5612
    %v5757 = vpack.c.b16 %v5617, %v5613
    %v5758 = vpack.c.b16 %v5618, %v5614
    %v5759 = vpack.c.b16 %v5623, %v5619
    %v5760 = vpack.c.b16 %v5624, %v5620
    %v5761 = vpack.c.b16 %v5625, %v5621
    %v5762 = vpack.c.b16 %v5626, %v5622
    %v5763 = vpack.c.b16 %v5631, %v5627
    %v5764 = vpack.c.b16 %v5632, %v5628
    %v5765 = vpack.c.b16 %v5633, %v5629
    %v5766 = vpack.c.b16 %v5634, %v5630
    %v5767 = vpack.c.b16 %v5639, %v5635
    %v5768 = vpack.c.b16 %v5640, %v5636
    %v5769 = vpack.c.b16 %v5641, %v5637
    %v5770 = vpack.c.b16 %v5642, %v5638
    %5899 = vmatpush.bf16.msra.mxu0 %v5671
    %5900 = vmatpush.bf16.msra.mxu0 %v5667
    %5901 = vmatpush.bf16.msra.mxu0 %v5663
    %5902 = vmatpush.bf16.msra.mxu0 %v5659
    %5903 = vmatpush.bf16.msra.mxu0 %v5655
    %5904 = vmatpush.bf16.msra.mxu0 %v5651
    %5905 = vmatpush.bf16.msra.mxu0 %v5647
    %5906 = vmatpush.bf16.msra.mxu0 %v5643
    %5907 = vmatmul.bf16.gmra.mxu0 %v5255
    %v5908 = vpop.f32.mrf.mxu0
    %v5909 = vadd.f32 0.0, %v5908
    %v5910 = vpop.f32.mrf.mxu0
    %5911 = vdwg.mxu0
    %5912 = vmatpush.bf16.msra.mxu0 %v5703
    %5913 = vmatpush.bf16.msra.mxu0 %v5699
    %5914 = vmatpush.bf16.msra.mxu0 %v5695
    %5915 = vmatpush.bf16.msra.mxu0 %v5691
    %5916 = vmatpush.bf16.msra.mxu0 %v5687
    %5917 = vmatpush.bf16.msra.mxu0 %v5683
    %5918 = vmatpush.bf16.msra.mxu0 %v5679
    %5919 = vmatpush.bf16.msra.mxu0 %v5675
    %5920 = vmatmul.bf16.gmra.mxu0 %v5256
    %v5921 = vpop.f32.mrf.mxu0
    %v5922 = vadd.f32 %v5909, %v5921
    %v5923 = vpop.f32.mrf.mxu0
    %5924 = vdwg.mxu0
    %5925 = vmatpush.bf16.msra.mxu0 %v5735
    %5926 = vmatpush.bf16.msra.mxu0 %v5731
    %5927 = vmatpush.bf16.msra.mxu0 %v5727
    %5928 = vmatpush.bf16.msra.mxu0 %v5723
    %5929 = vmatpush.bf16.msra.mxu0 %v5719
    %5930 = vmatpush.bf16.msra.mxu0 %v5715
    %5931 = vmatpush.bf16.msra.mxu0 %v5711
    %5932 = vmatpush.bf16.msra.mxu0 %v5707
    %5933 = vmatmul.bf16.gmra.mxu0 %v5257
    %v5934 = vpop.f32.mrf.mxu0
    %v5935 = vadd.f32 %v5922, %v5934
    %v5936 = vpop.f32.mrf.mxu0
    %5937 = vdwg.mxu0
    %5938 = vmatpush.bf16.msra.mxu0 %v5767
    %5939 = vmatpush.bf16.msra.mxu0 %v5763
    %5940 = vmatpush.bf16.msra.mxu0 %v5759
    %5941 = vmatpush.bf16.msra.mxu0 %v5755
    %5942 = vmatpush.bf16.msra.mxu0 %v5751
    %5943 = vmatpush.bf16.msra.mxu0 %v5747
    %5944 = vmatpush.bf16.msra.mxu0 %v5743
    %5945 = vmatpush.bf16.msra.mxu0 %v5739
    %5946 = vmatmul.bf16.gmra.mxu0 %v5258
    %v5947 = vpop.f32.mrf.mxu0
    %v5948 = vadd.f32 %v5935, %v5947
    %v5949 = vpop.f32.mrf.mxu0
    %5950 = vdwg.mxu0
    %5951 = vmatpush.bf16.msra.mxu0 %v5672
    %5952 = vmatpush.bf16.msra.mxu0 %v5668
    %5953 = vmatpush.bf16.msra.mxu0 %v5664
    %5954 = vmatpush.bf16.msra.mxu0 %v5660
    %5955 = vmatpush.bf16.msra.mxu0 %v5656
    %5956 = vmatpush.bf16.msra.mxu0 %v5652
    %5957 = vmatpush.bf16.msra.mxu0 %v5648
    %5958 = vmatpush.bf16.msra.mxu0 %v5644
    %5959 = vmatmul.bf16.gmra.mxu0 %v5255
    %v5960 = vpop.f32.mrf.mxu0
    %v5961 = vadd.f32 0.0, %v5960
    %v5962 = vpop.f32.mrf.mxu0
    %5963 = vdwg.mxu0
    %5964 = vmatpush.bf16.msra.mxu0 %v5704
    %5965 = vmatpush.bf16.msra.mxu0 %v5700
    %5966 = vmatpush.bf16.msra.mxu0 %v5696
    %5967 = vmatpush.bf16.msra.mxu0 %v5692
    %5968 = vmatpush.bf16.msra.mxu0 %v5688
    %5969 = vmatpush.bf16.msra.mxu0 %v5684
    %5970 = vmatpush.bf16.msra.mxu0 %v5680
    %5971 = vmatpush.bf16.msra.mxu0 %v5676
    %5972 = vmatmul.bf16.gmra.mxu0 %v5256
    %v5973 = vpop.f32.mrf.mxu0
    %v5974 = vadd.f32 %v5961, %v5973
    %v5975 = vpop.f32.mrf.mxu0
    %5976 = vdwg.mxu0
    %5977 = vmatpush.bf16.msra.mxu0 %v5736
    %5978 = vmatpush.bf16.msra.mxu0 %v5732
    %5979 = vmatpush.bf16.msra.mxu0 %v5728
    %5980 = vmatpush.bf16.msra.mxu0 %v5724
    %5981 = vmatpush.bf16.msra.mxu0 %v5720
    %5982 = vmatpush.bf16.msra.mxu0 %v5716
    %5983 = vmatpush.bf16.msra.mxu0 %v5712
    %5984 = vmatpush.bf16.msra.mxu0 %v5708
    %5985 = vmatmul.bf16.gmra.mxu0 %v5257
    %v5986 = vpop.f32.mrf.mxu0
    %v5987 = vadd.f32 %v5974, %v5986
    %v5988 = vpop.f32.mrf.mxu0
    %5989 = vdwg.mxu0
    %5990 = vmatpush.bf16.msra.mxu0 %v5768
    %5991 = vmatpush.bf16.msra.mxu0 %v5764
    %5992 = vmatpush.bf16.msra.mxu0 %v5760
    %5993 = vmatpush.bf16.msra.mxu0 %v5756
    %5994 = vmatpush.bf16.msra.mxu0 %v5752
    %5995 = vmatpush.bf16.msra.mxu0 %v5748
    %5996 = vmatpush.bf16.msra.mxu0 %v5744
    %5997 = vmatpush.bf16.msra.mxu0 %v5740
    %5998 = vmatmul.bf16.gmra.mxu0 %v5258
    %v5999 = vpop.f32.mrf.mxu0
    %v6000 = vadd.f32 %v5987, %v5999
    %v6001 = vpop.f32.mrf.mxu0
    %6002 = vdwg.mxu0
    %6003 = vmatpush.bf16.msra.mxu0 %v5673
    %6004 = vmatpush.bf16.msra.mxu0 %v5669
    %6005 = vmatpush.bf16.msra.mxu0 %v5665
    %6006 = vmatpush.bf16.msra.mxu0 %v5661
    %6007 = vmatpush.bf16.msra.mxu0 %v5657
    %6008 = vmatpush.bf16.msra.mxu0 %v5653
    %6009 = vmatpush.bf16.msra.mxu0 %v5649
    %6010 = vmatpush.bf16.msra.mxu0 %v5645
    %6011 = vmatmul.bf16.gmra.mxu0 %v5255
    %v6012 = vpop.f32.mrf.mxu0
    %v6013 = vadd.f32 0.0, %v6012
    %v6014 = vpop.f32.mrf.mxu0
    %6015 = vdwg.mxu0
    %6016 = vmatpush.bf16.msra.mxu0 %v5705
    %6017 = vmatpush.bf16.msra.mxu0 %v5701
    %6018 = vmatpush.bf16.msra.mxu0 %v5697
    %6019 = vmatpush.bf16.msra.mxu0 %v5693
    %6020 = vmatpush.bf16.msra.mxu0 %v5689
    %6021 = vmatpush.bf16.msra.mxu0 %v5685
    %6022 = vmatpush.bf16.msra.mxu0 %v5681
    %6023 = vmatpush.bf16.msra.mxu0 %v5677
    %6024 = vmatmul.bf16.gmra.mxu0 %v5256
    %v6025 = vpop.f32.mrf.mxu0
    %v6026 = vadd.f32 %v6013, %v6025
    %v6027 = vpop.f32.mrf.mxu0
    %6028 = vdwg.mxu0
    %6029 = vmatpush.bf16.msra.mxu0 %v5737
    %6030 = vmatpush.bf16.msra.mxu0 %v5733
    %6031 = vmatpush.bf16.msra.mxu0 %v5729
    %6032 = vmatpush.bf16.msra.mxu0 %v5725
    %6033 = vmatpush.bf16.msra.mxu0 %v5721
    %6034 = vmatpush.bf16.msra.mxu0 %v5717
    %6035 = vmatpush.bf16.msra.mxu0 %v5713
    %6036 = vmatpush.bf16.msra.mxu0 %v5709
    %6037 = vmatmul.bf16.gmra.mxu0 %v5257
    %v6038 = vpop.f32.mrf.mxu0
    %v6039 = vadd.f32 %v6026, %v6038
    %v6040 = vpop.f32.mrf.mxu0
    %6041 = vdwg.mxu0
    %6042 = vmatpush.bf16.msra.mxu0 %v5769
    %6043 = vmatpush.bf16.msra.mxu0 %v5765
    %6044 = vmatpush.bf16.msra.mxu0 %v5761
    %6045 = vmatpush.bf16.msra.mxu0 %v5757
    %6046 = vmatpush.bf16.msra.mxu0 %v5753
    %6047 = vmatpush.bf16.msra.mxu0 %v5749
    %6048 = vmatpush.bf16.msra.mxu0 %v5745
    %6049 = vmatpush.bf16.msra.mxu0 %v5741
    %6050 = vmatmul.bf16.gmra.mxu0 %v5258
    %v6051 = vpop.f32.mrf.mxu0
    %v6052 = vadd.f32 %v6039, %v6051
    %v6053 = vpop.f32.mrf.mxu0
    %6054 = vdwg.mxu0
    %6055 = vmatpush.bf16.msra.mxu0 %v5674
    %6056 = vmatpush.bf16.msra.mxu0 %v5670
    %6057 = vmatpush.bf16.msra.mxu0 %v5666
    %6058 = vmatpush.bf16.msra.mxu0 %v5662
    %6059 = vmatpush.bf16.msra.mxu0 %v5658
    %6060 = vmatpush.bf16.msra.mxu0 %v5654
    %6061 = vmatpush.bf16.msra.mxu0 %v5650
    %6062 = vmatpush.bf16.msra.mxu0 %v5646
    %6063 = vmatmul.bf16.gmra.mxu0 %v5255
    %v6064 = vpop.f32.mrf.mxu0
    %v6065 = vadd.f32 0.0, %v6064
    %v6066 = vpop.f32.mrf.mxu0
    %6067 = vdwg.mxu0
    %6068 = vmatpush.bf16.msra.mxu0 %v5706
    %6069 = vmatpush.bf16.msra.mxu0 %v5702
    %6070 = vmatpush.bf16.msra.mxu0 %v5698
    %6071 = vmatpush.bf16.msra.mxu0 %v5694
    %6072 = vmatpush.bf16.msra.mxu0 %v5690
    %6073 = vmatpush.bf16.msra.mxu0 %v5686
    %6074 = vmatpush.bf16.msra.mxu0 %v5682
    %6075 = vmatpush.bf16.msra.mxu0 %v5678
    %6076 = vmatmul.bf16.gmra.mxu0 %v5256
    %v6077 = vpop.f32.mrf.mxu0
    %v6078 = vadd.f32 %v6065, %v6077
    %v6079 = vpop.f32.mrf.mxu0
    %6080 = vdwg.mxu0
    %6081 = vmatpush.bf16.msra.mxu0 %v5738
    %6082 = vmatpush.bf16.msra.mxu0 %v5734
    %6083 = vmatpush.bf16.msra.mxu0 %v5730
    %6084 = vmatpush.bf16.msra.mxu0 %v5726
    %6085 = vmatpush.bf16.msra.mxu0 %v5722
    %6086 = vmatpush.bf16.msra.mxu0 %v5718
    %6087 = vmatpush.bf16.msra.mxu0 %v5714
    %6088 = vmatpush.bf16.msra.mxu0 %v5710
    %6089 = vmatmul.bf16.gmra.mxu0 %v5257
    %v6090 = vpop.f32.mrf.mxu0
    %v6091 = vadd.f32 %v6078, %v6090
    %v6092 = vpop.f32.mrf.mxu0
    %6093 = vdwg.mxu0
    %6094 = vmatpush.bf16.msra.mxu0 %v5770
    %6095 = vmatpush.bf16.msra.mxu0 %v5766
    %6096 = vmatpush.bf16.msra.mxu0 %v5762
    %6097 = vmatpush.bf16.msra.mxu0 %v5758
    %6098 = vmatpush.bf16.msra.mxu0 %v5754
    %6099 = vmatpush.bf16.msra.mxu0 %v5750
    %6100 = vmatpush.bf16.msra.mxu0 %v5746
    %6101 = vmatpush.bf16.msra.mxu0 %v5742
    %6102 = vmatmul.bf16.gmra.mxu0 %v5258
    %v6103 = vpop.f32.mrf.mxu0
    %v6104 = vadd.f32 %v6091, %v6103
    %v6105 = vpop.f32.mrf.mxu0
    %6106 = vdwg.mxu0
    %v6107 = vmul.f32 %v5948, %v5948
    %v6108 = vmul.f32 %v6000, %v6000
    %v6109 = vmul.f32 %v6052, %v6052
    %v6110 = vmul.f32 %v6104, %v6104
    %v6111 = vpack.c.bf16 %v6107, %v5948
    %v6112 = vpack.c.bf16 %v6108, %v6000
    %v6113 = vpack.c.bf16 %v6109, %v6052
    %v6114 = vpack.c.bf16 %v6110, %v6104
    %v6115 = vld [vmem:[#allocation13] sm:$0xf]
    %v6116 = vld [vmem:[#allocation13 + $0x4] sm:$0xf]
    %v6117 = vld [vmem:[#allocation13 + $0x8] sm:$0xf]
    %v6118 = vld [vmem:[#allocation13 + $0xc] sm:$0xf]
    %v6119 = vld [vmem:[#allocation13 + $0x10] sm:$0xf]
    %v6120 = vld [vmem:[#allocation13 + $0x14] sm:$0xf]
    %v6121 = vld [vmem:[#allocation13 + $0x18] sm:$0xf]
    %v6122 = vld [vmem:[#allocation13 + $0x1c] sm:$0xf]
    %v6123 = vld [vmem:[#allocation13 + $0x20] sm:$0xf]
    %v6124 = vld [vmem:[#allocation13 + $0x24] sm:$0xf]
    %v6125 = vld [vmem:[#allocation13 + $0x28] sm:$0xf]
    %v6126 = vld [vmem:[#allocation13 + $0x2c] sm:$0xf]
    %v6127 = vld [vmem:[#allocation13 + $0x30] sm:$0xf]
    %v6128 = vld [vmem:[#allocation13 + $0x34] sm:$0xf]
    %v6129 = vld [vmem:[#allocation13 + $0x38] sm:$0xf]
    %v6130 = vld [vmem:[#allocation13 + $0x3c] sm:$0xf]
    %v6131 = vld [vmem:[#allocation13 + $0x40] sm:$0xf]
    %v6132 = vld [vmem:[#allocation13 + $0x44] sm:$0xf]
    %v6133 = vld [vmem:[#allocation13 + $0x48] sm:$0xf]
    %v6134 = vld [vmem:[#allocation13 + $0x4c] sm:$0xf]
    %v6135 = vld [vmem:[#allocation13 + $0x50] sm:$0xf]
    %v6136 = vld [vmem:[#allocation13 + $0x54] sm:$0xf]
    %v6137 = vld [vmem:[#allocation13 + $0x58] sm:$0xf]
    %v6138 = vld [vmem:[#allocation13 + $0x5c] sm:$0xf]
    %v6139 = vld [vmem:[#allocation13 + $0x60] sm:$0xf]
    %v6140 = vld [vmem:[#allocation13 + $0x64] sm:$0xf]
    %v6141 = vld [vmem:[#allocation13 + $0x68] sm:$0xf]
    %v6142 = vld [vmem:[#allocation13 + $0x6c] sm:$0xf]
    %v6143 = vld [vmem:[#allocation13 + $0x70] sm:$0xf]
    %v6144 = vld [vmem:[#allocation13 + $0x74] sm:$0xf]
    %v6145 = vld [vmem:[#allocation13 + $0x78] sm:$0xf]
    %v6146 = vld [vmem:[#allocation13 + $0x7c] sm:$0xf]
    %v6147 = vld [vmem:[#allocation13 + $0x80] sm:$0xf]
    %v6148 = vld [vmem:[#allocation13 + $0x84] sm:$0xf]
    %v6149 = vld [vmem:[#allocation13 + $0x88] sm:$0xf]
    %v6150 = vld [vmem:[#allocation13 + $0x8c] sm:$0xf]
    %v6151 = vld [vmem:[#allocation13 + $0x90] sm:$0xf]
    %v6152 = vld [vmem:[#allocation13 + $0x94] sm:$0xf]
    %v6153 = vld [vmem:[#allocation13 + $0x98] sm:$0xf]
    %v6154 = vld [vmem:[#allocation13 + $0x9c] sm:$0xf]
    %v6155 = vld [vmem:[#allocation13 + $0xa0] sm:$0xf]
    %v6156 = vld [vmem:[#allocation13 + $0xa4] sm:$0xf]
    %v6157 = vld [vmem:[#allocation13 + $0xa8] sm:$0xf]
    %v6158 = vld [vmem:[#allocation13 + $0xac] sm:$0xf]
    %v6159 = vld [vmem:[#allocation13 + $0xb0] sm:$0xf]
    %v6160 = vld [vmem:[#allocation13 + $0xb4] sm:$0xf]
    %v6161 = vld [vmem:[#allocation13 + $0xb8] sm:$0xf]
    %v6162 = vld [vmem:[#allocation13 + $0xbc] sm:$0xf]
    %v6163 = vld [vmem:[#allocation13 + $0xc0] sm:$0xf]
    %v6164 = vld [vmem:[#allocation13 + $0xc4] sm:$0xf]
    %v6165 = vld [vmem:[#allocation13 + $0xc8] sm:$0xf]
    %v6166 = vld [vmem:[#allocation13 + $0xcc] sm:$0xf]
    %v6167 = vld [vmem:[#allocation13 + $0xd0] sm:$0xf]
    %v6168 = vld [vmem:[#allocation13 + $0xd4] sm:$0xf]
    %v6169 = vld [vmem:[#allocation13 + $0xd8] sm:$0xf]
    %v6170 = vld [vmem:[#allocation13 + $0xdc] sm:$0xf]
    %v6171 = vld [vmem:[#allocation13 + $0xe0] sm:$0xf]
    %v6172 = vld [vmem:[#allocation13 + $0xe4] sm:$0xf]
    %v6173 = vld [vmem:[#allocation13 + $0xe8] sm:$0xf]
    %v6174 = vld [vmem:[#allocation13 + $0xec] sm:$0xf]
    %v6175 = vld [vmem:[#allocation13 + $0xf0] sm:$0xf]
    %v6176 = vld [vmem:[#allocation13 + $0xf4] sm:$0xf]
    %v6177 = vld [vmem:[#allocation13 + $0xf8] sm:$0xf]
    %v6178 = vld [vmem:[#allocation13 + $0xfc] sm:$0xf]
    %v6243 = vunpack.c.l.b16 %v6115
    %v6244 = vunpack.c.l.b16 %v6116
    %v6245 = vunpack.c.l.b16 %v6117
    %v6246 = vunpack.c.l.b16 %v6118
    %v6247 = vunpack.c.l.b16 %v6119
    %v6248 = vunpack.c.l.b16 %v6120
    %v6249 = vunpack.c.l.b16 %v6121
    %v6250 = vunpack.c.l.b16 %v6122
    %v6251 = vunpack.c.l.b16 %v6123
    %v6252 = vunpack.c.l.b16 %v6124
    %v6253 = vunpack.c.l.b16 %v6125
    %v6254 = vunpack.c.l.b16 %v6126
    %v6255 = vunpack.c.l.b16 %v6127
    %v6256 = vunpack.c.l.b16 %v6128
    %v6257 = vunpack.c.l.b16 %v6129
    %v6258 = vunpack.c.l.b16 %v6130
    %v6259 = vunpack.c.l.b16 %v6131
    %v6260 = vunpack.c.l.b16 %v6132
    %v6261 = vunpack.c.l.b16 %v6133
    %v6262 = vunpack.c.l.b16 %v6134
    %v6263 = vunpack.c.l.b16 %v6135
    %v6264 = vunpack.c.l.b16 %v6136
    %v6265 = vunpack.c.l.b16 %v6137
    %v6266 = vunpack.c.l.b16 %v6138
    %v6267 = vunpack.c.l.b16 %v6139
    %v6268 = vunpack.c.l.b16 %v6140
    %v6269 = vunpack.c.l.b16 %v6141
    %v6270 = vunpack.c.l.b16 %v6142
    %v6271 = vunpack.c.l.b16 %v6143
    %v6272 = vunpack.c.l.b16 %v6144
    %v6273 = vunpack.c.l.b16 %v6145
    %v6274 = vunpack.c.l.b16 %v6146
    %v6275 = vunpack.c.l.b16 %v6147
    %v6276 = vunpack.c.l.b16 %v6148
    %v6277 = vunpack.c.l.b16 %v6149
    %v6278 = vunpack.c.l.b16 %v6150
    %v6279 = vunpack.c.l.b16 %v6151
    %v6280 = vunpack.c.l.b16 %v6152
    %v6281 = vunpack.c.l.b16 %v6153
    %v6282 = vunpack.c.l.b16 %v6154
    %v6283 = vunpack.c.l.b16 %v6155
    %v6284 = vunpack.c.l.b16 %v6156
    %v6285 = vunpack.c.l.b16 %v6157
    %v6286 = vunpack.c.l.b16 %v6158
    %v6287 = vunpack.c.l.b16 %v6159
    %v6288 = vunpack.c.l.b16 %v6160
    %v6289 = vunpack.c.l.b16 %v6161
    %v6290 = vunpack.c.l.b16 %v6162
    %v6291 = vunpack.c.l.b16 %v6163
    %v6292 = vunpack.c.l.b16 %v6164
    %v6293 = vunpack.c.l.b16 %v6165
    %v6294 = vunpack.c.l.b16 %v6166
    %v6295 = vunpack.c.l.b16 %v6167
    %v6296 = vunpack.c.l.b16 %v6168
    %v6297 = vunpack.c.l.b16 %v6169
    %v6298 = vunpack.c.l.b16 %v6170
    %v6299 = vunpack.c.l.b16 %v6171
    %v6300 = vunpack.c.l.b16 %v6172
    %v6301 = vunpack.c.l.b16 %v6173
    %v6302 = vunpack.c.l.b16 %v6174
    %v6303 = vunpack.c.l.b16 %v6175
    %v6304 = vunpack.c.l.b16 %v6176
    %v6305 = vunpack.c.l.b16 %v6177
    %v6306 = vunpack.c.l.b16 %v6178
    %v6307 = vpack.c.b16 %v6244, %v6243
    %v6308 = vpack.c.b16 %v6246, %v6245
    %v6309 = vpack.c.b16 %v6248, %v6247
    %v6310 = vpack.c.b16 %v6250, %v6249
    %v6311 = vpack.c.b16 %v6252, %v6251
    %v6312 = vpack.c.b16 %v6254, %v6253
    %v6313 = vpack.c.b16 %v6256, %v6255
    %v6314 = vpack.c.b16 %v6258, %v6257
    %v6315 = vpack.c.b16 %v6260, %v6259
    %v6316 = vpack.c.b16 %v6262, %v6261
    %v6317 = vpack.c.b16 %v6264, %v6263
    %v6318 = vpack.c.b16 %v6266, %v6265
    %v6319 = vpack.c.b16 %v6268, %v6267
    %v6320 = vpack.c.b16 %v6270, %v6269
    %v6321 = vpack.c.b16 %v6272, %v6271
    %v6322 = vpack.c.b16 %v6274, %v6273
    %v6323 = vpack.c.b16 %v6276, %v6275
    %v6324 = vpack.c.b16 %v6278, %v6277
    %v6325 = vpack.c.b16 %v6280, %v6279
    %v6326 = vpack.c.b16 %v6282, %v6281
    %v6327 = vpack.c.b16 %v6284, %v6283
    %v6328 = vpack.c.b16 %v6286, %v6285
    %v6329 = vpack.c.b16 %v6288, %v6287
    %v6330 = vpack.c.b16 %v6290, %v6289
    %v6331 = vpack.c.b16 %v6292, %v6291
    %v6332 = vpack.c.b16 %v6294, %v6293
    %v6333 = vpack.c.b16 %v6296, %v6295
    %v6334 = vpack.c.b16 %v6298, %v6297
    %v6335 = vpack.c.b16 %v6300, %v6299
    %v6336 = vpack.c.b16 %v6302, %v6301
    %v6337 = vpack.c.b16 %v6304, %v6303
    %v6338 = vpack.c.b16 %v6306, %v6305
    %6371 = vmatpush.bf16.msra.mxu0 %v6314
    %6372 = vmatpush.bf16.msra.mxu0 %v6313
    %6373 = vmatpush.bf16.msra.mxu0 %v6312
    %6374 = vmatpush.bf16.msra.mxu0 %v6311
    %6375 = vmatpush.bf16.msra.mxu0 %v6310
    %6376 = vmatpush.bf16.msra.mxu0 %v6309
    %6377 = vmatpush.bf16.msra.mxu0 %v6308
    %6378 = vmatpush.bf16.msra.mxu0 %v6307
    %6379 = vmatmul.bf16.gmra.mxu0 %v6111
    %v6380 = vpop.f32.mrf.mxu0
    %v6381 = vadd.f32 0.0, %v6380
    %v6382 = vpop.f32.mrf.mxu0
    %v6383 = vadd.f32 0.0, %v6382
    %6384 = vdwg.mxu0
    %6385 = vmatpush.bf16.msra.mxu0 %v6322
    %6386 = vmatpush.bf16.msra.mxu0 %v6321
    %6387 = vmatpush.bf16.msra.mxu0 %v6320
    %6388 = vmatpush.bf16.msra.mxu0 %v6319
    %6389 = vmatpush.bf16.msra.mxu0 %v6318
    %6390 = vmatpush.bf16.msra.mxu0 %v6317
    %6391 = vmatpush.bf16.msra.mxu0 %v6316
    %6392 = vmatpush.bf16.msra.mxu0 %v6315
    %6393 = vmatmul.bf16.gmra.mxu0 %v6112
    %v6394 = vpop.f32.mrf.mxu0
    %v6395 = vadd.f32 %v6381, %v6394
    %v6396 = vpop.f32.mrf.mxu0
    %v6397 = vadd.f32 %v6383, %v6396
    %6398 = vdwg.mxu0
    %6399 = vmatpush.bf16.msra.mxu0 %v6330
    %6400 = vmatpush.bf16.msra.mxu0 %v6329
    %6401 = vmatpush.bf16.msra.mxu0 %v6328
    %6402 = vmatpush.bf16.msra.mxu0 %v6327
    %6403 = vmatpush.bf16.msra.mxu0 %v6326
    %6404 = vmatpush.bf16.msra.mxu0 %v6325
    %6405 = vmatpush.bf16.msra.mxu0 %v6324
    %6406 = vmatpush.bf16.msra.mxu0 %v6323
    %6407 = vmatmul.bf16.gmra.mxu0 %v6113
    %v6408 = vpop.f32.mrf.mxu0
    %v6409 = vadd.f32 %v6395, %v6408
    %v6410 = vpop.f32.mrf.mxu0
    %v6411 = vadd.f32 %v6397, %v6410
    %6412 = vdwg.mxu0
    %6413 = vmatpush.bf16.msra.mxu0 %v6338
    %6414 = vmatpush.bf16.msra.mxu0 %v6337
    %6415 = vmatpush.bf16.msra.mxu0 %v6336
    %6416 = vmatpush.bf16.msra.mxu0 %v6335
    %6417 = vmatpush.bf16.msra.mxu0 %v6334
    %6418 = vmatpush.bf16.msra.mxu0 %v6333
    %6419 = vmatpush.bf16.msra.mxu0 %v6332
    %6420 = vmatpush.bf16.msra.mxu0 %v6331
    %6421 = vmatmul.bf16.gmra.mxu0 %v6114
    %v6422 = vpop.f32.mrf.mxu0
    %v6423 = vadd.f32 %v6409, %v6422
    %v6424 = vpop.f32.mrf.mxu0
    %v6425 = vadd.f32 %v6411, %v6424
    %6426 = vdwg.mxu0
    %v6427 = vmul.f32 %v6423, 0.11111111
    %v6428 = vmul.f32 %v6425, 0.11111111
    %v6429 = vmul.f32 %v6427, %v6427
    %v6430 = vsub.f32 %v6428, %v6429
    %v6431 = vmax.f32 %v6430, 0.0
    %v6432 = vadd.f32 %v6431, 1e-05
    %v6433 = vrsqrt.pop %v6432
    %v6434 = vmul.f32 %v6433, %v6432
    %v6435 = vmul.f32 %v6434, %v6433
    %v6436 = vmul.f32 0.5, %v6435
    %v6437 = vsub.f32 1.5, %v6436
    %v6438 = vmul.f32 %v6433, %v6437
    %vm6439 = vweird.f32 %v6432
    %vm6440 = vweird.f32 %v6433
    %vm6441 = vmor %vm6439, %vm6440
    %v6442 = vsel %vm6441, %v6433, %v6438
    %v6443 = vsub.f32 0.0, %v6427
    %v6444 = vmul.f32 %v6443, %v6442
    %v6445 = vld [vmem:[#allocation14] sm:$0xff]
    %v6446 = vld [vmem:[#allocation14 + $0x8] sm:$0xff]
    %v6447 = vld [vmem:[#allocation14 + $0x10] sm:$0xff]
    %v6448 = vld [vmem:[#allocation14 + $0x18] sm:$0xff]
    %v6449 = vld [vmem:[#allocation14 + $0x20] sm:$0xff]
    %v6450 = vld [vmem:[#allocation14 + $0x28] sm:$0xff]
    %v6451 = vld [vmem:[#allocation14 + $0x30] sm:$0xff]
    %v6452 = vld [vmem:[#allocation14 + $0x38] sm:$0xff]
    %v6453 = vld [vmem:[#allocation14 + $0x40] sm:$0xff]
    %v6454 = vld [vmem:[#allocation14 + $0x48] sm:$0xff]
    %v6455 = vld [vmem:[#allocation14 + $0x50] sm:$0xff]
    %v6456 = vld [vmem:[#allocation14 + $0x58] sm:$0xff]
    %v6457 = vld [vmem:[#allocation14 + $0x60] sm:$0xff]
    %v6458 = vld [vmem:[#allocation14 + $0x68] sm:$0xff]
    %v6459 = vld [vmem:[#allocation14 + $0x70] sm:$0xff]
    %v6460 = vld [vmem:[#allocation14 + $0x78] sm:$0xff]
    %vm6461 = vcmask 261120
    %v6463 = vsel %vm6461, %v6442, 0
    %v6466 = vsel %vm6461, %v6444, 0
    %6468 = vmatpush.msra.mxu0 0.0
    %6469 = vmatpush.msra.mxu0 0.0
    %6470 = vmatpush.msra.mxu0 0.0
    %6471 = vmatpush.msra.mxu0 0.0
    %6472 = vmatpush.msra.mxu0 0.0
    %6473 = vmatpush.msra.mxu0 0.0
    %6474 = vmatpush.msra.mxu0 0.0
    %6475 = vmatpush.msra.mxu0 0.0
    %6476 = vmatpush.msra.mxu0 0.0
    %6477 = vmatpush.msra.mxu0 0.0
    %6478 = vmatpush.msra.mxu0 0.0
    %6479 = vmatpush.msra.mxu0 0.0
    %6480 = vmatpush.msra.mxu0 %v6457
    %6481 = vmatpush.msra.mxu0 %v6453
    %6482 = vmatpush.msra.mxu0 %v6449
    %6483 = vmatpush.msra.mxu0 %v6445
    %6484 = vmatmul.f32.gmra.mxu0 %v6463
    %v6485 = vpop.f32.mrf.mxu0
    %v6486 = vadd.f32 0.0, %v6485
    %6487 = vmatmul.f32.gmra.mxu0 %v6466
    %v6488 = vpop.f32.mrf.mxu0
    %v6489 = vadd.f32 0.0, %v6488
    %6490 = vdwg.mxu0
    %6491 = vmatpush.msra.mxu0 0.0
    %6492 = vmatpush.msra.mxu0 0.0
    %6493 = vmatpush.msra.mxu0 0.0
    %6494 = vmatpush.msra.mxu0 0.0
    %6495 = vmatpush.msra.mxu0 0.0
    %6496 = vmatpush.msra.mxu0 0.0
    %6497 = vmatpush.msra.mxu0 0.0
    %6498 = vmatpush.msra.mxu0 0.0
    %6499 = vmatpush.msra.mxu0 0.0
    %6500 = vmatpush.msra.mxu0 0.0
    %6501 = vmatpush.msra.mxu0 0.0
    %6502 = vmatpush.msra.mxu0 0.0
    %6503 = vmatpush.msra.mxu0 %v6458
    %6504 = vmatpush.msra.mxu0 %v6454
    %6505 = vmatpush.msra.mxu0 %v6450
    %6506 = vmatpush.msra.mxu0 %v6446
    %6507 = vmatmul.f32.gmra.mxu0 %v6463
    %v6508 = vpop.f32.mrf.mxu0
    %v6509 = vadd.f32 0.0, %v6508
    %6510 = vmatmul.f32.gmra.mxu0 %v6466
    %v6511 = vpop.f32.mrf.mxu0
    %v6512 = vadd.f32 0.0, %v6511
    %6513 = vdwg.mxu0
    %6514 = vmatpush.msra.mxu0 0.0
    %6515 = vmatpush.msra.mxu0 0.0
    %6516 = vmatpush.msra.mxu0 0.0
    %6517 = vmatpush.msra.mxu0 0.0
    %6518 = vmatpush.msra.mxu0 0.0
    %6519 = vmatpush.msra.mxu0 0.0
    %6520 = vmatpush.msra.mxu0 0.0
    %6521 = vmatpush.msra.mxu0 0.0
    %6522 = vmatpush.msra.mxu0 0.0
    %6523 = vmatpush.msra.mxu0 0.0
    %6524 = vmatpush.msra.mxu0 0.0
    %6525 = vmatpush.msra.mxu0 0.0
    %6526 = vmatpush.msra.mxu0 %v6459
    %6527 = vmatpush.msra.mxu0 %v6455
    %6528 = vmatpush.msra.mxu0 %v6451
    %6529 = vmatpush.msra.mxu0 %v6447
    %6530 = vmatmul.f32.gmra.mxu0 %v6463
    %v6531 = vpop.f32.mrf.mxu0
    %v6532 = vadd.f32 0.0, %v6531
    %6533 = vmatmul.f32.gmra.mxu0 %v6466
    %v6534 = vpop.f32.mrf.mxu0
    %v6535 = vadd.f32 0.0, %v6534
    %6536 = vdwg.mxu0
    %6537 = vmatpush.msra.mxu0 0.0
    %6538 = vmatpush.msra.mxu0 0.0
    %6539 = vmatpush.msra.mxu0 0.0
    %6540 = vmatpush.msra.mxu0 0.0
    %6541 = vmatpush.msra.mxu0 0.0
    %6542 = vmatpush.msra.mxu0 0.0
    %6543 = vmatpush.msra.mxu0 0.0
    %6544 = vmatpush.msra.mxu0 0.0
    %6545 = vmatpush.msra.mxu0 0.0
    %6546 = vmatpush.msra.mxu0 0.0
    %6547 = vmatpush.msra.mxu0 0.0
    %6548 = vmatpush.msra.mxu0 0.0
    %6549 = vmatpush.msra.mxu0 %v6460
    %6550 = vmatpush.msra.mxu0 %v6456
    %6551 = vmatpush.msra.mxu0 %v6452
    %6552 = vmatpush.msra.mxu0 %v6448
    %6553 = vmatmul.f32.gmra.mxu0 %v6463
    %v6554 = vpop.f32.mrf.mxu0
    %v6555 = vadd.f32 0.0, %v6554
    %6556 = vmatmul.f32.gmra.mxu0 %v6466
    %v6557 = vpop.f32.mrf.mxu0
    %v6558 = vadd.f32 0.0, %v6557
    %6559 = vdwg.mxu0
    %v6560 = vmul.f32 %v5948, %v6486
    %v6561 = vmul.f32 %v6000, %v6509
    %v6562 = vmul.f32 %v6052, %v6532
    %v6563 = vmul.f32 %v6104, %v6555
    %v6564 = vadd.f32 %v6560, %v6489
    %v6565 = vadd.f32 %v6561, %v6512
    %v6566 = vadd.f32 %v6562, %v6535
    %v6567 = vadd.f32 %v6563, %v6558
    %vm6568 = vcmp.gt.f32.partialorder %v6564, 0.0
    %vm6569 = vcmp.gt.f32.partialorder %v6565, 0.0
    %vm6570 = vcmp.gt.f32.partialorder %v6566, 0.0
    %vm6571 = vcmp.gt.f32.partialorder %v6567, 0.0
    %v6572 = vmul.f32 %v6564, 0.2
    %v6573 = vmul.f32 %v6565, 0.2
    %v6574 = vmul.f32 %v6566, 0.2
    %v6575 = vmul.f32 %v6567, 0.2
    %v6576 = vsel %vm6568, %v6564, %v6572
    %v6577 = vsel %vm6569, %v6565, %v6573
    %v6578 = vsel %vm6570, %v6566, %v6574
    %v6579 = vsel %vm6571, %v6567, %v6575
    %6580 = vst [vmem:[%s13] sm:$0xff] %v6576
    %6581 = vst [vmem:[%s13 + $0x8] sm:$0xff] %v6577
    %6582 = vst [vmem:[%s13 + $0x10] sm:$0xff] %v6578
    %6583 = vst [vmem:[%s13 + $0x18] sm:$0xff] %v6579
    %s6584 = smul.u32 %s5123, 2
    %s6585 = sshll.u32 %s6584, 4
    %6586 = dma.done %s168, %s6585
    %v6587 = vld [vmem:[#allocation4] sm:$0xff]
    %v6588 = vld [vmem:[#allocation4 + $0x8] sm:$0xff]
    %v6589 = vld [vmem:[#allocation4 + $0x10] sm:$0xff]
    %v6590 = vld [vmem:[#allocation4 + $0x18] sm:$0xff]
    %v6591 = vld [vmem:[#allocation4 + $0x20] sm:$0xff]
    %v6592 = vld [vmem:[#allocation4 + $0x28] sm:$0xff]
    %v6593 = vld [vmem:[#allocation4 + $0x30] sm:$0xff]
    %v6594 = vld [vmem:[#allocation4 + $0x38] sm:$0xff]
    %v6595 = vld [vmem:[#allocation4 + $0x40] sm:$0xff]
    %v6596 = vld [vmem:[#allocation4 + $0x48] sm:$0xff]
    %v6597 = vld [vmem:[#allocation4 + $0x50] sm:$0xff]
    %v6598 = vld [vmem:[#allocation4 + $0x58] sm:$0xff]
    %v6599 = vld [vmem:[#allocation4 + $0x60] sm:$0xff]
    %v6600 = vld [vmem:[#allocation4 + $0x68] sm:$0xff]
    %v6601 = vld [vmem:[#allocation4 + $0x70] sm:$0xff]
    %v6602 = vld [vmem:[#allocation4 + $0x78] sm:$0xff]
    %v6603 = vld [vmem:[#allocation4 + $0x80] sm:$0xff]
    %v6604 = vld [vmem:[#allocation4 + $0x88] sm:$0xff]
    %v6605 = vld [vmem:[#allocation4 + $0x90] sm:$0xff]
    %v6606 = vld [vmem:[#allocation4 + $0x98] sm:$0xff]
    %v6607 = vld [vmem:[#allocation4 + $0xa0] sm:$0xff]
    %v6608 = vld [vmem:[#allocation4 + $0xa8] sm:$0xff]
    %v6609 = vld [vmem:[#allocation4 + $0xb0] sm:$0xff]
    %v6610 = vld [vmem:[#allocation4 + $0xb8] sm:$0xff]
    %v6611 = vld [vmem:[#allocation4 + $0xc0] sm:$0xff]
    %v6612 = vld [vmem:[#allocation4 + $0xc8] sm:$0xff]
    %v6613 = vld [vmem:[#allocation4 + $0xd0] sm:$0xff]
    %v6614 = vld [vmem:[#allocation4 + $0xd8] sm:$0xff]
    %v6615 = vld [vmem:[#allocation4 + $0xe0] sm:$0xff]
    %v6616 = vld [vmem:[#allocation4 + $0xe8] sm:$0xff]
    %v6617 = vld [vmem:[#allocation4 + $0xf0] sm:$0xff]
    %v6618 = vld [vmem:[#allocation4 + $0xf8] sm:$0xff]
    %v6619 = vld [vmem:[#allocation4 + $0x100] sm:$0xff]
    %v6620 = vld [vmem:[#allocation4 + $0x108] sm:$0xff]
    %v6621 = vld [vmem:[#allocation4 + $0x110] sm:$0xff]
    %v6622 = vld [vmem:[#allocation4 + $0x118] sm:$0xff]
    %v6623 = vld [vmem:[#allocation4 + $0x120] sm:$0xff]
    %v6624 = vld [vmem:[#allocation4 + $0x128] sm:$0xff]
    %v6625 = vld [vmem:[#allocation4 + $0x130] sm:$0xff]
    %v6626 = vld [vmem:[#allocation4 + $0x138] sm:$0xff]
    %v6627 = vld [vmem:[#allocation4 + $0x140] sm:$0xff]
    %v6628 = vld [vmem:[#allocation4 + $0x148] sm:$0xff]
    %v6629 = vld [vmem:[#allocation4 + $0x150] sm:$0xff]
    %v6630 = vld [vmem:[#allocation4 + $0x158] sm:$0xff]
    %v6631 = vld [vmem:[#allocation4 + $0x160] sm:$0xff]
    %v6632 = vld [vmem:[#allocation4 + $0x168] sm:$0xff]
    %v6633 = vld [vmem:[#allocation4 + $0x170] sm:$0xff]
    %v6634 = vld [vmem:[#allocation4 + $0x178] sm:$0xff]
    %v6635 = vld [vmem:[#allocation4 + $0x180] sm:$0xff]
    %v6636 = vld [vmem:[#allocation4 + $0x188] sm:$0xff]
    %v6637 = vld [vmem:[#allocation4 + $0x190] sm:$0xff]
    %v6638 = vld [vmem:[#allocation4 + $0x198] sm:$0xff]
    %v6639 = vld [vmem:[#allocation4 + $0x1a0] sm:$0xff]
    %v6640 = vld [vmem:[#allocation4 + $0x1a8] sm:$0xff]
    %v6641 = vld [vmem:[#allocation4 + $0x1b0] sm:$0xff]
    %v6642 = vld [vmem:[#allocation4 + $0x1b8] sm:$0xff]
    %v6643 = vld [vmem:[#allocation4 + $0x1c0] sm:$0xff]
    %v6644 = vld [vmem:[#allocation4 + $0x1c8] sm:$0xff]
    %v6645 = vld [vmem:[#allocation4 + $0x1d0] sm:$0xff]
    %v6646 = vld [vmem:[#allocation4 + $0x1d8] sm:$0xff]
    %v6647 = vld [vmem:[#allocation4 + $0x1e0] sm:$0xff]
    %v6648 = vld [vmem:[#allocation4 + $0x1e8] sm:$0xff]
    %v6649 = vld [vmem:[#allocation4 + $0x1f0] sm:$0xff]
    %v6650 = vld [vmem:[#allocation4 + $0x1f8] sm:$0xff]
    %v6651 = vpack.c.bf16 %v6576, %v6576
    %v6652 = vpack.c.bf16 %v6577, %v6577
    %v6653 = vpack.c.bf16 %v6578, %v6578
    %v6654 = vpack.c.bf16 %v6579, %v6579
    %v6655 = vld [vmem:[#allocation16] sm:$0x3]
    %v6657 = vperm.slane %v6655, 0
    %v6658 = vperm.slane %v6655, 1
    %v6725 = vunpack.c.l.b16 %v6587
    %v6726 = vunpack.c.h.b16 %v6587
    %v6727 = vunpack.c.l.b16 %v6588
    %v6728 = vunpack.c.h.b16 %v6588
    %v6729 = vunpack.c.l.b16 %v6589
    %v6730 = vunpack.c.h.b16 %v6589
    %v6731 = vunpack.c.l.b16 %v6590
    %v6732 = vunpack.c.h.b16 %v6590
    %v6733 = vunpack.c.l.b16 %v6591
    %v6734 = vunpack.c.h.b16 %v6591
    %v6735 = vunpack.c.l.b16 %v6592
    %v6736 = vunpack.c.h.b16 %v6592
    %v6737 = vunpack.c.l.b16 %v6593
    %v6738 = vunpack.c.h.b16 %v6593
    %v6739 = vunpack.c.l.b16 %v6594
    %v6740 = vunpack.c.h.b16 %v6594
    %v6741 = vunpack.c.l.b16 %v6595
    %v6742 = vunpack.c.h.b16 %v6595
    %v6743 = vunpack.c.l.b16 %v6596
    %v6744 = vunpack.c.h.b16 %v6596
    %v6745 = vunpack.c.l.b16 %v6597
    %v6746 = vunpack.c.h.b16 %v6597
    %v6747 = vunpack.c.l.b16 %v6598
    %v6748 = vunpack.c.h.b16 %v6598
    %v6749 = vunpack.c.l.b16 %v6599
    %v6750 = vunpack.c.h.b16 %v6599
    %v6751 = vunpack.c.l.b16 %v6600
    %v6752 = vunpack.c.h.b16 %v6600
    %v6753 = vunpack.c.l.b16 %v6601
    %v6754 = vunpack.c.h.b16 %v6601
    %v6755 = vunpack.c.l.b16 %v6602
    %v6756 = vunpack.c.h.b16 %v6602
    %v6757 = vunpack.c.l.b16 %v6603
    %v6758 = vunpack.c.h.b16 %v6603
    %v6759 = vunpack.c.l.b16 %v6604
    %v6760 = vunpack.c.h.b16 %v6604
    %v6761 = vunpack.c.l.b16 %v6605
    %v6762 = vunpack.c.h.b16 %v6605
    %v6763 = vunpack.c.l.b16 %v6606
    %v6764 = vunpack.c.h.b16 %v6606
    %v6765 = vunpack.c.l.b16 %v6607
    %v6766 = vunpack.c.h.b16 %v6607
    %v6767 = vunpack.c.l.b16 %v6608
    %v6768 = vunpack.c.h.b16 %v6608
    %v6769 = vunpack.c.l.b16 %v6609
    %v6770 = vunpack.c.h.b16 %v6609
    %v6771 = vunpack.c.l.b16 %v6610
    %v6772 = vunpack.c.h.b16 %v6610
    %v6773 = vunpack.c.l.b16 %v6611
    %v6774 = vunpack.c.h.b16 %v6611
    %v6775 = vunpack.c.l.b16 %v6612
    %v6776 = vunpack.c.h.b16 %v6612
    %v6777 = vunpack.c.l.b16 %v6613
    %v6778 = vunpack.c.h.b16 %v6613
    %v6779 = vunpack.c.l.b16 %v6614
    %v6780 = vunpack.c.h.b16 %v6614
    %v6781 = vunpack.c.l.b16 %v6615
    %v6782 = vunpack.c.h.b16 %v6615
    %v6783 = vunpack.c.l.b16 %v6616
    %v6784 = vunpack.c.h.b16 %v6616
    %v6785 = vunpack.c.l.b16 %v6617
    %v6786 = vunpack.c.h.b16 %v6617
    %v6787 = vunpack.c.l.b16 %v6618
    %v6788 = vunpack.c.h.b16 %v6618
    %v6789 = vunpack.c.l.b16 %v6619
    %v6790 = vunpack.c.h.b16 %v6619
    %v6791 = vunpack.c.l.b16 %v6620
    %v6792 = vunpack.c.h.b16 %v6620
    %v6793 = vunpack.c.l.b16 %v6621
    %v6794 = vunpack.c.h.b16 %v6621
    %v6795 = vunpack.c.l.b16 %v6622
    %v6796 = vunpack.c.h.b16 %v6622
    %v6797 = vunpack.c.l.b16 %v6623
    %v6798 = vunpack.c.h.b16 %v6623
    %v6799 = vunpack.c.l.b16 %v6624
    %v6800 = vunpack.c.h.b16 %v6624
    %v6801 = vunpack.c.l.b16 %v6625
    %v6802 = vunpack.c.h.b16 %v6625
    %v6803 = vunpack.c.l.b16 %v6626
    %v6804 = vunpack.c.h.b16 %v6626
    %v6805 = vunpack.c.l.b16 %v6627
    %v6806 = vunpack.c.h.b16 %v6627
    %v6807 = vunpack.c.l.b16 %v6628
    %v6808 = vunpack.c.h.b16 %v6628
    %v6809 = vunpack.c.l.b16 %v6629
    %v6810 = vunpack.c.h.b16 %v6629
    %v6811 = vunpack.c.l.b16 %v6630
    %v6812 = vunpack.c.h.b16 %v6630
    %v6813 = vunpack.c.l.b16 %v6631
    %v6814 = vunpack.c.h.b16 %v6631
    %v6815 = vunpack.c.l.b16 %v6632
    %v6816 = vunpack.c.h.b16 %v6632
    %v6817 = vunpack.c.l.b16 %v6633
    %v6818 = vunpack.c.h.b16 %v6633
    %v6819 = vunpack.c.l.b16 %v6634
    %v6820 = vunpack.c.h.b16 %v6634
    %v6821 = vunpack.c.l.b16 %v6635
    %v6822 = vunpack.c.h.b16 %v6635
    %v6823 = vunpack.c.l.b16 %v6636
    %v6824 = vunpack.c.h.b16 %v6636
    %v6825 = vunpack.c.l.b16 %v6637
    %v6826 = vunpack.c.h.b16 %v6637
    %v6827 = vunpack.c.l.b16 %v6638
    %v6828 = vunpack.c.h.b16 %v6638
    %v6829 = vunpack.c.l.b16 %v6639
    %v6830 = vunpack.c.h.b16 %v6639
    %v6831 = vunpack.c.l.b16 %v6640
    %v6832 = vunpack.c.h.b16 %v6640
    %v6833 = vunpack.c.l.b16 %v6641
    %v6834 = vunpack.c.h.b16 %v6641
    %v6835 = vunpack.c.l.b16 %v6642
    %v6836 = vunpack.c.h.b16 %v6642
    %v6837 = vunpack.c.l.b16 %v6643
    %v6838 = vunpack.c.h.b16 %v6643
    %v6839 = vunpack.c.l.b16 %v6644
    %v6840 = vunpack.c.h.b16 %v6644
    %v6841 = vunpack.c.l.b16 %v6645
    %v6842 = vunpack.c.h.b16 %v6645
    %v6843 = vunpack.c.l.b16 %v6646
    %v6844 = vunpack.c.h.b16 %v6646
    %v6845 = vunpack.c.l.b16 %v6647
    %v6846 = vunpack.c.h.b16 %v6647
    %v6847 = vunpack.c.l.b16 %v6648
    %v6848 = vunpack.c.h.b16 %v6648
    %v6849 = vunpack.c.l.b16 %v6649
    %v6850 = vunpack.c.h.b16 %v6649
    %v6851 = vunpack.c.l.b16 %v6650
    %v6852 = vunpack.c.h.b16 %v6650
    %v6853 = vpack.c.b16 %v6727, %v6725
    %v6854 = vpack.c.b16 %v6728, %v6726
    %v6855 = vpack.c.b16 %v6731, %v6729
    %v6856 = vpack.c.b16 %v6732, %v6730
    %v6857 = vpack.c.b16 %v6735, %v6733
    %v6858 = vpack.c.b16 %v6736, %v6734
    %v6859 = vpack.c.b16 %v6739, %v6737
    %v6860 = vpack.c.b16 %v6740, %v6738
    %v6861 = vpack.c.b16 %v6743, %v6741
    %v6862 = vpack.c.b16 %v6744, %v6742
    %v6863 = vpack.c.b16 %v6747, %v6745
    %v6864 = vpack.c.b16 %v6748, %v6746
    %v6865 = vpack.c.b16 %v6751, %v6749
    %v6866 = vpack.c.b16 %v6752, %v6750
    %v6867 = vpack.c.b16 %v6755, %v6753
    %v6868 = vpack.c.b16 %v6756, %v6754
    %v6869 = vpack.c.b16 %v6759, %v6757
    %v6870 = vpack.c.b16 %v6760, %v6758
    %v6871 = vpack.c.b16 %v6763, %v6761
    %v6872 = vpack.c.b16 %v6764, %v6762
    %v6873 = vpack.c.b16 %v6767, %v6765
    %v6874 = vpack.c.b16 %v6768, %v6766
    %v6875 = vpack.c.b16 %v6771, %v6769
    %v6876 = vpack.c.b16 %v6772, %v6770
    %v6877 = vpack.c.b16 %v6775, %v6773
    %v6878 = vpack.c.b16 %v6776, %v6774
    %v6879 = vpack.c.b16 %v6779, %v6777
    %v6880 = vpack.c.b16 %v6780, %v6778
    %v6881 = vpack.c.b16 %v6783, %v6781
    %v6882 = vpack.c.b16 %v6784, %v6782
    %v6883 = vpack.c.b16 %v6787, %v6785
    %v6884 = vpack.c.b16 %v6788, %v6786
    %v6885 = vpack.c.b16 %v6791, %v6789
    %v6886 = vpack.c.b16 %v6792, %v6790
    %v6887 = vpack.c.b16 %v6795, %v6793
    %v6888 = vpack.c.b16 %v6796, %v6794
    %v6889 = vpack.c.b16 %v6799, %v6797
    %v6890 = vpack.c.b16 %v6800, %v6798
    %v6891 = vpack.c.b16 %v6803, %v6801
    %v6892 = vpack.c.b16 %v6804, %v6802
    %v6893 = vpack.c.b16 %v6807, %v6805
    %v6894 = vpack.c.b16 %v6808, %v6806
    %v6895 = vpack.c.b16 %v6811, %v6809
    %v6896 = vpack.c.b16 %v6812, %v6810
    %v6897 = vpack.c.b16 %v6815, %v6813
    %v6898 = vpack.c.b16 %v6816, %v6814
    %v6899 = vpack.c.b16 %v6819, %v6817
    %v6900 = vpack.c.b16 %v6820, %v6818
    %v6901 = vpack.c.b16 %v6823, %v6821
    %v6902 = vpack.c.b16 %v6824, %v6822
    %v6903 = vpack.c.b16 %v6827, %v6825
    %v6904 = vpack.c.b16 %v6828, %v6826
    %v6905 = vpack.c.b16 %v6831, %v6829
    %v6906 = vpack.c.b16 %v6832, %v6830
    %v6907 = vpack.c.b16 %v6835, %v6833
    %v6908 = vpack.c.b16 %v6836, %v6834
    %v6909 = vpack.c.b16 %v6839, %v6837
    %v6910 = vpack.c.b16 %v6840, %v6838
    %v6911 = vpack.c.b16 %v6843, %v6841
    %v6912 = vpack.c.b16 %v6844, %v6842
    %v6913 = vpack.c.b16 %v6847, %v6845
    %v6914 = vpack.c.b16 %v6848, %v6846
    %v6915 = vpack.c.b16 %v6851, %v6849
    %v6916 = vpack.c.b16 %v6852, %v6850
    %6981 = vmatpush.bf16.msra.mxu0 %v6867
    %6982 = vmatpush.bf16.msra.mxu0 %v6865
    %6983 = vmatpush.bf16.msra.mxu0 %v6863
    %6984 = vmatpush.bf16.msra.mxu0 %v6861
    %6985 = vmatpush.bf16.msra.mxu0 %v6859
    %6986 = vmatpush.bf16.msra.mxu0 %v6857
    %6987 = vmatpush.bf16.msra.mxu0 %v6855
    %6988 = vmatpush.bf16.msra.mxu0 %v6853
    %6989 = vmatmul.bf16.gmra.mxu0 %v6651
    %v6990 = vpop.f32.mrf.mxu0
    %v6991 = vadd.f32 %v6657, %v6990
    %v6992 = vpop.f32.mrf.mxu0
    %6993 = vdwg.mxu0
    %6994 = vmatpush.bf16.msra.mxu0 %v6883
    %6995 = vmatpush.bf16.msra.mxu0 %v6881
    %6996 = vmatpush.bf16.msra.mxu0 %v6879
    %6997 = vmatpush.bf16.msra.mxu0 %v6877
    %6998 = vmatpush.bf16.msra.mxu0 %v6875
    %6999 = vmatpush.bf16.msra.mxu0 %v6873
    %7000 = vmatpush.bf16.msra.mxu0 %v6871
    %7001 = vmatpush.bf16.msra.mxu0 %v6869
    %7002 = vmatmul.bf16.gmra.mxu0 %v6652
    %v7003 = vpop.f32.mrf.mxu0
    %v7004 = vadd.f32 %v6991, %v7003
    %v7005 = vpop.f32.mrf.mxu0
    %7006 = vdwg.mxu0
    %7007 = vmatpush.bf16.msra.mxu0 %v6899
    %7008 = vmatpush.bf16.msra.mxu0 %v6897
    %7009 = vmatpush.bf16.msra.mxu0 %v6895
    %7010 = vmatpush.bf16.msra.mxu0 %v6893
    %7011 = vmatpush.bf16.msra.mxu0 %v6891
    %7012 = vmatpush.bf16.msra.mxu0 %v6889
    %7013 = vmatpush.bf16.msra.mxu0 %v6887
    %7014 = vmatpush.bf16.msra.mxu0 %v6885
    %7015 = vmatmul.bf16.gmra.mxu0 %v6653
    %v7016 = vpop.f32.mrf.mxu0
    %v7017 = vadd.f32 %v7004, %v7016
    %v7018 = vpop.f32.mrf.mxu0
    %7019 = vdwg.mxu0
    %7020 = vmatpush.bf16.msra.mxu0 %v6915
    %7021 = vmatpush.bf16.msra.mxu0 %v6913
    %7022 = vmatpush.bf16.msra.mxu0 %v6911
    %7023 = vmatpush.bf16.msra.mxu0 %v6909
    %7024 = vmatpush.bf16.msra.mxu0 %v6907
    %7025 = vmatpush.bf16.msra.mxu0 %v6905
    %7026 = vmatpush.bf16.msra.mxu0 %v6903
    %7027 = vmatpush.bf16.msra.mxu0 %v6901
    %7028 = vmatmul.bf16.gmra.mxu0 %v6654
    %v7029 = vpop.f32.mrf.mxu0
    %v7030 = vadd.f32 %v7017, %v7029
    %v7031 = vpop.f32.mrf.mxu0
    %7032 = vdwg.mxu0
    %7033 = vmatpush.bf16.msra.mxu0 %v6868
    %7034 = vmatpush.bf16.msra.mxu0 %v6866
    %7035 = vmatpush.bf16.msra.mxu0 %v6864
    %7036 = vmatpush.bf16.msra.mxu0 %v6862
    %7037 = vmatpush.bf16.msra.mxu0 %v6860
    %7038 = vmatpush.bf16.msra.mxu0 %v6858
    %7039 = vmatpush.bf16.msra.mxu0 %v6856
    %7040 = vmatpush.bf16.msra.mxu0 %v6854
    %7041 = vmatmul.bf16.gmra.mxu0 %v6651
    %v7042 = vpop.f32.mrf.mxu0
    %v7043 = vadd.f32 %v6658, %v7042
    %v7044 = vpop.f32.mrf.mxu0
    %7045 = vdwg.mxu0
    %7046 = vmatpush.bf16.msra.mxu0 %v6884
    %7047 = vmatpush.bf16.msra.mxu0 %v6882
    %7048 = vmatpush.bf16.msra.mxu0 %v6880
    %7049 = vmatpush.bf16.msra.mxu0 %v6878
    %7050 = vmatpush.bf16.msra.mxu0 %v6876
    %7051 = vmatpush.bf16.msra.mxu0 %v6874
    %7052 = vmatpush.bf16.msra.mxu0 %v6872
    %7053 = vmatpush.bf16.msra.mxu0 %v6870
    %7054 = vmatmul.bf16.gmra.mxu0 %v6652
    %v7055 = vpop.f32.mrf.mxu0
    %v7056 = vadd.f32 %v7043, %v7055
    %v7057 = vpop.f32.mrf.mxu0
    %7058 = vdwg.mxu0
    %7059 = vmatpush.bf16.msra.mxu0 %v6900
    %7060 = vmatpush.bf16.msra.mxu0 %v6898
    %7061 = vmatpush.bf16.msra.mxu0 %v6896
    %7062 = vmatpush.bf16.msra.mxu0 %v6894
    %7063 = vmatpush.bf16.msra.mxu0 %v6892
    %7064 = vmatpush.bf16.msra.mxu0 %v6890
    %7065 = vmatpush.bf16.msra.mxu0 %v6888
    %7066 = vmatpush.bf16.msra.mxu0 %v6886
    %7067 = vmatmul.bf16.gmra.mxu0 %v6653
    %v7068 = vpop.f32.mrf.mxu0
    %v7069 = vadd.f32 %v7056, %v7068
    %v7070 = vpop.f32.mrf.mxu0
    %7071 = vdwg.mxu0
    %7072 = vmatpush.bf16.msra.mxu0 %v6916
    %7073 = vmatpush.bf16.msra.mxu0 %v6914
    %7074 = vmatpush.bf16.msra.mxu0 %v6912
    %7075 = vmatpush.bf16.msra.mxu0 %v6910
    %7076 = vmatpush.bf16.msra.mxu0 %v6908
    %7077 = vmatpush.bf16.msra.mxu0 %v6906
    %7078 = vmatpush.bf16.msra.mxu0 %v6904
    %7079 = vmatpush.bf16.msra.mxu0 %v6902
    %7080 = vmatmul.bf16.gmra.mxu0 %v6654
    %v7081 = vpop.f32.mrf.mxu0
    %v7082 = vadd.f32 %v7069, %v7081
    %v7083 = vpop.f32.mrf.mxu0
    %7084 = vdwg.mxu0
    %7085 = vst [vmem:[%s14] sm:$0xff] %v7030
    %7086 = vst [vmem:[%s14 + $0x8] sm:$0xff] %v7082
    // Predicated region
    $region74: #{forward.1} parent=1 // pred_check
      _
    $region75: #{forward.1} parent=1 // pred_check_branch
      %7088 = sbr.rel (0) target = $region77
    $region76: #{forward.1} parent=1 // pred_region
      _
    $region77: #{forward.1} parent=1 // pred_fallthru
      _
    // Predicated region
    $region78: #{forward.1} parent=1 // pred_check
      _
    $region79: #{forward.1} parent=1 // pred_check_branch
      %7090 = sbr.rel (0) target = $region81
    $region80: #{forward.1} parent=1 // pred_region
      _
    $region81: #{forward.1} parent=1 // pred_fallthru
      _
    // Predicated region
    $region82: #{forward.1} parent=1 // pred_check
      _
    $region83: #{forward.1} parent=1 // pred_check_branch
      %7092 = sbr.rel (0) target = $region85
    $region84: #{forward.1} parent=1 // pred_region
      _
    $region85: #{forward.1} parent=1 // pred_fallthru
      _
    // Predicated region
    $region86: #{forward.1} parent=1 // pred_check
      _
    $region87: #{forward.1} parent=1 // pred_check_branch
      %7094 = sbr.rel (0) target = $region89
    $region88: #{forward.1} parent=1 // pred_region
      _
    $region89: #{forward.1} parent=1 // pred_fallthru
      _
    // Predicated region
    $region90: #{forward.1} parent=1 // pred_check
      _
    $region91: #{forward.1} parent=1 // pred_check_branch
      %7096 = sbr.rel (0) target = $region93
    $region92: #{forward.1} parent=1 // pred_region
      _
    $region93: #{forward.1} parent=1 // pred_fallthru
      _
    // Predicated region
    $region94: #{forward.1} parent=1 // pred_check
      _
    $region95: #{forward.1} parent=1 // pred_check_branch
      %7098 = sbr.rel (0) target = $region97
    $region96: #{forward.1} parent=1 // pred_region
      _
    $region97: #{forward.1} parent=1 // pred_fallthru
      _
    // Predicated region
    $region98: #{forward.1} parent=1 // pred_check
      _
    $region99: #{forward.1} parent=1 // pred_check_branch
      %7100 = sbr.rel (0) target = $region101
    $region100: #{forward.1} parent=1 // pred_region
      _
    $region101: #{forward.1} parent=1 // pred_fallthru
      _
    // Predicated region
    $region102: #{forward.1} parent=1 // pred_check
      _
    $region103: #{forward.1} parent=1 // pred_check_branch
      %7102 = sbr.rel (0) target = $region105
    $region104: #{forward.1} parent=1 // pred_region
      _
    $region105: #{forward.1} parent=1 // pred_fallthru
      _
    %7103 = vsyncpa [#allocation7], 1
    %7104 = vsyncpa [#allocation9], 1
    %7105 = vsyncpa [#allocation12], 1
    %7106 = vsyncpa [#allocation15], 1
  %7107 = vsyncmov [#allocation5]
  %s7108 = vpop.sfrf %7107
  %p7109 = scmp.eq.s32.totalorder %s7108, 0
  %p7110 = pneg %p7109
  %7112 = shalt.err (%p7110)
  %s7113 = scalar_lea.sflag [#allocation5], 1
  %7114 = vsyncmov %s7113
  %s7115 = vpop.sfrf %7114
  %p7116 = scmp.eq.s32.totalorder %s7115, 0
  %p7117 = pneg %p7116
  %7119 = shalt.err (%p7117)
  %s7120 = scalar_lea.sflag [#allocation5], 2
  %7121 = vsyncmov %s7120
  %s7122 = vpop.sfrf %7121
  %p7123 = scmp.eq.s32.totalorder %s7122, 0
  %p7124 = pneg %p7123
  %7126 = shalt.err (%p7124)

</llo_original>
